<compile_context>
chip_gen: v7x
topology: tpu7x:2x2x1
jax: 0.10.0
libtpu: 0.0.40
codegen_flags: <defaults>
</compile_context>

<pallas_src>
import jax
import jax.numpy as jnp
from jax import lax
from jax.experimental import pallas as pl
from jax.experimental.pallas import tpu as pltpu

EPS = 1e-5  # BatchNorm2d default eps

# Row/col tap order used by the fused weight: 0:(odd,-1) 1:(even,0) 2:(odd,0)
# 3:(even,+1); per output phase ph (pw), conv tap dh (dw) -> tap index.
_PHASE_TAPS = ((0, 1, 2), (1, 2, 3))


def _vmem_budget_bytes():
    """Per-generation Pallas VMEM budget: ~0.8x physical, capped, w/ fallback."""
    try:
        cap = int(pltpu.get_tpu_info().vmem_capacity_bytes)
        return max(32 << 20, min(int(cap * 0.8), 112 << 20))
    except Exception:
        return 48 << 20


def _pick_row_tile(h, w, cin, cout, budget):
    """Largest divisor of H whose per-step VMEM estimate fits the budget,
    preferring >= 2 row tiles (pipeline depth / megacore balance)."""
    c4 = 4 * cout

    def est(th):
        x_blk = (th + 2) * (w + 2) * cin * 4            # f32 input tile
        rowpl = 2 * (th + 1) * (w + 2) * cin * 4        # f32 row planes
        colpl = 4 * (th + 1) * (w + 1) * cin * 2        # bf16 col planes
        slab = th * w * 4 * cin * 2                     # bf16 per-row-tap slab
        acc = th * w * c4 * 4                           # f32 accumulator
        y_blk = th * w * c4 * 2                         # bf16 output tile
        stat = 2 * c4 * 4
        wgt = 16 * cin * c4 * 2 + c4 * 4
        return 2 * (x_blk + y_blk + stat) + wgt + rowpl + colpl + slab + acc

    divisors = [d for d in range(1, h + 1) if h % d == 0]
    cands = [d for d in divisors if d <= max(h // 2, 1)] or [1]
    best = 1
    for d in cands:
        if est(d) <= budget:
            best = max(best, d)
    return best


def _fused_conv_kernel(xt_ref, w_ref, b_ref, y_ref, stat_ref):
    """One (image, row-tile): fused 2x bilinear upsample + 3x3 conv + bias,
    plus per-tile BatchNorm partial sums.  Output stays phase-packed
    (th, W, 4*Cout) in bf16; stats are f32."""
    th = y_ref.shape[1]
    wd = y_ref.shape[2]
    cin = xt_ref.shape[-1]
    c4 = y_ref.shape[-1]

    x = xt_ref[0, 0]                                     # (th+2, W+2, Cin) f32

    # Row-direction bilinear planes (f32):
    #   o_row[r] = O[t0-1+r] = 0.75*x[t0-1+r] + 0.25*x[t0+r]
    #   e_row[r] = E[t0+r]   = 0.25*x[t0-1+r] + 0.75*x[t0+r]
    x_lo = x[:-1]
    x_hi = x[1:]
    o_row = 0.75 * x_lo + 0.25 * x_hi                    # (th+1, W+2, Cin)
    e_row = 0.25 * x_lo + 0.75 * x_hi                    # (th+1, W+2, Cin)

    # Conv zero padding of the virtual upsampled image, row direction: only at
    # the global image top (O[-1], first tile) / bottom (E[H], last tile).
    t = pl.program_id(1)
    last = pl.num_programs(1) - 1
    ridx = lax.broadcasted_iota(jnp.int32, (th + 1, 1, 1), 0)
    o_row = jnp.where(jnp.logical_and(t == 0, ridx == 0), 0.0, o_row)
    e_row = jnp.where(jnp.logical_and(t == last, ridx == th), 0.0, e_row)

    # Column-direction bilinear planes; bilinear FMA in f32, one bf16 cast per
    # plane.  Conv zero padding in the column direction: odd-plane col 0
    # (Ocol[-1]) and even-plane col W (Ecol[W]).
    cidx = lax.broadcasted_iota(jnp.int32, (1, wd + 1, 1), 1)

    def col_planes(v):
        oc = 0.75 * v[:, :-1] + 0.25 * v[:, 1:]          # index j <-> Ocol[j-1]
        ec = 0.25 * v[:, :-1] + 0.75 * v[:, 1:]          # index j <-> Ecol[j]
        oc = jnp.where(cidx == 0, 0.0, oc)
        ec = jnp.where(cidx == wd, 0.0, ec)
        return oc.astype(jnp.bfloat16), ec.astype(jnp.bfloat16)

    o_oc, o_ec = col_planes(o_row)                       # row-odd planes
    e_oc, e_ec = col_planes(e_row)                       # row-even planes

    # Four accumulating MXU matmuls (one per row tap), K = 4*Cin each; the
    # small bf16 slab replaces the old 16-way f32 concat.
    row_taps = ((o_oc, o_ec, 0), (e_oc, e_ec, 0),
                (o_oc, o_ec, 1), (e_oc, e_ec, 1))
    acc = jnp.zeros((th * wd, c4), jnp.float32)
    for rt, (oc, ec, r0) in enumerate(row_taps):
        slab = jnp.concatenate(
            [oc[r0:r0 + th, 0:wd], ec[r0:r0 + th, 0:wd],
             oc[r0:r0 + th, 1:wd + 1], ec[r0:r0 + th, 1:wd + 1]],
            axis=-1).reshape(th * wd, 4 * cin)           # bf16 (th*W, 4*Cin)
        acc = acc + jnp.dot(slab, w_ref[rt * 4 * cin:(rt + 1) * 4 * cin, :],
                            preferred_element_type=jnp.float32)
    acc = acc + b_ref[...]                               # conv bias

    y_ref[0] = acc.reshape(th, wd, c4).astype(y_ref.dtype)

    # Per-(image, row-tile) partial BatchNorm statistics in f32.
    stat_ref[0, 0, 0:1, :] = jnp.sum(acc, axis=0, keepdims=True)
    stat_ref[0, 0, 1:2, :] = jnp.sum(acc * acc, axis=0, keepdims=True)


def _bn_prelu_kernel(y_ref, scale_ref, shift_ref, alpha_ref, o_ref):
    """Elementwise BatchNorm affine (precomputed scale/shift) + PReLU."""
    z = y_ref[0].astype(jnp.float32) * scale_ref[0] + shift_ref[0]
    a = alpha_ref[0, 0]
    o_ref[0] = jnp.where(z >= 0.0, z, a * z).astype(o_ref.dtype)


def _build_phase_weight(w_hwio):
    """Scatter the (3,3,Cin,Cout) conv weight into the fused matmul weight of
    shape (16*Cin, 4*Cout): row block (row_tap*4 + col_tap)*Cin, column block
    (ph*2 + pw)*Cout.  Bilinear tap coefficients are applied to the phase
    planes inside the kernel."""
    cin, cout = w_hwio.shape[2], w_hwio.shape[3]
    wf = jnp.zeros((4, 4, cin, 2, 2, cout), jnp.float32)
    for ph in range(2):
        for pw in range(2):
            for dh in range(3):
                for dw in range(3):
                    r = _PHASE_TAPS[ph][dh]
                    c = _PHASE_TAPS[pw][dw]
                    wf = wf.at[r, c, :, ph, pw, :].add(
                        w_hwio[dh, dw].astype(jnp.float32))
    return wf.reshape(16 * cin, 4 * cout)


@jax.jit
def psp_upsample(x_nchw, w_hwio, bias, gamma, beta, alpha):
    """PSPUpsample forward.  NCHW in / NCHW out; kernels run NHWC phase-packed."""
    n, cin, h, w = x_nchw.shape
    cout = w_hwio.shape[-1]
    c4 = 4 * cout

    budget = _vmem_budget_bytes()
    th = _pick_row_tile(h, w, cin, cout, budget)
    nt = h // th

    x_nhwc = jnp.transpose(x_nchw, (0, 2, 3, 1)).astype(jnp.float32)
    # Bilinear edge clamp done once on the small low-res input; each row tile
    # carries a 1-row halo on each side (overlap = 2 duplicated rows per tile).
    xpad = jnp.pad(x_nhwc, ((0, 0), (1, 1), (1, 1), (0, 0)), mode="edge")
    x_tiles = jnp.stack(
        [xpad[:, t * th:t * th + th + 2] for t in range(nt)], axis=1)
    # (N, nt, th+2, W+2, Cin)

    w_fused = _build_phase_weight(w_hwio).astype(jnp.bfloat16)
    bias4 = jnp.tile(bias.astype(jnp.float32), 4).reshape(1, c4)

    # ---- pass 1: fused upsample + conv (+ per-tile BN partial sums) --------
    y_conv, stats = pl.pallas_call(
        _fused_conv_kernel,
        out_shape=(jax.ShapeDtypeStruct((n, h, w, c4), jnp.bfloat16),
                   jax.ShapeDtypeStruct((n, nt, 2, c4), jnp.float32)),
        grid=(n, nt),
        in_specs=[
            pl.BlockSpec((1, 1, th + 2, w + 2, cin),
                         lambda i, t: (i, t, 0, 0, 0)),
            pl.BlockSpec((16 * cin, c4), lambda i, t: (0, 0)),
            pl.BlockSpec((1, c4), lambda i, t: (0, 0)),
        ],
        out_specs=(
            pl.BlockSpec((1, th, w, c4), lambda i, t: (i, t, 0, 0)),
            pl.BlockSpec((1, 1, 2, c4), lambda i, t: (i, t, 0, 0)),
        ),
        compiler_params=pltpu.CompilerParams(
            dimension_semantics=("parallel", "parallel"),
            vmem_limit_bytes=budget),
    )(x_tiles, w_fused, bias4)

    # ---- tiny cross-tile BN reduction (training-mode batch stats) ----------
    # Per-tile two-pass combine reduces E[x^2] - mean^2 cancellation.
    cnt_t = jnp.float32(4 * th * w)                      # elems per (img,tile,ch)
    s_t = jnp.sum(stats[:, :, 0, :].reshape(n, nt, 4, cout), axis=2)
    q_t = jnp.sum(stats[:, :, 1, :].reshape(n, nt, 4, cout), axis=2)
    mean_t = s_t / cnt_t
    m2_t = jnp.maximum(q_t - s_t * mean_t, 0.0)
    total = jnp.float32(n * 4 * h * w)                   # N * 2H * 2W
    mean = jnp.sum(s_t, axis=(0, 1)) / total
    var = (jnp.sum(m2_t, axis=(0, 1))
           + jnp.sum(cnt_t * (mean_t - mean) ** 2, axis=(0, 1))) / total
    inv_std = lax.rsqrt(var + EPS)
    scale_c = gamma.astype(jnp.float32) * inv_std
    shift_c = beta.astype(jnp.float32) - mean * scale_c
    scale4 = jnp.tile(scale_c, 4).reshape(1, c4)
    shift4 = jnp.tile(shift_c, 4).reshape(1, c4)
    alpha2 = jnp.reshape(alpha, (1, 1)).astype(jnp.float32)

    # ---- pass 2: elementwise BatchNorm + PReLU ------------------------------
    out_packed = pl.pallas_call(
        _bn_prelu_kernel,
        out_shape=jax.ShapeDtypeStruct((n, h, w, c4), jnp.float32),
        grid=(n, nt),
        in_specs=[
            pl.BlockSpec((1, th, w, c4), lambda i, t: (i, t, 0, 0)),
            pl.BlockSpec((1, c4), lambda i, t: (0, 0)),
            pl.BlockSpec((1, c4), lambda i, t: (0, 0)),
            pl.BlockSpec((1, 1), lambda i, t: (0, 0)),
        ],
        out_specs=pl.BlockSpec((1, th, w, c4), lambda i, t: (i, t, 0, 0)),
        compiler_params=pltpu.CompilerParams(
            dimension_semantics=("parallel", "parallel"),
            vmem_limit_bytes=budget),
    )(y_conv, scale4, shift4, alpha2)

    # ---- single layout pass: phase de-interleave fused with NHWC -> NCHW ----
    out = out_packed.reshape(n, h, w, 2, 2, cout)        # (N, H, W, ph, pw, C)
    out = jnp.transpose(out, (0, 5, 1, 3, 2, 4))         # (N, C, H, ph, W, pw)
    return out.reshape(n, cout, 2 * h, 2 * w)


def psp_upsample_ref(x_nchw, w_hwio, bias, gamma, beta, alpha):
    """Pure-JAX/XLA reference (independent bilinear implementation)."""
    x = jnp.transpose(x_nchw, (0, 2, 3, 1)).astype(jnp.float32)
    n, h, w, _ = x.shape
    u = jax.image.resize(x, (n, 2 * h, 2 * w, x.shape[-1]), method="bilinear")
    y = lax.conv_general_dilated(
        u, w_hwio.astype(jnp.float32), window_strides=(1, 1), padding="SAME",
        dimension_numbers=("NHWC", "HWIO", "NHWC")) + bias
    mean = jnp.mean(y, axis=(0, 1, 2))
    var = jnp.mean((y - mean) ** 2, axis=(0, 1, 2))
    yn = (y - mean) * lax.rsqrt(var + EPS) * gamma + beta
    out = jnp.where(yn >= 0.0, yn, alpha * yn)
    return jnp.transpose(out, (0, 3, 1, 2))


if __name__ == "__main__":
    key = jax.random.PRNGKey(0)
    kx, kw, kb, kg, kbe = jax.random.split(key, 5)

    N, Cin, H, W = 2, 4, 16, 16     # NCHW, as in PyTorch
    Cout = 8

    x = jax.random.normal(kx, (N, Cin, H, W), jnp.float32)
    w = 0.1 * jax.random.normal(kw, (3, 3, Cin, Cout), jnp.float32)   # HWIO
    b = 0.1 * jax.random.normal(kb, (Cout,), jnp.float32)
    gamma = 1.0 + 0.1 * jax.random.normal(kg, (Cout,), jnp.float32)   # BN weight
    beta = 0.1 * jax.random.normal(kbe, (Cout,), jnp.float32)         # BN bias
    alpha = jnp.float32(0.25)                                         # PReLU default

    out = psp_upsample(x, w, b, gamma, beta, alpha)
    out = jax.block_until_ready(out)
    assert out.shape == (N, Cout, 2 * H, 2 * W), out.shape

    ref = psp_upsample_ref(x, w, b, gamma, beta, alpha)
    max_err = float(jnp.max(jnp.abs(out - ref)))
    # bf16 MXU inputs / bf16 intermediate vs f32 reference -> bf16-level tol.
    assert jnp.allclose(out, ref, atol=3e-2, rtol=3e-2), max_err

    print("KERNEL_OK")
</pallas_src>

<mosaic_0001>
module attributes {stable_mosaic.version = 11 : i64} {
  func.func @_fused_conv_kernel(%arg0: i32, %arg1: i32, %arg2: memref<1x1x10x18x4xf32, #tpu.memory_space<vmem>>, %arg3: memref<64x32xbf16, #tpu.memory_space<vmem>>, %arg4: memref<1x32xf32, #tpu.memory_space<vmem>>, %arg5: memref<1x8x16x32xbf16, #tpu.memory_space<vmem>>, %arg6: memref<1x1x2x32xf32, #tpu.memory_space<vmem>>) attributes {dimension_semantics = [#tpu.dimension_semantics<parallel>, #tpu.dimension_semantics<parallel>], iteration_bounds = array<i64: 2, 2>, scalar_prefetch = 0 : i64, scratch_operands = 0 : i64, tpu.core_type = #tpu.core_type<tc>, window_params = [{transform_indices = @transform_0, window_bounds = array<i64: 1, 1, 10, 18, 4>}, {pipeline_mode = #tpu.pipeline_mode<synchronous>, transform_indices = @transform_1, window_bounds = array<i64: 64, 32>}, {pipeline_mode = #tpu.pipeline_mode<synchronous>, transform_indices = @transform_2, window_bounds = array<i64: 1, 32>}, {transform_indices = @transform_3, window_bounds = array<i64: 1, 8, 16, 32>}, {transform_indices = @transform_4, window_bounds = array<i64: 1, 1, 2, 32>}]} {
    %c0 = arith.constant 0 : index
    %c0_0 = arith.constant 0 : index
    %c0_1 = arith.constant 0 : index
    %c0_2 = arith.constant 0 : index
    %c0_3 = arith.constant 0 : index
    %0 = vector.load %arg2[%c0, %c0_0, %c0_1, %c0_2, %c0_3] : memref<1x1x10x18x4xf32, #tpu.memory_space<vmem>>, vector<1x1x10x18x4xf32>
    %1 = vector.shape_cast %0 : vector<1x1x10x18x4xf32> to vector<10x18x4xf32>
    %2 = vector.extract_strided_slice %1 {offsets = [0, 0, 0], sizes = [9, 18, 4], strides = [1, 1, 1]} : vector<10x18x4xf32> to vector<9x18x4xf32>
    %3 = vector.extract_strided_slice %1 {offsets = [1, 0, 0], sizes = [9, 18, 4], strides = [1, 1, 1]} : vector<10x18x4xf32> to vector<9x18x4xf32>
    %cst = arith.constant 7.500000e-01 : f32
    %4 = vector.broadcast %cst : f32 to vector<9x18x4xf32>
    %5 = arith.mulf %4, %2 : vector<9x18x4xf32>
    %cst_4 = arith.constant 2.500000e-01 : f32
    %6 = vector.broadcast %cst_4 : f32 to vector<9x18x4xf32>
    %7 = arith.mulf %6, %3 : vector<9x18x4xf32>
    %8 = arith.addf %5, %7 : vector<9x18x4xf32>
    %cst_5 = arith.constant 2.500000e-01 : f32
    %9 = vector.broadcast %cst_5 : f32 to vector<9x18x4xf32>
    %10 = arith.mulf %9, %2 : vector<9x18x4xf32>
    %cst_6 = arith.constant 7.500000e-01 : f32
    %11 = vector.broadcast %cst_6 : f32 to vector<9x18x4xf32>
    %12 = arith.mulf %11, %3 : vector<9x18x4xf32>
    %13 = arith.addf %10, %12 : vector<9x18x4xf32>
    %14 = tpu.iota {dimensions = array<i32: 0>} : vector<9x1x1xi32>
    %c0_i32 = arith.constant 0 : i32
    %15 = arith.cmpi eq, %arg1, %c0_i32 : i32
    %c0_i32_7 = arith.constant 0 : i32
    %16 = vector.broadcast %c0_i32_7 : i32 to vector<9x1x1xi32>
    %17 = arith.cmpi eq, %14, %16 : vector<9x1x1xi32>
    %18 = vector.broadcast %15 : i1 to vector<9x1x1xi1>
    %19 = arith.andi %18, %17 : vector<9x1x1xi1>
    %cst_8 = arith.constant 0.000000e+00 : f32
    %20 = vector.shape_cast %19 : vector<9x1x1xi1> to vector<9x1x1xi1>
    %21 = vector.broadcast %20 : vector<9x1x1xi1> to vector<9x18x4xi1>
    %22 = vector.broadcast %cst_8 : f32 to vector<9x18x4xf32>
    %23 = arith.select %21, %22, %8 : vector<9x18x4xi1>, vector<9x18x4xf32>
    %c1_i32 = arith.constant 1 : i32
    %24 = arith.cmpi eq, %arg1, %c1_i32 : i32
    %c8_i32 = arith.constant 8 : i32
    %25 = vector.broadcast %c8_i32 : i32 to vector<9x1x1xi32>
    %26 = arith.cmpi eq, %14, %25 : vector<9x1x1xi32>
    %27 = vector.broadcast %24 : i1 to vector<9x1x1xi1>
    %28 = arith.andi %27, %26 : vector<9x1x1xi1>
    %cst_9 = arith.constant 0.000000e+00 : f32
    %29 = vector.shape_cast %28 : vector<9x1x1xi1> to vector<9x1x1xi1>
    %30 = vector.broadcast %29 : vector<9x1x1xi1> to vector<9x18x4xi1>
    %31 = vector.broadcast %cst_9 : f32 to vector<9x18x4xf32>
    %32 = arith.select %30, %31, %13 : vector<9x18x4xi1>, vector<9x18x4xf32>
    %33 = tpu.iota {dimensions = array<i32: 1>} : vector<1x17x1xi32>
    %34 = vector.extract_strided_slice %23 {offsets = [0, 0, 0], sizes = [9, 17, 4], strides = [1, 1, 1]} : vector<9x18x4xf32> to vector<9x17x4xf32>
    %cst_10 = arith.constant 7.500000e-01 : f32
    %35 = vector.broadcast %cst_10 : f32 to vector<9x17x4xf32>
    %36 = arith.mulf %35, %34 : vector<9x17x4xf32>
    %37 = vector.extract_strided_slice %23 {offsets = [0, 1, 0], sizes = [9, 17, 4], strides = [1, 1, 1]} : vector<9x18x4xf32> to vector<9x17x4xf32>
    %cst_11 = arith.constant 2.500000e-01 : f32
    %38 = vector.broadcast %cst_11 : f32 to vector<9x17x4xf32>
    %39 = arith.mulf %38, %37 : vector<9x17x4xf32>
    %40 = arith.addf %36, %39 : vector<9x17x4xf32>
    %41 = vector.extract_strided_slice %23 {offsets = [0, 0, 0], sizes = [9, 17, 4], strides = [1, 1, 1]} : vector<9x18x4xf32> to vector<9x17x4xf32>
    %cst_12 = arith.constant 2.500000e-01 : f32
    %42 = vector.broadcast %cst_12 : f32 to vector<9x17x4xf32>
    %43 = arith.mulf %42, %41 : vector<9x17x4xf32>
    %44 = vector.extract_strided_slice %23 {offsets = [0, 1, 0], sizes = [9, 17, 4], strides = [1, 1, 1]} : vector<9x18x4xf32> to vector<9x17x4xf32>
    %cst_13 = arith.constant 7.500000e-01 : f32
    %45 = vector.broadcast %cst_13 : f32 to vector<9x17x4xf32>
    %46 = arith.mulf %45, %44 : vector<9x17x4xf32>
    %47 = arith.addf %43, %46 : vector<9x17x4xf32>
    %c0_i32_14 = arith.constant 0 : i32
    %48 = vector.broadcast %c0_i32_14 : i32 to vector<1x17x1xi32>
    %49 = arith.cmpi eq, %33, %48 : vector<1x17x1xi32>
    %cst_15 = arith.constant 0.000000e+00 : f32
    %50 = vector.shape_cast %49 : vector<1x17x1xi1> to vector<1x17x1xi1>
    %51 = vector.broadcast %50 : vector<1x17x1xi1> to vector<9x17x4xi1>
    %52 = vector.broadcast %cst_15 : f32 to vector<9x17x4xf32>
    %53 = arith.select %51, %52, %40 : vector<9x17x4xi1>, vector<9x17x4xf32>
    %c16_i32 = arith.constant 16 : i32
    %54 = vector.broadcast %c16_i32 : i32 to vector<1x17x1xi32>
    %55 = arith.cmpi eq, %33, %54 : vector<1x17x1xi32>
    %cst_16 = arith.constant 0.000000e+00 : f32
    %56 = vector.shape_cast %55 : vector<1x17x1xi1> to vector<1x17x1xi1>
    %57 = vector.broadcast %56 : vector<1x17x1xi1> to vector<9x17x4xi1>
    %58 = vector.broadcast %cst_16 : f32 to vector<9x17x4xf32>
    %59 = arith.select %57, %58, %47 : vector<9x17x4xi1>, vector<9x17x4xf32>
    %60 = arith.truncf %53 : vector<9x17x4xf32> to vector<9x17x4xbf16>
    %61 = arith.truncf %59 : vector<9x17x4xf32> to vector<9x17x4xbf16>
    %62 = vector.extract_strided_slice %32 {offsets = [0, 0, 0], sizes = [9, 17, 4], strides = [1, 1, 1]} : vector<9x18x4xf32> to vector<9x17x4xf32>
    %cst_17 = arith.constant 7.500000e-01 : f32
    %63 = vector.broadcast %cst_17 : f32 to vector<9x17x4xf32>
    %64 = arith.mulf %63, %62 : vector<9x17x4xf32>
    %65 = vector.extract_strided_slice %32 {offsets = [0, 1, 0], sizes = [9, 17, 4], strides = [1, 1, 1]} : vector<9x18x4xf32> to vector<9x17x4xf32>
    %cst_18 = arith.constant 2.500000e-01 : f32
    %66 = vector.broadcast %cst_18 : f32 to vector<9x17x4xf32>
    %67 = arith.mulf %66, %65 : vector<9x17x4xf32>
    %68 = arith.addf %64, %67 : vector<9x17x4xf32>
    %69 = vector.extract_strided_slice %32 {offsets = [0, 0, 0], sizes = [9, 17, 4], strides = [1, 1, 1]} : vector<9x18x4xf32> to vector<9x17x4xf32>
    %cst_19 = arith.constant 2.500000e-01 : f32
    %70 = vector.broadcast %cst_19 : f32 to vector<9x17x4xf32>
    %71 = arith.mulf %70, %69 : vector<9x17x4xf32>
    %72 = vector.extract_strided_slice %32 {offsets = [0, 1, 0], sizes = [9, 17, 4], strides = [1, 1, 1]} : vector<9x18x4xf32> to vector<9x17x4xf32>
    %cst_20 = arith.constant 7.500000e-01 : f32
    %73 = vector.broadcast %cst_20 : f32 to vector<9x17x4xf32>
    %74 = arith.mulf %73, %72 : vector<9x17x4xf32>
    %75 = arith.addf %71, %74 : vector<9x17x4xf32>
    %c0_i32_21 = arith.constant 0 : i32
    %76 = vector.broadcast %c0_i32_21 : i32 to vector<1x17x1xi32>
    %77 = arith.cmpi eq, %33, %76 : vector<1x17x1xi32>
    %cst_22 = arith.constant 0.000000e+00 : f32
    %78 = vector.shape_cast %77 : vector<1x17x1xi1> to vector<1x17x1xi1>
    %79 = vector.broadcast %78 : vector<1x17x1xi1> to vector<9x17x4xi1>
    %80 = vector.broadcast %cst_22 : f32 to vector<9x17x4xf32>
    %81 = arith.select %79, %80, %68 : vector<9x17x4xi1>, vector<9x17x4xf32>
    %c16_i32_23 = arith.constant 16 : i32
    %82 = vector.broadcast %c16_i32_23 : i32 to vector<1x17x1xi32>
    %83 = arith.cmpi eq, %33, %82 : vector<1x17x1xi32>
    %cst_24 = arith.constant 0.000000e+00 : f32
    %84 = vector.shape_cast %83 : vector<1x17x1xi1> to vector<1x17x1xi1>
    %85 = vector.broadcast %84 : vector<1x17x1xi1> to vector<9x17x4xi1>
    %86 = vector.broadcast %cst_24 : f32 to vector<9x17x4xf32>
    %87 = arith.select %85, %86, %75 : vector<9x17x4xi1>, vector<9x17x4xf32>
    %88 = arith.truncf %81 : vector<9x17x4xf32> to vector<9x17x4xbf16>
    %89 = arith.truncf %87 : vector<9x17x4xf32> to vector<9x17x4xbf16>
    %cst_25 = arith.constant 0.000000e+00 : f32
    %90 = vector.broadcast %cst_25 : f32 to vector<128x32xf32>
    %91 = vector.extract_strided_slice %60 {offsets = [0, 0, 0], sizes = [8, 16, 4], strides = [1, 1, 1]} : vector<9x17x4xbf16> to vector<8x16x4xbf16>
    %92 = vector.extract_strided_slice %61 {offsets = [0, 0, 0], sizes = [8, 16, 4], strides = [1, 1, 1]} : vector<9x17x4xbf16> to vector<8x16x4xbf16>
    %93 = vector.extract_strided_slice %60 {offsets = [0, 1, 0], sizes = [8, 16, 4], strides = [1, 1, 1]} : vector<9x17x4xbf16> to vector<8x16x4xbf16>
    %94 = vector.extract_strided_slice %61 {offsets = [0, 1, 0], sizes = [8, 16, 4], strides = [1, 1, 1]} : vector<9x17x4xbf16> to vector<8x16x4xbf16>
    %95 = tpu.concatenate %91, %92, %93, %94 in 2 : vector<8x16x4xbf16>, vector<8x16x4xbf16>, vector<8x16x4xbf16>, vector<8x16x4xbf16> -> vector<8x16x16xbf16>
    %96 = vector.shape_cast %95 : vector<8x16x16xbf16> to vector<128x16xbf16>
    %c0_26 = arith.constant 0 : index
    %c0_27 = arith.constant 0 : index
    %97 = vector.load %arg3[%c0_26, %c0_27] : memref<64x32xbf16, #tpu.memory_space<vmem>>, vector<16x32xbf16>
    %cst_28 = arith.constant dense<0.000000e+00> : vector<128x32xf32>
    %98 = tpu.matmul %96, %97, %cst_28 {dimension_numbers = #tpu.dot_dimension_numbers<[1], [0], [0], [1], [0, 0, 1, 1], [], []>} : vector<128x16xbf16>, vector<16x32xbf16>, vector<128x32xf32> -> vector<128x32xf32>
    %99 = arith.addf %90, %98 : vector<128x32xf32>
    %100 = vector.extract_strided_slice %88 {offsets = [0, 0, 0], sizes = [8, 16, 4], strides = [1, 1, 1]} : vector<9x17x4xbf16> to vector<8x16x4xbf16>
    %101 = vector.extract_strided_slice %89 {offsets = [0, 0, 0], sizes = [8, 16, 4], strides = [1, 1, 1]} : vector<9x17x4xbf16> to vector<8x16x4xbf16>
    %102 = vector.extract_strided_slice %88 {offsets = [0, 1, 0], sizes = [8, 16, 4], strides = [1, 1, 1]} : vector<9x17x4xbf16> to vector<8x16x4xbf16>
    %103 = vector.extract_strided_slice %89 {offsets = [0, 1, 0], sizes = [8, 16, 4], strides = [1, 1, 1]} : vector<9x17x4xbf16> to vector<8x16x4xbf16>
    %104 = tpu.concatenate %100, %101, %102, %103 in 2 : vector<8x16x4xbf16>, vector<8x16x4xbf16>, vector<8x16x4xbf16>, vector<8x16x4xbf16> -> vector<8x16x16xbf16>
    %105 = vector.shape_cast %104 : vector<8x16x16xbf16> to vector<128x16xbf16>
    %c16 = arith.constant 16 : index
    %c0_29 = arith.constant 0 : index
    %106 = vector.load %arg3[%c16, %c0_29] : memref<64x32xbf16, #tpu.memory_space<vmem>>, vector<16x32xbf16>
    %cst_30 = arith.constant dense<0.000000e+00> : vector<128x32xf32>
    %107 = tpu.matmul %105, %106, %cst_30 {dimension_numbers = #tpu.dot_dimension_numbers<[1], [0], [0], [1], [0, 0, 1, 1], [], []>} : vector<128x16xbf16>, vector<16x32xbf16>, vector<128x32xf32> -> vector<128x32xf32>
    %108 = arith.addf %99, %107 : vector<128x32xf32>
    %109 = vector.extract_strided_slice %60 {offsets = [1, 0, 0], sizes = [8, 16, 4], strides = [1, 1, 1]} : vector<9x17x4xbf16> to vector<8x16x4xbf16>
    %110 = vector.extract_strided_slice %61 {offsets = [1, 0, 0], sizes = [8, 16, 4], strides = [1, 1, 1]} : vector<9x17x4xbf16> to vector<8x16x4xbf16>
    %111 = vector.extract_strided_slice %60 {offsets = [1, 1, 0], sizes = [8, 16, 4], strides = [1, 1, 1]} : vector<9x17x4xbf16> to vector<8x16x4xbf16>
    %112 = vector.extract_strided_slice %61 {offsets = [1, 1, 0], sizes = [8, 16, 4], strides = [1, 1, 1]} : vector<9x17x4xbf16> to vector<8x16x4xbf16>
    %113 = tpu.concatenate %109, %110, %111, %112 in 2 : vector<8x16x4xbf16>, vector<8x16x4xbf16>, vector<8x16x4xbf16>, vector<8x16x4xbf16> -> vector<8x16x16xbf16>
    %114 = vector.shape_cast %113 : vector<8x16x16xbf16> to vector<128x16xbf16>
    %c32 = arith.constant 32 : index
    %c0_31 = arith.constant 0 : index
    %115 = vector.load %arg3[%c32, %c0_31] : memref<64x32xbf16, #tpu.memory_space<vmem>>, vector<16x32xbf16>
    %cst_32 = arith.constant dense<0.000000e+00> : vector<128x32xf32>
    %116 = tpu.matmul %114, %115, %cst_32 {dimension_numbers = #tpu.dot_dimension_numbers<[1], [0], [0], [1], [0, 0, 1, 1], [], []>} : vector<128x16xbf16>, vector<16x32xbf16>, vector<128x32xf32> -> vector<128x32xf32>
    %117 = arith.addf %108, %116 : vector<128x32xf32>
    %118 = vector.extract_strided_slice %88 {offsets = [1, 0, 0], sizes = [8, 16, 4], strides = [1, 1, 1]} : vector<9x17x4xbf16> to vector<8x16x4xbf16>
    %119 = vector.extract_strided_slice %89 {offsets = [1, 0, 0], sizes = [8, 16, 4], strides = [1, 1, 1]} : vector<9x17x4xbf16> to vector<8x16x4xbf16>
    %120 = vector.extract_strided_slice %88 {offsets = [1, 1, 0], sizes = [8, 16, 4], strides = [1, 1, 1]} : vector<9x17x4xbf16> to vector<8x16x4xbf16>
    %121 = vector.extract_strided_slice %89 {offsets = [1, 1, 0], sizes = [8, 16, 4], strides = [1, 1, 1]} : vector<9x17x4xbf16> to vector<8x16x4xbf16>
    %122 = tpu.concatenate %118, %119, %120, %121 in 2 : vector<8x16x4xbf16>, vector<8x16x4xbf16>, vector<8x16x4xbf16>, vector<8x16x4xbf16> -> vector<8x16x16xbf16>
    %123 = vector.shape_cast %122 : vector<8x16x16xbf16> to vector<128x16xbf16>
    %c48 = arith.constant 48 : index
    %c0_33 = arith.constant 0 : index
    %124 = vector.load %arg3[%c48, %c0_33] : memref<64x32xbf16, #tpu.memory_space<vmem>>, vector<16x32xbf16>
    %cst_34 = arith.constant dense<0.000000e+00> : vector<128x32xf32>
    %125 = tpu.matmul %123, %124, %cst_34 {dimension_numbers = #tpu.dot_dimension_numbers<[1], [0], [0], [1], [0, 0, 1, 1], [], []>} : vector<128x16xbf16>, vector<16x32xbf16>, vector<128x32xf32> -> vector<128x32xf32>
    %126 = arith.addf %117, %125 : vector<128x32xf32>
    %c0_35 = arith.constant 0 : index
    %c0_36 = arith.constant 0 : index
    %127 = vector.load %arg4[%c0_35, %c0_36] : memref<1x32xf32, #tpu.memory_space<vmem>>, vector<1x32xf32>
    %128 = vector.broadcast %127 : vector<1x32xf32> to vector<128x32xf32>
    %129 = arith.addf %126, %128 : vector<128x32xf32>
    %130 = vector.shape_cast %129 : vector<128x32xf32> to vector<8x16x32xf32>
    %131 = arith.truncf %130 : vector<8x16x32xf32> to vector<8x16x32xbf16>
    %c0_37 = arith.constant 0 : index
    %c0_38 = arith.constant 0 : index
    %c0_39 = arith.constant 0 : index
    %c0_40 = arith.constant 0 : index
    %132 = vector.load %arg5[%c0_37, %c0_38, %c0_39, %c0_40] : memref<1x8x16x32xbf16, #tpu.memory_space<vmem>>, vector<1x8x16x32xbf16>
    %133 = vector.shape_cast %132 : vector<1x8x16x32xbf16> to vector<8x16x32xbf16>
    %134 = vector.shape_cast %131 : vector<8x16x32xbf16> to vector<1x8x16x32xbf16>
    tpu.vector_store %arg5[%c0_37, %c0_38, %c0_39, %c0_40], %134 {strides = array<i32>} : memref<1x8x16x32xbf16, #tpu.memory_space<vmem>>, vector<1x8x16x32xbf16>,
    %cst_41 = arith.constant dense<0.000000e+00> : vector<32xf32>
    %135 = vector.multi_reduction <add>, %129, %cst_41 [0] : vector<128x32xf32> to vector<32xf32>
    %136 = vector.shape_cast %135 : vector<32xf32> to vector<1x32xf32>
    %c0_42 = arith.constant 0 : index
    %c0_43 = arith.constant 0 : index
    %c0_44 = arith.constant 0 : index
    %c0_45 = arith.constant 0 : index
    %137 = vector.load %arg6[%c0_42, %c0_43, %c0_44, %c0_45] : memref<1x1x2x32xf32, #tpu.memory_space<vmem>>, vector<1x1x1x32xf32>
    %138 = vector.shape_cast %137 : vector<1x1x1x32xf32> to vector<1x32xf32>
    %139 = vector.shape_cast %136 : vector<1x32xf32> to vector<1x1x1x32xf32>
    tpu.vector_store %arg6[%c0_42, %c0_43, %c0_44, %c0_45], %139 {strides = array<i32>} : memref<1x1x2x32xf32, #tpu.memory_space<vmem>>, vector<1x1x1x32xf32>,
    %140 = arith.mulf %129, %129 : vector<128x32xf32>
    %cst_46 = arith.constant dense<0.000000e+00> : vector<32xf32>
    %141 = vector.multi_reduction <add>, %140, %cst_46 [0] : vector<128x32xf32> to vector<32xf32>
    %142 = vector.shape_cast %141 : vector<32xf32> to vector<1x32xf32>
    %c0_47 = arith.constant 0 : index
    %c0_48 = arith.constant 0 : index
    %c1 = arith.constant 1 : index
    %c0_49 = arith.constant 0 : index
    %143 = vector.load %arg6[%c0_47, %c0_48, %c1, %c0_49] : memref<1x1x2x32xf32, #tpu.memory_space<vmem>>, vector<1x1x1x32xf32>
    %144 = vector.shape_cast %143 : vector<1x1x1x32xf32> to vector<1x32xf32>
    %145 = vector.shape_cast %142 : vector<1x32xf32> to vector<1x1x1x32xf32>
    tpu.vector_store %arg6[%c0_47, %c0_48, %c1, %c0_49], %145 {strides = array<i32>} : memref<1x1x2x32xf32, #tpu.memory_space<vmem>>, vector<1x1x1x32xf32>,
    return
  }
  func.func @transform_0(%arg0: i32, %arg1: i32) -> (i32, i32, i32, i32, i32) {
    %c0_i32 = arith.constant 0 : i32
    %c0_i32_0 = arith.constant 0 : i32
    %c0_i32_1 = arith.constant 0 : i32
    %c0_i32_2 = arith.constant 0 : i32
    return %arg0, %arg1, %c0_i32, %c0_i32_0, %c0_i32_1 : i32, i32, i32, i32, i32
  }
  func.func @transform_1(%arg0: i32, %arg1: i32) -> (i32, i32) {
    %c0_i32 = arith.constant 0 : i32
    %c0_i32_0 = arith.constant 0 : i32
    %c0_i32_1 = arith.constant 0 : i32
    return %c0_i32, %c0_i32_0 : i32, i32
  }
  func.func @transform_2(%arg0: i32, %arg1: i32) -> (i32, i32) {
    %c0_i32 = arith.constant 0 : i32
    %c0_i32_0 = arith.constant 0 : i32
    %c0_i32_1 = arith.constant 0 : i32
    return %c0_i32, %c0_i32_0 : i32, i32
  }
  func.func @transform_3(%arg0: i32, %arg1: i32) -> (i32, i32, i32, i32) {
    %c0_i32 = arith.constant 0 : i32
    %c0_i32_0 = arith.constant 0 : i32
    %c0_i32_1 = arith.constant 0 : i32
    return %arg0, %arg1, %c0_i32, %c0_i32_0 : i32, i32, i32, i32
  }
  func.func @transform_4(%arg0: i32, %arg1: i32) -> (i32, i32, i32, i32) {
    %c0_i32 = arith.constant 0 : i32
    %c0_i32_0 = arith.constant 0 : i32
    %c0_i32_1 = arith.constant 0 : i32
    return %arg0, %arg1, %c0_i32, %c0_i32_0 : i32, i32, i32, i32
  }
}

module attributes {stable_mosaic.version = 11 : i64} {
  func.func @_bn_prelu_kernel(%arg0: i32, %arg1: i32, %arg2: memref<1x8x16x32xbf16, #tpu.memory_space<vmem>>, %arg3: memref<1x32xf32, #tpu.memory_space<vmem>>, %arg4: memref<1x32xf32, #tpu.memory_space<vmem>>, %arg5: memref<1x1xf32, #tpu.memory_space<vmem>>, %arg6: memref<1x8x16x32xf32, #tpu.memory_space<vmem>>) attributes {dimension_semantics = [#tpu.dimension_semantics<parallel>, #tpu.dimension_semantics<parallel>], iteration_bounds = array<i64: 2, 2>, scalar_prefetch = 0 : i64, scratch_operands = 0 : i64, tpu.core_type = #tpu.core_type<tc>, window_params = [{transform_indices = @transform_0, window_bounds = array<i64: 1, 8, 16, 32>}, {pipeline_mode = #tpu.pipeline_mode<synchronous>, transform_indices = @transform_1, window_bounds = array<i64: 1, 32>}, {pipeline_mode = #tpu.pipeline_mode<synchronous>, transform_indices = @transform_2, window_bounds = array<i64: 1, 32>}, {pipeline_mode = #tpu.pipeline_mode<synchronous>, transform_indices = @transform_3, window_bounds = array<i64: 1, 1>}, {transform_indices = @transform_4, window_bounds = array<i64: 1, 8, 16, 32>}]} {
    %c0 = arith.constant 0 : index
    %c0_0 = arith.constant 0 : index
    %c0_1 = arith.constant 0 : index
    %c0_2 = arith.constant 0 : index
    %0 = vector.load %arg2[%c0, %c0_0, %c0_1, %c0_2] : memref<1x8x16x32xbf16, #tpu.memory_space<vmem>>, vector<1x8x16x32xbf16>
    %1 = vector.shape_cast %0 : vector<1x8x16x32xbf16> to vector<8x16x32xbf16>
    %2 = arith.extf %1 : vector<8x16x32xbf16> to vector<8x16x32xf32>
    %c0_3 = arith.constant 0 : index
    %c0_4 = arith.constant 0 : index
    %3 = vector.load %arg3[%c0_3, %c0_4] : memref<1x32xf32, #tpu.memory_space<vmem>>, vector<1x32xf32>
    %4 = vector.shape_cast %3 : vector<1x32xf32> to vector<32xf32>
    %5 = vector.shape_cast %4 : vector<32xf32> to vector<1x1x32xf32>
    %6 = vector.broadcast %5 : vector<1x1x32xf32> to vector<8x16x32xf32>
    %7 = arith.mulf %2, %6 : vector<8x16x32xf32>
    %c0_5 = arith.constant 0 : index
    %c0_6 = arith.constant 0 : index
    %8 = vector.load %arg4[%c0_5, %c0_6] : memref<1x32xf32, #tpu.memory_space<vmem>>, vector<1x32xf32>
    %9 = vector.shape_cast %8 : vector<1x32xf32> to vector<32xf32>
    %10 = vector.shape_cast %9 : vector<32xf32> to vector<1x1x32xf32>
    %11 = vector.broadcast %10 : vector<1x1x32xf32> to vector<8x16x32xf32>
    %12 = arith.addf %7, %11 : vector<8x16x32xf32>
    %c0_7 = arith.constant 0 : index
    %c0_8 = arith.constant 0 : index
    %13 = vector.load %arg5[%c0_7, %c0_8] : memref<1x1xf32, #tpu.memory_space<vmem>>, vector<1x1xf32>
    %14 = vector.extract %13[0, 0] : f32 from vector<1x1xf32>
    %cst = arith.constant 0.000000e+00 : f32
    %15 = vector.broadcast %cst : f32 to vector<8x16x32xf32>
    %16 = arith.cmpf oge, %12, %15 : vector<8x16x32xf32>
    %17 = vector.broadcast %14 : f32 to vector<8x16x32xf32>
    %18 = arith.mulf %17, %12 : vector<8x16x32xf32>
    %19 = arith.select %16, %12, %18 : vector<8x16x32xi1>, vector<8x16x32xf32>
    %c0_9 = arith.constant 0 : index
    %c0_10 = arith.constant 0 : index
    %c0_11 = arith.constant 0 : index
    %c0_12 = arith.constant 0 : index
    %20 = vector.load %arg6[%c0_9, %c0_10, %c0_11, %c0_12] : memref<1x8x16x32xf32, #tpu.memory_space<vmem>>, vector<1x8x16x32xf32>
    %21 = vector.shape_cast %20 : vector<1x8x16x32xf32> to vector<8x16x32xf32>
    %22 = vector.shape_cast %19 : vector<8x16x32xf32> to vector<1x8x16x32xf32>
    tpu.vector_store %arg6[%c0_9, %c0_10, %c0_11, %c0_12], %22 {strides = array<i32>} : memref<1x8x16x32xf32, #tpu.memory_space<vmem>>, vector<1x8x16x32xf32>,
    return
  }
  func.func @transform_0(%arg0: i32, %arg1: i32) -> (i32, i32, i32, i32) {
    %c0_i32 = arith.constant 0 : i32
    %c0_i32_0 = arith.constant 0 : i32
    %c0_i32_1 = arith.constant 0 : i32
    return %arg0, %arg1, %c0_i32, %c0_i32_0 : i32, i32, i32, i32
  }
  func.func @transform_1(%arg0: i32, %arg1: i32) -> (i32, i32) {
    %c0_i32 = arith.constant 0 : i32
    %c0_i32_0 = arith.constant 0 : i32
    %c0_i32_1 = arith.constant 0 : i32
    return %c0_i32, %c0_i32_0 : i32, i32
  }
  func.func @transform_2(%arg0: i32, %arg1: i32) -> (i32, i32) {
    %c0_i32 = arith.constant 0 : i32
    %c0_i32_0 = arith.constant 0 : i32
    %c0_i32_1 = arith.constant 0 : i32
    return %c0_i32, %c0_i32_0 : i32, i32
  }
  func.func @transform_3(%arg0: i32, %arg1: i32) -> (i32, i32) {
    %c0_i32 = arith.constant 0 : i32
    %c0_i32_0 = arith.constant 0 : i32
    %c0_i32_1 = arith.constant 0 : i32
    return %c0_i32, %c0_i32_0 : i32, i32
  }
  func.func @transform_4(%arg0: i32, %arg1: i32) -> (i32, i32, i32, i32) {
    %c0_i32 = arith.constant 0 : i32
    %c0_i32_0 = arith.constant 0 : i32
    %c0_i32_1 = arith.constant 0 : i32
    return %arg0, %arg1, %c0_i32, %c0_i32_0 : i32, i32, i32, i32
  }
}

</mosaic_0001>

<llo_original>
// kernel: tile.19
$region0: #{tile.19}
  %s0 = inlined_call_operand.vmem [shape: f32[4,8], index: 0, kind: input, shape index: {}]
  %s1 = inlined_call_operand.vmem [shape: f32[1,32], index: 1, kind: output, shape index: {}]
  $region1: #{tile.19} parent=0
    #allocation0 [shape = 'u8[4096]{0}', space=vmem, size = 0x1000, scoped, tag = 'scoped mem for output reshape']
    #allocation1 [shape = 'u8[4096]{0}', space=vmem, size = 0x1000, scoped, tag = 'scoped mem for input reshape']
    %s3 = sshllo.u32 0, 4
    %v4 = vld [vmem:[%s0] sm:%s3]
    %5 = vst [vmem:[#allocation1] sm:%s3] %v4
    %v6 = vld [vmem:[#allocation1] sm:$0x1]
    %vm7 = vcmask 64512
    %8 = vst.msk [vmem:[#allocation0] sm:$0x1] %vm7, %v6
    %s9 = scalar_lea.vmem [#allocation1], 3
    %v10 = vld [vmem:[%s9] sm:$0x1]
    %11 = vrot.lane.b32.xlu0 %v10, 24
    %v12 = vpop.permute.xlu0 %11
    %vm13 = vcmask 261312
    %14 = vst.msk [vmem:[#allocation0] sm:$0x1] %vm13, %v12
    %s15 = scalar_lea.vmem [#allocation1], 2
    %v16 = vld [vmem:[%s15] sm:$0x1]
    %17 = vrot.lane.b32.xlu0 %v16, 16
    %v18 = vpop.permute.xlu0 %17
    %vm19 = vcmask 195712
    %20 = vst.msk [vmem:[#allocation0] sm:$0x1] %vm19, %v18
    %s21 = scalar_lea.vmem [#allocation1], 1
    %v22 = vld [vmem:[%s21] sm:$0x1]
    %23 = vrot.lane.b32.xlu0 %v22, 8
    %v24 = vpop.permute.xlu0 %23
    %vm25 = vcmask 130112
    %26 = vst.msk [vmem:[#allocation0] sm:$0x1] %vm25, %v24
    %s28 = sshllo.u32 0, 1
    %v30 = vld [vmem:[#allocation0] sm:%s28]
    %s31 = sshllo.u32 0, 1
    %32 = vst [vmem:[%s1] sm:%s31] %v30

// kernel: tile.18
$region0: #{tile.18}
  #allocation0 [shape = 's32[1]{0}', space=sflag, size = 0x4, scoped, tag = 'scoped memory for tile.18']
  %s0 = inlined_call_operand.vmem [shape: f32[8], index: 0, kind: input, shape index: {}]
  %s1 = inlined_call_operand.vmem [shape: f32[4,8], index: 1, kind: output, shape index: {}]
  // Predicated region
  $region2: #{tile.18} parent=0 // pred_check
    _
  $region3: #{tile.18} parent=0 // pred_check_branch
    %3 = sbr.rel (0) target = $region5
  $region4: #{tile.18} parent=0 // pred_region
    _
  $region5: #{tile.18} parent=0 // pred_fallthru
    _
  %v4 = vld [vmem:[%s0] ss:$0 sm:$0xff]
  %5 = vst [vmem:[%s1] sm:$0xf] %v4

// kernel: squeeze.74
$region0: #{squeeze.74}
  %s0 = inlined_call_operand.vmem [shape: f32[2,2,32], index: 0, kind: input, shape index: {}]
  %s1 = inlined_call_operand.vmem [shape: f32[2,2,4,8], index: 1, kind: output, shape index: {}]
  $region1: #{squeeze.74} parent=0
    #allocation0 [shape = 'u8[16384]{0}', space=vmem, size = 0x4000, scoped, tag = 'scoped mem for output reshape']
    #allocation1 [shape = 'u8[8192]{0}', space=vmem, size = 0x2000, scoped, tag = 'scoped mem for input reshape']
    %s3 = sshllo.u32 0, 2
    %s4 = scalar_lea.vmem %s0, 2
    %v5 = vld [vmem:[%s4] sm:%s3]
    %s6 = scalar_lea.vmem [#allocation1], 8
    %7 = vst [vmem:[%s6] sm:%s3] %v5
    %v8 = vld [vmem:[%s0] sm:%s3]
    %9 = vst [vmem:[#allocation1] sm:%s3] %v8
    %v10 = vld [vmem:[#allocation1] sm:$0x3]
    %vm11 = vcmask 64512
    %12 = vst.msk [vmem:[#allocation0] ss:$8 sm:$0x3] %vm11, %v10
    %s13 = scalar_lea.vmem [#allocation1], 8
    %v14 = vld [vmem:[%s13] sm:$0x3]
    %vm15 = vcmask 64512
    %s16 = scalar_lea.vmem [#allocation0], 16
    %17 = vst.msk [vmem:[%s16] ss:$8 sm:$0x3] %vm15, %v14
    %v18 = vld.sshfl [vmem:[#allocation1] sm:$0xff pattern:$0x99999810]
    %19 = vrot.lane.b32.xlu0 %v18, 120
    %v20 = vpop.permute.xlu0 %19
    %vm21 = vcmask 64512
    %s22 = scalar_lea.vmem [#allocation0], 1
    %23 = vst.msk [vmem:[%s22] ss:$8 sm:$0xf] %vm21, %v20
    %v24 = vld.sshfl [vmem:[#allocation1] sm:$0xff pattern:$0x99999810]
    %25 = vrot.lane.b32.xlu0 %v24, 112
    %v26 = vpop.permute.xlu0 %25
    %vm27 = vcmask 64512
    %s28 = scalar_lea.vmem [#allocation0], 2
    %29 = vst.msk [vmem:[%s28] ss:$8 sm:$0xf] %vm27, %v26
    %v30 = vld.sshfl [vmem:[#allocation1] sm:$0xff pattern:$0x99999810]
    %31 = vrot.lane.b32.xlu0 %v30, 104
    %v32 = vpop.permute.xlu0 %31
    %vm33 = vcmask 64512
    %s34 = scalar_lea.vmem [#allocation0], 3
    %35 = vst.msk [vmem:[%s34] ss:$8 sm:$0xf] %vm33, %v32
    %s37 = sshllo.u32 0, 4
    %v39 = vld [vmem:[#allocation0] sm:%s37]
    %s40 = sshllo.u32 0, 4
    %41 = vst [vmem:[%s1] sm:%s40] %v39
    %s42 = scalar_lea.vmem [#allocation0], 8
    %v43 = vld [vmem:[%s42] sm:%s37]
    %s44 = sshllo.u32 0, 4
    %s45 = scalar_lea.vmem %s1, 4
    %46 = vst [vmem:[%s45] sm:%s44] %v43
    %s47 = scalar_lea.vmem [#allocation0], 16
    %v48 = vld [vmem:[%s47] sm:%s37]
    %s49 = sshllo.u32 0, 4
    %s50 = smul.addr 4, 2
    %s51 = scalar_lea.vmem %s1, %s50
    %52 = vst [vmem:[%s51] sm:%s49] %v48
    %s53 = scalar_lea.vmem [#allocation0], 24
    %v54 = vld [vmem:[%s53] sm:%s37]
    %s55 = sshllo.u32 0, 4
    %s56 = smul.addr 4, 3
    %s57 = scalar_lea.vmem %s1, %s56
    %58 = vst [vmem:[%s57] sm:%s55] %v54

// kernel: psp_upsample.3
$region0: #{psp_upsample.3}
  #allocation0 [shape = 'u32[]', space=smem, size = 0x4, offset = 0x4, fixed_abs, tag = 'smem constant byte address 0x4 - core index']
  #allocation1 [shape = 'u32[144,128]{1,0:T(1,128)}', space=vmem, size = 0x12000, scoped, tag = 'internal scratch']
  #allocation2 [shape = 'f32[1,1]{1,0:T(1,128)S(1)}', space=vmem, size = 0x200, scoped, tag = 'scoped memory for psp_upsample.3']
  %s0 = inlined_call_operand.vmem [shape: bf16[2,16,16,32], index: 0, kind: input, shape index: {}]
  %s1 = inlined_call_operand.vmem [shape: f32[1,32], index: 1, kind: input, shape index: {}]
  %s2 = inlined_call_operand.vmem [shape: f32[1,32], index: 2, kind: input, shape index: {}]
  %s3 = inlined_call_operand.<no memory space> [shape: f32[1,1], index: 3, kind: input, shape index: {}]
  %s4 = inlined_call_operand.vmem [shape: f32[2,16,16,32], index: 4, kind: output, shape index: {}]
  %s5 = sld [smem:[#allocation0]]
  $region49: #{psp_upsample.3} parent=0
    _
  %s7 = ssub.s32 1, %s5
  %s8 = scalar_select 0, %s7, %s5
  %v9 = vstv %s3
  %10 = vst [vmem:[#allocation2] sm:$0x1] %v9
  loop: start=0, step=1, limit=6
  $region2: #{psp_upsample.3} parent=0 // loop_pre_header
    _
  $region3: #{psp_upsample.3} parent=0 // loop_header
    %s12 = sphi 0, %s16
    %p13 = scmp.ge.s32.totalorder %s12, 6
    %s19 = sphi 0, %s31
    %s20 = sphi 0, %s27
    %s21 = sphi 0, %s19
    %s22 = sphi 0, %s20
    %s23 = sphi 0, %s21
    %s24 = sphi 0, %s22
    %s36 = sphi 0, %s38
    %s39 = sphi 0, %s36
    %s40 = sphi 0, %s39
    %s56 = sphi 0, %s40
    %s60 = sphi 0, %s60
    %s62 = sphi 0, %s60
    %s63 = sphi 0, %s62
    %s77 = sphi 0, %s63
    %s81 = sphi 0, %s81
    %s83 = sphi 0, %s81
    %s84 = sphi 0, %s83
    %s98 = sphi 0, %s84
    %s102 = sphi 0, %s102
    %s104 = sphi 0, %s102
    %s105 = sphi 0, %s104
    %s119 = sphi 0, %s105
    %s127 = sphi 0, %s129
    %s130 = sphi 0, %s127
    %s131 = sphi 0, %s130
    %s147 = sphi 0, %s131
  $region4: #{psp_upsample.3} parent=0 // loop_header_branch
    %15 = sbr.rel (%p13) target = $region8
  $region5: #{psp_upsample.3} parent=0 // loop_body
    %s17 = ssub.s32 %s12, 1
    %s18 = ssub.s32 %s12, 2
    %s25 = sadd.s32 1, %s20
    %p26 = scmp.ge.s32.totalorder %s25, 2
    %s27 = scalar_select %p26, 0, %s25
    %s28 = sadd.s32 1, %s19
    %s29 = scalar_select %p26, %s28, %s19
    %p30 = scmp.ge.s32.totalorder %s29, 2
    %s31 = scalar_select %p30, 0, %s29
    %s32 = ssub.s32 %s19, %s31
    %s33 = ssub.s32 %s20, %s27
    %s34 = sor.u32 %s32, %s33
    %p35 = scmp.eq.s32.totalorder %s34, 0
    %s37 = sadd.s32 %s36, 1
    %s38 = scalar_select %p35, %s36, %s37
    %p41 = pneg %p35
    %p42 = scmp.eq.s32.totalorder %s12, 3
    %p43 = por %p41, %p42
    %p44 = scmp.ne.s32.totalorder %s36, %s39
    %p45 = scmp.eq.s32.totalorder %s12, 0
    %p46 = por %p44, %p45
    %p47 = scmp.ne.s32.totalorder %s36, %s39
    %p48 = scmp.eq.s32.totalorder %s17, 3
    %p49 = por %p47, %p48
    %p50 = scmp.ne.s32.totalorder %s39, %s40
    %p51 = scmp.eq.s32.totalorder %s17, 0
    %p52 = por %p50, %p51
    %p53 = scmp.ne.s32.totalorder %s39, %s40
    %p54 = scmp.eq.s32.totalorder %s18, 3
    %p55 = por %p53, %p54
    %p57 = scmp.ne.s32.totalorder %s40, %s56
    %p58 = scmp.eq.s32.totalorder %s18, 0
    %p59 = por %p57, %p58
    %s61 = sadd.s32 %s60, 1
    %p64 = scmp.eq.s32.totalorder %s12, 3
    %p65 = scmp.ne.s32.totalorder %s60, %s62
    %p66 = scmp.eq.s32.totalorder %s12, 0
    %p67 = por %p65, %p66
    %p68 = scmp.ne.s32.totalorder %s60, %s62
    %p69 = scmp.eq.s32.totalorder %s17, 3
    %p70 = por %p68, %p69
    %p71 = scmp.ne.s32.totalorder %s62, %s63
    %p72 = scmp.eq.s32.totalorder %s17, 0
    %p73 = por %p71, %p72
    %p74 = scmp.ne.s32.totalorder %s62, %s63
    %p75 = scmp.eq.s32.totalorder %s18, 3
    %p76 = por %p74, %p75
    %p78 = scmp.ne.s32.totalorder %s63, %s77
    %p79 = scmp.eq.s32.totalorder %s18, 0
    %p80 = por %p78, %p79
    %s82 = sadd.s32 %s81, 1
    %p85 = scmp.eq.s32.totalorder %s12, 3
    %p86 = scmp.ne.s32.totalorder %s81, %s83
    %p87 = scmp.eq.s32.totalorder %s12, 0
    %p88 = por %p86, %p87
    %p89 = scmp.ne.s32.totalorder %s81, %s83
    %p90 = scmp.eq.s32.totalorder %s17, 3
    %p91 = por %p89, %p90
    %p92 = scmp.ne.s32.totalorder %s83, %s84
    %p93 = scmp.eq.s32.totalorder %s17, 0
    %p94 = por %p92, %p93
    %p95 = scmp.ne.s32.totalorder %s83, %s84
    %p96 = scmp.eq.s32.totalorder %s18, 3
    %p97 = por %p95, %p96
    %p99 = scmp.ne.s32.totalorder %s84, %s98
    %p100 = scmp.eq.s32.totalorder %s18, 0
    %p101 = por %p99, %p100
    %s103 = sadd.s32 %s102, 1
    %p106 = scmp.eq.s32.totalorder %s12, 3
    %p107 = scmp.ne.s32.totalorder %s102, %s104
    %p108 = scmp.eq.s32.totalorder %s12, 0
    %p109 = por %p107, %p108
    %p110 = scmp.ne.s32.totalorder %s102, %s104
    %p111 = scmp.eq.s32.totalorder %s17, 3
    %p112 = por %p110, %p111
    %p113 = scmp.ne.s32.totalorder %s104, %s105
    %p114 = scmp.eq.s32.totalorder %s17, 0
    %p115 = por %p113, %p114
    %p116 = scmp.ne.s32.totalorder %s104, %s105
    %p117 = scmp.eq.s32.totalorder %s18, 3
    %p118 = por %p116, %p117
    %p120 = scmp.ne.s32.totalorder %s105, %s119
    %p121 = scmp.eq.s32.totalorder %s18, 0
    %p122 = por %p120, %p121
    %s123 = ssub.s32 %s19, %s31
    %s124 = ssub.s32 %s20, %s27
    %s125 = sor.u32 %s123, %s124
    %p126 = scmp.eq.s32.totalorder %s125, 0
    %s128 = sadd.s32 %s127, 1
    %s129 = scalar_select %p126, %s127, %s128
    %p132 = pneg %p126
    %p133 = scmp.eq.s32.totalorder %s12, 3
    %p134 = por %p132, %p133
    %p135 = scmp.ne.s32.totalorder %s127, %s130
    %p136 = scmp.eq.s32.totalorder %s12, 0
    %p137 = por %p135, %p136
    %p138 = scmp.ne.s32.totalorder %s127, %s130
    %p139 = scmp.eq.s32.totalorder %s17, 3
    %p140 = por %p138, %p139
    %p141 = scmp.ne.s32.totalorder %s130, %s131
    %p142 = scmp.eq.s32.totalorder %s17, 0
    %p143 = por %p141, %p142
    %p144 = scmp.ne.s32.totalorder %s130, %s131
    %p145 = scmp.eq.s32.totalorder %s18, 3
    %p146 = por %p144, %p145
    %p148 = scmp.ne.s32.totalorder %s131, %s147
    %p149 = scmp.eq.s32.totalorder %s18, 0
    %p150 = por %p148, %p149
    %p151 = scmp.le.s32.totalorder 1, %s12
    %p152 = scmp.lt.s32.totalorder %s12, 5
    %p153 = pnand %p151, %p152
    %p154 = pneg %p153
    // Predicated region
    $region9: #{psp_upsample.3} parent=5 // pred_check
      _
    $region10: #{psp_upsample.3} parent=5 // pred_check_branch
      %156 = sbr.rel (%p153) target = $region12
    $region11: #{psp_upsample.3} parent=5 // pred_region
      %s157 = ssub.s32 %s12, 1
      // Predicated region
      $region13: #{psp_upsample.3} parent=11 // pred_check
        %p158 = pneg %p73
      $region14: #{psp_upsample.3} parent=11 // pred_check_branch
        %160 = sbr.rel (%p158) target = $region16
      $region15: #{psp_upsample.3} parent=11 // pred_region
        _
      $region16: #{psp_upsample.3} parent=11 // pred_fallthru
        _
      // Predicated region
      $region17: #{psp_upsample.3} parent=11 // pred_check
        %p161 = pneg %p94
      $region18: #{psp_upsample.3} parent=11 // pred_check_branch
        %163 = sbr.rel (%p161) target = $region20
      $region19: #{psp_upsample.3} parent=11 // pred_region
        _
      $region20: #{psp_upsample.3} parent=11 // pred_fallthru
        _
      // Predicated region
      $region21: #{psp_upsample.3} parent=11 // pred_check
        %p164 = pneg %p115
      $region22: #{psp_upsample.3} parent=11 // pred_check_branch
        %166 = sbr.rel (%p164) target = $region24
      $region23: #{psp_upsample.3} parent=11 // pred_region
        _
      $region24: #{psp_upsample.3} parent=11 // pred_fallthru
        _
    $region12: #{psp_upsample.3} parent=5 // pred_fallthru
      _
    %p167 = scmp.lt.s32.totalorder %s12, 4
    // Predicated region
    $region25: #{psp_upsample.3} parent=5 // pred_check
      %p168 = pneg %p167
    $region26: #{psp_upsample.3} parent=5 // pred_check_branch
      %170 = sbr.rel (%p168) target = $region28
    $region27: #{psp_upsample.3} parent=5 // pred_region
      // Predicated region
      $region29: #{psp_upsample.3} parent=27 // pred_check
        %p171 = pneg %p46
      $region30: #{psp_upsample.3} parent=27 // pred_check_branch
        %173 = sbr.rel (%p171) target = $region32
      $region31: #{psp_upsample.3} parent=27 // pred_region
        %s174 = smul.u32 8, %s20
        %p175 = scmp.lt.s32.totalorder %s19, 1
        %s176 = scalar_select %p175, %s19, 1
        %p177 = scmp.lt.s32.totalorder %s174, 15
        %s178 = scalar_select %p177, %s174, 15
        %s179 = smul.addr %s178, 2
        %s180 = smul.addr %s176, 32
        %s181 = sadd.s32 %s179, %s180
        %s182 = smul.addr %s181, 4
        %s183 = scalar_lea.vmem %s0, %s182
        %s184 = smul.u32 8, %s20
      $region32: #{psp_upsample.3} parent=27 // pred_fallthru
        _
    $region28: #{psp_upsample.3} parent=5 // pred_fallthru
      _
    %p185 = scmp.le.s32.totalorder 1, %s12
    %p186 = scmp.lt.s32.totalorder %s12, 5
    %p187 = pnand %p185, %p186
    %p188 = pneg %p187
    // Predicated region
    $region33: #{psp_upsample.3} parent=5 // pred_check
      _
    $region34: #{psp_upsample.3} parent=5 // pred_check_branch
      %190 = sbr.rel (%p187) target = $region36
    $region35: #{psp_upsample.3} parent=5 // pred_region
      %s191 = ssub.s32 %s12, 1
      %s192 = smul.u32 8, %s22
      %p193 = scmp.lt.s32.totalorder %s21, 1
      %s194 = scalar_select %p193, %s21, 1
      %p195 = scmp.lt.s32.totalorder %s192, 15
      %s196 = scalar_select %p195, %s192, 15
      %s197 = smul.addr %s196, 2
      %s198 = smul.addr %s194, 32
      %s199 = sadd.s32 %s197, %s198
      %s200 = smul.addr %s199, 4
      %s201 = scalar_lea.vmem %s0, %s200
      %p202 = pneg %p52
      %p203 = pneg %p49
      %p204 = pneg %p73
      %p205 = pneg %p70
      %p206 = pneg %p94
      %p207 = pneg %p91
      %p208 = pneg %p115
      %p209 = pneg %p112
      %p210 = pneg %p143
      %p211 = pneg %p140
      %s212 = smul.u32 8, %s22
      %p213 = scmp.lt.s32.totalorder %s21, 1
      %s214 = scalar_select %p213, %s21, 1
      %p215 = scmp.lt.s32.totalorder %s212, 15
      %s216 = scalar_select %p215, %s212, 15
      %s217 = smul.addr %s216, 2
      %s218 = smul.addr %s214, 32
      %s219 = sadd.s32 %s217, %s218
      %s220 = smul.addr %s219, 8
      %s221 = scalar_lea.vmem %s4, %s220
      %s222 = smul.u32 8, %s22
      %p223 = scmp.lt.s32.totalorder %s21, 1
      %s224 = scalar_select %p223, %s21, 1
      %p225 = scmp.lt.s32.totalorder %s222, 15
      %s226 = scalar_select %p225, %s222, 15
      %s227 = smul.addr %s226, 2
      %s228 = smul.addr %s224, 32
      %s229 = sadd.s32 %s227, %s228
      %s230 = smul.addr %s229, 4
      %s231 = scalar_lea.vmem %s0, %s230
      %s232 = smul.u32 8, %s22
      %s233 = smul.u32 8, %s22
      %p234 = scmp.lt.s32.totalorder %s21, 1
      %s235 = scalar_select %p234, %s21, 1
      %p236 = scmp.lt.s32.totalorder %s233, 15
      %s237 = scalar_select %p236, %s233, 15
      %s238 = smul.addr %s237, 2
      %s239 = smul.addr %s235, 32
      %s240 = sadd.s32 %s238, %s239
      %s241 = smul.addr %s240, 8
      %s242 = scalar_lea.vmem %s4, %s241
      %s243 = smul.u32 8, %s22
      %v244 = vld [vmem:[%s231] sm:$0xf]
      %v245 = vld [vmem:[%s231 + $0x4] sm:$0xf]
      %v246 = vld [vmem:[%s231 + $0x8] sm:$0xf]
      %v247 = vld [vmem:[%s231 + $0xc] sm:$0xf]
      %v248 = vld [vmem:[%s231 + $0x10] sm:$0xf]
      %v249 = vld [vmem:[%s231 + $0x14] sm:$0xf]
      %v250 = vld [vmem:[%s231 + $0x18] sm:$0xf]
      %v251 = vld [vmem:[%s231 + $0x1c] sm:$0xf]
      %v252 = vld [vmem:[%s231 + $0x20] sm:$0xf]
      %v253 = vld [vmem:[%s231 + $0x24] sm:$0xf]
      %v254 = vld [vmem:[%s231 + $0x28] sm:$0xf]
      %v255 = vld [vmem:[%s231 + $0x2c] sm:$0xf]
      %v256 = vld [vmem:[%s231 + $0x30] sm:$0xf]
      %v257 = vld [vmem:[%s231 + $0x34] sm:$0xf]
      %v258 = vld [vmem:[%s231 + $0x38] sm:$0xf]
      %v259 = vld [vmem:[%s231 + $0x3c] sm:$0xf]
      %v260 = vunpack.c.l.bf16 %v244
      %v261 = vunpack.c.l.bf16 %v245
      %v262 = vunpack.c.l.bf16 %v246
      %v263 = vunpack.c.l.bf16 %v247
      %v264 = vunpack.c.l.bf16 %v248
      %v265 = vunpack.c.l.bf16 %v249
      %v266 = vunpack.c.l.bf16 %v250
      %v267 = vunpack.c.l.bf16 %v251
      %v268 = vunpack.c.l.bf16 %v252
      %v269 = vunpack.c.l.bf16 %v253
      %v270 = vunpack.c.l.bf16 %v254
      %v271 = vunpack.c.l.bf16 %v255
      %v272 = vunpack.c.l.bf16 %v256
      %v273 = vunpack.c.l.bf16 %v257
      %v274 = vunpack.c.l.bf16 %v258
      %v275 = vunpack.c.l.bf16 %v259
      %v276 = vld [vmem:[%s1] sm:$0x1]
      %v278 = vlaneseq
      %v279 = vshrl.u32 %v278, 7
      %v280 = vsub.s32 0, %v279
      %v281 = vrot.slane %v276, %v280
      %v283 = vmul.f32 %v260, %v281
      %v284 = vmul.f32 %v261, %v281
      %v285 = vmul.f32 %v262, %v281
      %v286 = vmul.f32 %v263, %v281
      %v287 = vmul.f32 %v264, %v281
      %v288 = vmul.f32 %v265, %v281
      %v289 = vmul.f32 %v266, %v281
      %v290 = vmul.f32 %v267, %v281
      %v291 = vmul.f32 %v268, %v281
      %v292 = vmul.f32 %v269, %v281
      %v293 = vmul.f32 %v270, %v281
      %v294 = vmul.f32 %v271, %v281
      %v295 = vmul.f32 %v272, %v281
      %v296 = vmul.f32 %v273, %v281
      %v297 = vmul.f32 %v274, %v281
      %v298 = vmul.f32 %v275, %v281
      %v299 = vld [vmem:[%s2] sm:$0x1]
      %v301 = vlaneseq
      %v302 = vshrl.u32 %v301, 7
      %v303 = vsub.s32 0, %v302
      %v304 = vrot.slane %v299, %v303
      %v306 = vadd.f32 %v283, %v304
      %v307 = vadd.f32 %v284, %v304
      %v308 = vadd.f32 %v285, %v304
      %v309 = vadd.f32 %v286, %v304
      %v310 = vadd.f32 %v287, %v304
      %v311 = vadd.f32 %v288, %v304
      %v312 = vadd.f32 %v289, %v304
      %v313 = vadd.f32 %v290, %v304
      %v314 = vadd.f32 %v291, %v304
      %v315 = vadd.f32 %v292, %v304
      %v316 = vadd.f32 %v293, %v304
      %v317 = vadd.f32 %v294, %v304
      %v318 = vadd.f32 %v295, %v304
      %v319 = vadd.f32 %v296, %v304
      %v320 = vadd.f32 %v297, %v304
      %v321 = vadd.f32 %v298, %v304
      %v322 = vld [vmem:[#allocation2] sm:$0x1]
      %s323 = vtos %v322
      %vm324 = vcmp.ge.f32.partialorder %v306, 0.0
      %vm325 = vcmp.ge.f32.partialorder %v307, 0.0
      %vm326 = vcmp.ge.f32.partialorder %v308, 0.0
      %vm327 = vcmp.ge.f32.partialorder %v309, 0.0
      %vm328 = vcmp.ge.f32.partialorder %v310, 0.0
      %vm329 = vcmp.ge.f32.partialorder %v311, 0.0
      %vm330 = vcmp.ge.f32.partialorder %v312, 0.0
      %vm331 = vcmp.ge.f32.partialorder %v313, 0.0
      %vm332 = vcmp.ge.f32.partialorder %v314, 0.0
      %vm333 = vcmp.ge.f32.partialorder %v315, 0.0
      %vm334 = vcmp.ge.f32.partialorder %v316, 0.0
      %vm335 = vcmp.ge.f32.partialorder %v317, 0.0
      %vm336 = vcmp.ge.f32.partialorder %v318, 0.0
      %vm337 = vcmp.ge.f32.partialorder %v319, 0.0
      %vm338 = vcmp.ge.f32.partialorder %v320, 0.0
      %vm339 = vcmp.ge.f32.partialorder %v321, 0.0
      %v340 = vstv %s323
      %v341 = vmul.f32 %v340, %v306
      %v342 = vmul.f32 %v340, %v307
      %v343 = vmul.f32 %v340, %v308
      %v344 = vmul.f32 %v340, %v309
      %v345 = vmul.f32 %v340, %v310
      %v346 = vmul.f32 %v340, %v311
      %v347 = vmul.f32 %v340, %v312
      %v348 = vmul.f32 %v340, %v313
      %v349 = vmul.f32 %v340, %v314
      %v350 = vmul.f32 %v340, %v315
      %v351 = vmul.f32 %v340, %v316
      %v352 = vmul.f32 %v340, %v317
      %v353 = vmul.f32 %v340, %v318
      %v354 = vmul.f32 %v340, %v319
      %v355 = vmul.f32 %v340, %v320
      %v356 = vmul.f32 %v340, %v321
      %v357 = vsel %vm324, %v306, %v341
      %v358 = vsel %vm325, %v307, %v342
      %v359 = vsel %vm326, %v308, %v343
      %v360 = vsel %vm327, %v309, %v344
      %v361 = vsel %vm328, %v310, %v345
      %v362 = vsel %vm329, %v311, %v346
      %v363 = vsel %vm330, %v312, %v347
      %v364 = vsel %vm331, %v313, %v348
      %v365 = vsel %vm332, %v314, %v349
      %v366 = vsel %vm333, %v315, %v350
      %v367 = vsel %vm334, %v316, %v351
      %v368 = vsel %vm335, %v317, %v352
      %v369 = vsel %vm336, %v318, %v353
      %v370 = vsel %vm337, %v319, %v354
      %v371 = vsel %vm338, %v320, %v355
      %v372 = vsel %vm339, %v321, %v356
      %vm373 = vcmask 261120
      %374 = vst.msk [vmem:[%s242] sm:$0xff] %vm373, %v357
      %375 = vst.msk [vmem:[%s242 + $0x8] sm:$0xff] %vm373, %v358
      %376 = vst.msk [vmem:[%s242 + $0x10] sm:$0xff] %vm373, %v359
      %377 = vst.msk [vmem:[%s242 + $0x18] sm:$0xff] %vm373, %v360
      %378 = vst.msk [vmem:[%s242 + $0x20] sm:$0xff] %vm373, %v361
      %379 = vst.msk [vmem:[%s242 + $0x28] sm:$0xff] %vm373, %v362
      %380 = vst.msk [vmem:[%s242 + $0x30] sm:$0xff] %vm373, %v363
      %381 = vst.msk [vmem:[%s242 + $0x38] sm:$0xff] %vm373, %v364
      %382 = vst.msk [vmem:[%s242 + $0x40] sm:$0xff] %vm373, %v365
      %383 = vst.msk [vmem:[%s242 + $0x48] sm:$0xff] %vm373, %v366
      %384 = vst.msk [vmem:[%s242 + $0x50] sm:$0xff] %vm373, %v367
      %385 = vst.msk [vmem:[%s242 + $0x58] sm:$0xff] %vm373, %v368
      %386 = vst.msk [vmem:[%s242 + $0x60] sm:$0xff] %vm373, %v369
      %387 = vst.msk [vmem:[%s242 + $0x68] sm:$0xff] %vm373, %v370
      %388 = vst.msk [vmem:[%s242 + $0x70] sm:$0xff] %vm373, %v371
      %389 = vst.msk [vmem:[%s242 + $0x78] sm:$0xff] %vm373, %v372
      %s390 = smul.u32 8, %s22
      %p391 = scmp.lt.s32.totalorder %s21, 1
      %s392 = scalar_select %p391, %s21, 1
      %p393 = scmp.lt.s32.totalorder %s390, 15
      %s394 = scalar_select %p393, %s390, 15
      %s395 = smul.addr %s394, 2
      %s396 = smul.addr %s392, 32
      %s397 = sadd.s32 %s395, %s396
      %s398 = smul.addr %s397, 8
      %s399 = scalar_lea.vmem %s4, %s398
      // Predicated region
      $region37: #{psp_upsample.3} parent=35 // pred_check
        %p400 = pneg %p140
      $region38: #{psp_upsample.3} parent=35 // pred_check_branch
        %402 = sbr.rel (%p400) target = $region40
      $region39: #{psp_upsample.3} parent=35 // pred_region
        %s403 = smul.u32 8, %s22
      $region40: #{psp_upsample.3} parent=35 // pred_fallthru
        _
    $region36: #{psp_upsample.3} parent=5 // pred_fallthru
      _
    %p404 = scmp.le.s32.totalorder 2, %s12
    // Predicated region
    $region41: #{psp_upsample.3} parent=5 // pred_check
      %p405 = pneg %p404
    $region42: #{psp_upsample.3} parent=5 // pred_check_branch
      %407 = sbr.rel (%p405) target = $region44
    $region43: #{psp_upsample.3} parent=5 // pred_region
      %s408 = ssub.s32 %s12, 2
      // Predicated region
      $region45: #{psp_upsample.3} parent=43 // pred_check
        %p409 = pneg %p146
      $region46: #{psp_upsample.3} parent=43 // pred_check_branch
        %411 = sbr.rel (%p409) target = $region48
      $region47: #{psp_upsample.3} parent=43 // pred_region
        %s412 = smul.u32 8, %s24
        %p413 = scmp.lt.s32.totalorder %s23, 1
        %s414 = scalar_select %p413, %s23, 1
        %p415 = scmp.lt.s32.totalorder %s412, 15
        %s416 = scalar_select %p415, %s412, 15
        %s417 = smul.addr %s416, 2
        %s418 = smul.addr %s414, 32
        %s419 = sadd.s32 %s417, %s418
        %s420 = smul.addr %s419, 8
        %s421 = scalar_lea.vmem %s4, %s420
      $region48: #{psp_upsample.3} parent=43 // pred_fallthru
        _
    $region44: #{psp_upsample.3} parent=5 // pred_fallthru
      _
  $region6: #{psp_upsample.3} parent=0 // loop_footer
    %s16 = sadd.s32 1, %s12
  $region7: #{psp_upsample.3} parent=0 // loop_footer_branch
    %11 = sbr.rel target = $region3
  $region8: #{psp_upsample.3} parent=0 // loop_exit
    _

// kernel: psp_upsample.2
$region0: #{psp_upsample.2}
  #allocation0 [shape = 'u32[]', space=smem, size = 0x4, offset = 0x4, fixed_abs, tag = 'smem constant byte address 0x4 - core index']
  #allocation1 [shape = 'u32[144,128]{1,0:T(1,128)}', space=vmem, size = 0x12000, scoped, tag = 'internal scratch']
  %s0 = inlined_call_operand.vmem [shape: f32[2,2,10,18,4], index: 0, kind: input, shape index: {}]
  %s1 = inlined_call_operand.vmem [shape: bf16[64,32], index: 1, kind: input, shape index: {}]
  %s2 = inlined_call_operand.vmem [shape: f32[1,32], index: 2, kind: input, shape index: {}]
  %s3 = inlined_call_operand.vmem [shape: bf16[2,16,16,32], index: 3, kind: output, shape index: {0}]
  %s4 = inlined_call_operand.vmem [shape: f32[2,2,2,32], index: 4, kind: output, shape index: {1}]
  %5 = xla_tuple %s3, %s4
  %s6 = sld [smem:[#allocation0]]
  $region53: #{psp_upsample.2} parent=0
    _
  %s8 = ssub.s32 1, %s6
  %s9 = scalar_select 0, %s8, %s6
  loop: start=0, step=1, limit=6
  $region2: #{psp_upsample.2} parent=0 // loop_pre_header
    _
  $region3: #{psp_upsample.2} parent=0 // loop_header
    %s11 = sphi 0, %s15
    %p12 = scmp.ge.s32.totalorder %s11, 6
    %s18 = sphi 0, %s30
    %s19 = sphi 0, %s26
    %s20 = sphi 0, %s18
    %s21 = sphi 0, %s19
    %s22 = sphi 0, %s20
    %s23 = sphi 0, %s21
    %s35 = sphi 0, %s37
    %s38 = sphi 0, %s35
    %s39 = sphi 0, %s38
    %s55 = sphi 0, %s39
    %s59 = sphi 0, %s59
    %s61 = sphi 0, %s59
    %s62 = sphi 0, %s61
    %s76 = sphi 0, %s62
    %s80 = sphi 0, %s80
    %s82 = sphi 0, %s80
    %s83 = sphi 0, %s82
    %s97 = sphi 0, %s83
    %s105 = sphi 0, %s107
    %s108 = sphi 0, %s105
    %s109 = sphi 0, %s108
    %s125 = sphi 0, %s109
    %s133 = sphi 0, %s135
    %s136 = sphi 0, %s133
    %s137 = sphi 0, %s136
    %s153 = sphi 0, %s137
  $region4: #{psp_upsample.2} parent=0 // loop_header_branch
    %14 = sbr.rel (%p12) target = $region8
  $region5: #{psp_upsample.2} parent=0 // loop_body
    %s16 = ssub.s32 %s11, 1
    %s17 = ssub.s32 %s11, 2
    %s24 = sadd.s32 1, %s19
    %p25 = scmp.ge.s32.totalorder %s24, 2
    %s26 = scalar_select %p25, 0, %s24
    %s27 = sadd.s32 1, %s18
    %s28 = scalar_select %p25, %s27, %s18
    %p29 = scmp.ge.s32.totalorder %s28, 2
    %s30 = scalar_select %p29, 0, %s28
    %s31 = ssub.s32 %s18, %s30
    %s32 = ssub.s32 %s19, %s26
    %s33 = sor.u32 %s31, %s32
    %p34 = scmp.eq.s32.totalorder %s33, 0
    %s36 = sadd.s32 %s35, 1
    %s37 = scalar_select %p34, %s35, %s36
    %p40 = pneg %p34
    %p41 = scmp.eq.s32.totalorder %s11, 3
    %p42 = por %p40, %p41
    %p43 = scmp.ne.s32.totalorder %s35, %s38
    %p44 = scmp.eq.s32.totalorder %s11, 0
    %p45 = por %p43, %p44
    %p46 = scmp.ne.s32.totalorder %s35, %s38
    %p47 = scmp.eq.s32.totalorder %s16, 3
    %p48 = por %p46, %p47
    %p49 = scmp.ne.s32.totalorder %s38, %s39
    %p50 = scmp.eq.s32.totalorder %s16, 0
    %p51 = por %p49, %p50
    %p52 = scmp.ne.s32.totalorder %s38, %s39
    %p53 = scmp.eq.s32.totalorder %s17, 3
    %p54 = por %p52, %p53
    %p56 = scmp.ne.s32.totalorder %s39, %s55
    %p57 = scmp.eq.s32.totalorder %s17, 0
    %p58 = por %p56, %p57
    %s60 = sadd.s32 %s59, 1
    %p63 = scmp.eq.s32.totalorder %s11, 3
    %p64 = scmp.ne.s32.totalorder %s59, %s61
    %p65 = scmp.eq.s32.totalorder %s11, 0
    %p66 = por %p64, %p65
    %p67 = scmp.ne.s32.totalorder %s59, %s61
    %p68 = scmp.eq.s32.totalorder %s16, 3
    %p69 = por %p67, %p68
    %p70 = scmp.ne.s32.totalorder %s61, %s62
    %p71 = scmp.eq.s32.totalorder %s16, 0
    %p72 = por %p70, %p71
    %p73 = scmp.ne.s32.totalorder %s61, %s62
    %p74 = scmp.eq.s32.totalorder %s17, 3
    %p75 = por %p73, %p74
    %p77 = scmp.ne.s32.totalorder %s62, %s76
    %p78 = scmp.eq.s32.totalorder %s17, 0
    %p79 = por %p77, %p78
    %s81 = sadd.s32 %s80, 1
    %p84 = scmp.eq.s32.totalorder %s11, 3
    %p85 = scmp.ne.s32.totalorder %s80, %s82
    %p86 = scmp.eq.s32.totalorder %s11, 0
    %p87 = por %p85, %p86
    %p88 = scmp.ne.s32.totalorder %s80, %s82
    %p89 = scmp.eq.s32.totalorder %s16, 3
    %p90 = por %p88, %p89
    %p91 = scmp.ne.s32.totalorder %s82, %s83
    %p92 = scmp.eq.s32.totalorder %s16, 0
    %p93 = por %p91, %p92
    %p94 = scmp.ne.s32.totalorder %s82, %s83
    %p95 = scmp.eq.s32.totalorder %s17, 3
    %p96 = por %p94, %p95
    %p98 = scmp.ne.s32.totalorder %s83, %s97
    %p99 = scmp.eq.s32.totalorder %s17, 0
    %p100 = por %p98, %p99
    %s101 = ssub.s32 %s18, %s30
    %s102 = ssub.s32 %s19, %s26
    %s103 = sor.u32 %s101, %s102
    %p104 = scmp.eq.s32.totalorder %s103, 0
    %s106 = sadd.s32 %s105, 1
    %s107 = scalar_select %p104, %s105, %s106
    %p110 = pneg %p104
    %p111 = scmp.eq.s32.totalorder %s11, 3
    %p112 = por %p110, %p111
    %p113 = scmp.ne.s32.totalorder %s105, %s108
    %p114 = scmp.eq.s32.totalorder %s11, 0
    %p115 = por %p113, %p114
    %p116 = scmp.ne.s32.totalorder %s105, %s108
    %p117 = scmp.eq.s32.totalorder %s16, 3
    %p118 = por %p116, %p117
    %p119 = scmp.ne.s32.totalorder %s108, %s109
    %p120 = scmp.eq.s32.totalorder %s16, 0
    %p121 = por %p119, %p120
    %p122 = scmp.ne.s32.totalorder %s108, %s109
    %p123 = scmp.eq.s32.totalorder %s17, 3
    %p124 = por %p122, %p123
    %p126 = scmp.ne.s32.totalorder %s109, %s125
    %p127 = scmp.eq.s32.totalorder %s17, 0
    %p128 = por %p126, %p127
    %s129 = ssub.s32 %s18, %s30
    %s130 = ssub.s32 %s19, %s26
    %s131 = sor.u32 %s129, %s130
    %p132 = scmp.eq.s32.totalorder %s131, 0
    %s134 = sadd.s32 %s133, 1
    %s135 = scalar_select %p132, %s133, %s134
    %p138 = pneg %p132
    %p139 = scmp.eq.s32.totalorder %s11, 3
    %p140 = por %p138, %p139
    %p141 = scmp.ne.s32.totalorder %s133, %s136
    %p142 = scmp.eq.s32.totalorder %s11, 0
    %p143 = por %p141, %p142
    %p144 = scmp.ne.s32.totalorder %s133, %s136
    %p145 = scmp.eq.s32.totalorder %s16, 3
    %p146 = por %p144, %p145
    %p147 = scmp.ne.s32.totalorder %s136, %s137
    %p148 = scmp.eq.s32.totalorder %s16, 0
    %p149 = por %p147, %p148
    %p150 = scmp.ne.s32.totalorder %s136, %s137
    %p151 = scmp.eq.s32.totalorder %s17, 3
    %p152 = por %p150, %p151
    %p154 = scmp.ne.s32.totalorder %s137, %s153
    %p155 = scmp.eq.s32.totalorder %s17, 0
    %p156 = por %p154, %p155
    %p157 = scmp.le.s32.totalorder 1, %s11
    %p158 = scmp.lt.s32.totalorder %s11, 5
    %p159 = pnand %p157, %p158
    %p160 = pneg %p159
    // Predicated region
    $region9: #{psp_upsample.2} parent=5 // pred_check
      _
    $region10: #{psp_upsample.2} parent=5 // pred_check_branch
      %162 = sbr.rel (%p159) target = $region12
    $region11: #{psp_upsample.2} parent=5 // pred_region
      %s163 = ssub.s32 %s11, 1
      // Predicated region
      $region13: #{psp_upsample.2} parent=11 // pred_check
        %p164 = pneg %p72
      $region14: #{psp_upsample.2} parent=11 // pred_check_branch
        %166 = sbr.rel (%p164) target = $region16
      $region15: #{psp_upsample.2} parent=11 // pred_region
        _
      $region16: #{psp_upsample.2} parent=11 // pred_fallthru
        _
      // Predicated region
      $region17: #{psp_upsample.2} parent=11 // pred_check
        %p167 = pneg %p93
      $region18: #{psp_upsample.2} parent=11 // pred_check_branch
        %169 = sbr.rel (%p167) target = $region20
      $region19: #{psp_upsample.2} parent=11 // pred_region
        _
      $region20: #{psp_upsample.2} parent=11 // pred_fallthru
        _
    $region12: #{psp_upsample.2} parent=5 // pred_fallthru
      _
    %p170 = scmp.lt.s32.totalorder %s11, 4
    // Predicated region
    $region21: #{psp_upsample.2} parent=5 // pred_check
      %p171 = pneg %p170
    $region22: #{psp_upsample.2} parent=5 // pred_check_branch
      %173 = sbr.rel (%p171) target = $region24
    $region23: #{psp_upsample.2} parent=5 // pred_region
      // Predicated region
      $region25: #{psp_upsample.2} parent=23 // pred_check
        %p174 = pneg %p45
      $region26: #{psp_upsample.2} parent=23 // pred_check_branch
        %176 = sbr.rel (%p174) target = $region28
      $region27: #{psp_upsample.2} parent=23 // pred_region
        %p177 = scmp.lt.s32.totalorder %s18, 1
        %s178 = scalar_select %p177, %s18, 1
        %p179 = scmp.lt.s32.totalorder %s19, 1
        %s180 = scalar_select %p179, %s19, 1
        %s181 = smul.addr %s180, 30
        %s182 = smul.addr %s178, 60
        %s183 = sadd.s32 %s181, %s182
        %s184 = smul.addr %s183, 8
        %s185 = scalar_lea.vmem %s0, %s184
      $region28: #{psp_upsample.2} parent=23 // pred_fallthru
        _
    $region24: #{psp_upsample.2} parent=5 // pred_fallthru
      _
    %p186 = scmp.le.s32.totalorder 1, %s11
    %p187 = scmp.lt.s32.totalorder %s11, 5
    %p188 = pnand %p186, %p187
    %p189 = pneg %p188
    // Predicated region
    $region29: #{psp_upsample.2} parent=5 // pred_check
      _
    $region30: #{psp_upsample.2} parent=5 // pred_check_branch
      %191 = sbr.rel (%p188) target = $region32
    $region31: #{psp_upsample.2} parent=5 // pred_region
      %s192 = ssub.s32 %s11, 1
      %p193 = scmp.lt.s32.totalorder %s20, 1
      %s194 = scalar_select %p193, %s20, 1
      %p195 = scmp.lt.s32.totalorder %s21, 1
      %s196 = scalar_select %p195, %s21, 1
      %s197 = smul.addr %s196, 30
      %s198 = smul.addr %s194, 60
      %s199 = sadd.s32 %s197, %s198
      %s200 = smul.addr %s199, 8
      %s201 = scalar_lea.vmem %s0, %s200
      %p202 = pneg %p51
      %p203 = pneg %p48
      %p204 = pneg %p72
      %p205 = pneg %p69
      %p206 = pneg %p93
      %p207 = pneg %p90
      %p208 = pneg %p121
      %p209 = pneg %p118
      %s210 = smul.u32 8, %s21
      %p211 = scmp.lt.s32.totalorder %s20, 1
      %s212 = scalar_select %p211, %s20, 1
      %p213 = scmp.lt.s32.totalorder %s210, 15
      %s214 = scalar_select %p213, %s210, 15
      %s215 = smul.addr %s214, 2
      %s216 = smul.addr %s212, 32
      %s217 = sadd.s32 %s215, %s216
      %s218 = smul.addr %s217, 4
      %s219 = scalar_lea.vmem %s3, %s218
      %p220 = pneg %p149
      %p221 = pneg %p146
      %p222 = scmp.lt.s32.totalorder %s20, 1
      %s223 = scalar_select %p222, %s20, 1
      %p224 = scmp.lt.s32.totalorder %s21, 1
      %s225 = scalar_select %p224, %s21, 1
      %s226 = smul.addr %s223, 2
      %s227 = sadd.s32 %s225, %s226
      %s228 = smul.addr %s227, 2
      %s229 = scalar_lea.vmem %s4, %s228
      %p230 = scmp.lt.s32.totalorder %s20, 1
      %s231 = scalar_select %p230, %s20, 1
      %p232 = scmp.lt.s32.totalorder %s21, 1
      %s233 = scalar_select %p232, %s21, 1
      %s234 = smul.addr %s233, 30
      %s235 = smul.addr %s231, 60
      %s236 = sadd.s32 %s234, %s235
      %s237 = smul.addr %s236, 8
      %s238 = scalar_lea.vmem %s0, %s237
      %s239 = smul.u32 8, %s21
      %p240 = scmp.lt.s32.totalorder %s20, 1
      %s241 = scalar_select %p240, %s20, 1
      %p242 = scmp.lt.s32.totalorder %s239, 15
      %s243 = scalar_select %p242, %s239, 15
      %s244 = smul.addr %s243, 2
      %s245 = smul.addr %s241, 32
      %s246 = sadd.s32 %s244, %s245
      %s247 = smul.addr %s246, 4
      %s248 = scalar_lea.vmem %s3, %s247
      %s249 = smul.u32 8, %s21
      %p250 = scmp.lt.s32.totalorder %s20, 1
      %s251 = scalar_select %p250, %s20, 1
      %p252 = scmp.lt.s32.totalorder %s21, 1
      %s253 = scalar_select %p252, %s21, 1
      %s254 = smul.addr %s251, 2
      %s255 = sadd.s32 %s253, %s254
      %s256 = smul.addr %s255, 2
      %s257 = scalar_lea.vmem %s4, %s256
      %v259 = vld [vmem:[%s238] sm:$0xff]
      %v260 = vld [vmem:[%s238 + $0x8] sm:$0xff]
      %v261 = vld [vmem:[%s238 + $0x10] sm:$0x3]
      %v262 = vld [vmem:[%s238 + $0x18] sm:$0xff]
      %v263 = vld [vmem:[%s238 + $0x20] sm:$0xff]
      %v264 = vld [vmem:[%s238 + $0x28] sm:$0x3]
      %v265 = vld [vmem:[%s238 + $0x30] sm:$0xff]
      %v266 = vld [vmem:[%s238 + $0x38] sm:$0xff]
      %v267 = vld [vmem:[%s238 + $0x40] sm:$0x3]
      %v268 = vld [vmem:[%s238 + $0x48] sm:$0xff]
      %v269 = vld [vmem:[%s238 + $0x50] sm:$0xff]
      %v270 = vld [vmem:[%s238 + $0x58] sm:$0x3]
      %v271 = vld [vmem:[%s238 + $0x60] sm:$0xff]
      %v272 = vld [vmem:[%s238 + $0x68] sm:$0xff]
      %v273 = vld [vmem:[%s238 + $0x70] sm:$0x3]
      %v274 = vld [vmem:[%s238 + $0x78] sm:$0xff]
      %v275 = vld [vmem:[%s238 + $0x80] sm:$0xff]
      %v276 = vld [vmem:[%s238 + $0x88] sm:$0x3]
      %v277 = vld [vmem:[%s238 + $0x90] sm:$0xff]
      %v278 = vld [vmem:[%s238 + $0x98] sm:$0xff]
      %v279 = vld [vmem:[%s238 + $0xa0] sm:$0x3]
      %v280 = vld [vmem:[%s238 + $0xa8] sm:$0xff]
      %v281 = vld [vmem:[%s238 + $0xb0] sm:$0xff]
      %v282 = vld [vmem:[%s238 + $0xb8] sm:$0x3]
      %v283 = vld [vmem:[%s238 + $0xc0] sm:$0xff]
      %v284 = vld [vmem:[%s238 + $0xc8] sm:$0xff]
      %v285 = vld [vmem:[%s238 + $0xd0] sm:$0x3]
      %v286 = vld [vmem:[%s238 + $0xd8] sm:$0xff]
      %v287 = vld [vmem:[%s238 + $0xe0] sm:$0xff]
      %v288 = vld [vmem:[%s238 + $0xe8] sm:$0x3]
      %v289 = vmul.f32 %v259, 0.75
      %v290 = vmul.f32 %v260, 0.75
      %v291 = vmul.f32 %v261, 0.75
      %v292 = vmul.f32 %v262, 0.75
      %v293 = vmul.f32 %v263, 0.75
      %v294 = vmul.f32 %v264, 0.75
      %v295 = vmul.f32 %v265, 0.75
      %v296 = vmul.f32 %v266, 0.75
      %v297 = vmul.f32 %v267, 0.75
      %v298 = vmul.f32 %v268, 0.75
      %v299 = vmul.f32 %v269, 0.75
      %v300 = vmul.f32 %v270, 0.75
      %v301 = vmul.f32 %v271, 0.75
      %v302 = vmul.f32 %v272, 0.75
      %v303 = vmul.f32 %v273, 0.75
      %v304 = vmul.f32 %v274, 0.75
      %v305 = vmul.f32 %v275, 0.75
      %v306 = vmul.f32 %v276, 0.75
      %v307 = vmul.f32 %v277, 0.75
      %v308 = vmul.f32 %v278, 0.75
      %v309 = vmul.f32 %v279, 0.75
      %v310 = vmul.f32 %v280, 0.75
      %v311 = vmul.f32 %v281, 0.75
      %v312 = vmul.f32 %v282, 0.75
      %v313 = vmul.f32 %v283, 0.75
      %v314 = vmul.f32 %v284, 0.75
      %v315 = vmul.f32 %v285, 0.75
      %v316 = vmul.f32 %v262, 0.25
      %v317 = vmul.f32 %v263, 0.25
      %v318 = vmul.f32 %v264, 0.25
      %v319 = vmul.f32 %v265, 0.25
      %v320 = vmul.f32 %v266, 0.25
      %v321 = vmul.f32 %v267, 0.25
      %v322 = vmul.f32 %v268, 0.25
      %v323 = vmul.f32 %v269, 0.25
      %v324 = vmul.f32 %v270, 0.25
      %v325 = vmul.f32 %v271, 0.25
      %v326 = vmul.f32 %v272, 0.25
      %v327 = vmul.f32 %v273, 0.25
      %v328 = vmul.f32 %v274, 0.25
      %v329 = vmul.f32 %v275, 0.25
      %v330 = vmul.f32 %v276, 0.25
      %v331 = vmul.f32 %v277, 0.25
      %v332 = vmul.f32 %v278, 0.25
      %v333 = vmul.f32 %v279, 0.25
      %v334 = vmul.f32 %v280, 0.25
      %v335 = vmul.f32 %v281, 0.25
      %v336 = vmul.f32 %v282, 0.25
      %v337 = vmul.f32 %v283, 0.25
      %v338 = vmul.f32 %v284, 0.25
      %v339 = vmul.f32 %v285, 0.25
      %v340 = vmul.f32 %v286, 0.25
      %v341 = vmul.f32 %v287, 0.25
      %v342 = vmul.f32 %v288, 0.25
      %v343 = vadd.f32 %v289, %v316
      %v344 = vadd.f32 %v290, %v317
      %v345 = vadd.f32 %v291, %v318
      %v346 = vadd.f32 %v292, %v319
      %v347 = vadd.f32 %v293, %v320
      %v348 = vadd.f32 %v294, %v321
      %v349 = vadd.f32 %v295, %v322
      %v350 = vadd.f32 %v296, %v323
      %v351 = vadd.f32 %v297, %v324
      %v352 = vadd.f32 %v298, %v325
      %v353 = vadd.f32 %v299, %v326
      %v354 = vadd.f32 %v300, %v327
      %v355 = vadd.f32 %v301, %v328
      %v356 = vadd.f32 %v302, %v329
      %v357 = vadd.f32 %v303, %v330
      %v358 = vadd.f32 %v304, %v331
      %v359 = vadd.f32 %v305, %v332
      %v360 = vadd.f32 %v306, %v333
      %v361 = vadd.f32 %v307, %v334
      %v362 = vadd.f32 %v308, %v335
      %v363 = vadd.f32 %v309, %v336
      %v364 = vadd.f32 %v310, %v337
      %v365 = vadd.f32 %v311, %v338
      %v366 = vadd.f32 %v312, %v339
      %v367 = vadd.f32 %v313, %v340
      %v368 = vadd.f32 %v314, %v341
      %v369 = vadd.f32 %v315, %v342
      %v370 = vmul.f32 %v259, 0.25
      %v371 = vmul.f32 %v260, 0.25
      %v372 = vmul.f32 %v261, 0.25
      %v373 = vmul.f32 %v286, 0.75
      %v374 = vmul.f32 %v287, 0.75
      %v375 = vmul.f32 %v288, 0.75
      %v376 = vadd.f32 %v370, %v292
      %v377 = vadd.f32 %v371, %v293
      %v378 = vadd.f32 %v372, %v294
      %v379 = vadd.f32 %v316, %v295
      %v380 = vadd.f32 %v317, %v296
      %v381 = vadd.f32 %v318, %v297
      %v382 = vadd.f32 %v319, %v298
      %v383 = vadd.f32 %v320, %v299
      %v384 = vadd.f32 %v321, %v300
      %v385 = vadd.f32 %v322, %v301
      %v386 = vadd.f32 %v323, %v302
      %v387 = vadd.f32 %v324, %v303
      %v388 = vadd.f32 %v325, %v304
      %v389 = vadd.f32 %v326, %v305
      %v390 = vadd.f32 %v327, %v306
      %v391 = vadd.f32 %v328, %v307
      %v392 = vadd.f32 %v329, %v308
      %v393 = vadd.f32 %v330, %v309
      %v394 = vadd.f32 %v331, %v310
      %v395 = vadd.f32 %v332, %v311
      %v396 = vadd.f32 %v333, %v312
      %v397 = vadd.f32 %v334, %v313
      %v398 = vadd.f32 %v335, %v314
      %v399 = vadd.f32 %v336, %v315
      %v400 = vadd.f32 %v337, %v373
      %v401 = vadd.f32 %v338, %v374
      %v402 = vadd.f32 %v339, %v375
      %p403 = scmp.eq.s32.totalorder %s21, 0
      %s404 = scalar_select %p403, 1, 0
      %v405 = vstv %s404
      %vm406 = vcmp.eq.s32.totalorder %v405, 1
      %v407 = vsel %vm406, 1, 0
      %vm408 = vcmp.eq.s32.totalorder %v407, 1
      %v409 = vsel %vm408, 0.0, %v343
      %v410 = vsel %vm408, 0.0, %v344
      %v411 = vsel %vm408, 0.0, %v345
      %v412 = vsel 0, 0.0, %v346
      %v413 = vsel 0, 0.0, %v347
      %v414 = vsel 0, 0.0, %v348
      %v415 = vsel 0, 0.0, %v349
      %v416 = vsel 0, 0.0, %v350
      %v417 = vsel 0, 0.0, %v351
      %v418 = vsel 0, 0.0, %v352
      %v419 = vsel 0, 0.0, %v353
      %v420 = vsel 0, 0.0, %v354
      %v421 = vsel 0, 0.0, %v355
      %v422 = vsel 0, 0.0, %v356
      %v423 = vsel 0, 0.0, %v357
      %v424 = vsel 0, 0.0, %v358
      %v425 = vsel 0, 0.0, %v359
      %v426 = vsel 0, 0.0, %v360
      %v427 = vsel 0, 0.0, %v361
      %v428 = vsel 0, 0.0, %v362
      %v429 = vsel 0, 0.0, %v363
      %v430 = vsel 0, 0.0, %v364
      %v431 = vsel 0, 0.0, %v365
      %v432 = vsel 0, 0.0, %v366
      %v433 = vsel 0, 0.0, %v367
      %v434 = vsel 0, 0.0, %v368
      %v435 = vsel 0, 0.0, %v369
      %p436 = scmp.eq.s32.totalorder %s21, 1
      %s437 = scalar_select %p436, 1, 0
      %v438 = vstv %s437
      %vm439 = vcmp.eq.s32.totalorder %v438, 1
      %v440 = vsel %vm439, 1, 0
      %vm441 = vcmp.eq.s32.totalorder %v440, 1
      %v442 = vsel 0, 0.0, %v376
      %v443 = vsel 0, 0.0, %v377
      %v444 = vsel 0, 0.0, %v378
      %v445 = vsel 0, 0.0, %v379
      %v446 = vsel 0, 0.0, %v380
      %v447 = vsel 0, 0.0, %v381
      %v448 = vsel 0, 0.0, %v382
      %v449 = vsel 0, 0.0, %v383
      %v450 = vsel 0, 0.0, %v384
      %v451 = vsel 0, 0.0, %v385
      %v452 = vsel 0, 0.0, %v386
      %v453 = vsel 0, 0.0, %v387
      %v454 = vsel 0, 0.0, %v388
      %v455 = vsel 0, 0.0, %v389
      %v456 = vsel 0, 0.0, %v390
      %v457 = vsel 0, 0.0, %v391
      %v458 = vsel 0, 0.0, %v392
      %v459 = vsel 0, 0.0, %v393
      %v460 = vsel 0, 0.0, %v394
      %v461 = vsel 0, 0.0, %v395
      %v462 = vsel 0, 0.0, %v396
      %v463 = vsel 0, 0.0, %v397
      %v464 = vsel 0, 0.0, %v398
      %v465 = vsel 0, 0.0, %v399
      %v466 = vsel %vm441, 0.0, %v400
      %v467 = vsel %vm441, 0.0, %v401
      %v468 = vsel %vm441, 0.0, %v402
      %v469 = vlaneseq
      %v470 = vshrl.u32 %v469, 7
      %v471 = vadd.s32 %v470, 8
      %v472 = vadd.s32 %v470, 16
      %v473 = vmul.f32 %v409, 0.75
      %v474 = vmul.f32 %v410, 0.75
      %v475 = vmul.f32 %v411, 0.75
      %v476 = vmul.f32 %v412, 0.75
      %v477 = vmul.f32 %v413, 0.75
      %v478 = vmul.f32 %v414, 0.75
      %v479 = vmul.f32 %v415, 0.75
      %v480 = vmul.f32 %v416, 0.75
      %v481 = vmul.f32 %v417, 0.75
      %v482 = vmul.f32 %v418, 0.75
      %v483 = vmul.f32 %v419, 0.75
      %v484 = vmul.f32 %v420, 0.75
      %v485 = vmul.f32 %v421, 0.75
      %v486 = vmul.f32 %v422, 0.75
      %v487 = vmul.f32 %v423, 0.75
      %v488 = vmul.f32 %v424, 0.75
      %v489 = vmul.f32 %v425, 0.75
      %v490 = vmul.f32 %v426, 0.75
      %v491 = vmul.f32 %v427, 0.75
      %v492 = vmul.f32 %v428, 0.75
      %v493 = vmul.f32 %v429, 0.75
      %v494 = vmul.f32 %v430, 0.75
      %v495 = vmul.f32 %v431, 0.75
      %v496 = vmul.f32 %v432, 0.75
      %v497 = vmul.f32 %v433, 0.75
      %v498 = vmul.f32 %v434, 0.75
      %v499 = vmul.f32 %v435, 0.75
      %v500 = vmul.f32 %v409, 0.25
      %v501 = vmul.f32 %v410, 0.25
      %v502 = vmul.f32 %v411, 0.25
      %v503 = vmul.f32 %v412, 0.25
      %v504 = vmul.f32 %v413, 0.25
      %v505 = vmul.f32 %v414, 0.25
      %v506 = vmul.f32 %v415, 0.25
      %v507 = vmul.f32 %v416, 0.25
      %v508 = vmul.f32 %v417, 0.25
      %v509 = vmul.f32 %v418, 0.25
      %v510 = vmul.f32 %v419, 0.25
      %v511 = vmul.f32 %v420, 0.25
      %v512 = vmul.f32 %v421, 0.25
      %v513 = vmul.f32 %v422, 0.25
      %v514 = vmul.f32 %v423, 0.25
      %v515 = vmul.f32 %v424, 0.25
      %v516 = vmul.f32 %v425, 0.25
      %v517 = vmul.f32 %v426, 0.25
      %v518 = vmul.f32 %v427, 0.25
      %v519 = vmul.f32 %v428, 0.25
      %v520 = vmul.f32 %v429, 0.25
      %v521 = vmul.f32 %v430, 0.25
      %v522 = vmul.f32 %v431, 0.25
      %v523 = vmul.f32 %v432, 0.25
      %v524 = vmul.f32 %v433, 0.25
      %v525 = vmul.f32 %v434, 0.25
      %v526 = vmul.f32 %v435, 0.25
      %vm554 = vcmask 1046528
      %v555 = vrot.slane %v500, 1
      %v556 = vrot.slane %v501, 1
      %v557 = vsel %vm554, %v555, %v556
      %v558 = vrot.slane %v502, 1
      %v559 = vsel %vm554, %v556, %v558
      %v560 = vrot.slane %v503, 1
      %v561 = vrot.slane %v504, 1
      %v562 = vsel %vm554, %v560, %v561
      %v563 = vrot.slane %v505, 1
      %v564 = vsel %vm554, %v561, %v563
      %v565 = vrot.slane %v506, 1
      %v566 = vrot.slane %v507, 1
      %v567 = vsel %vm554, %v565, %v566
      %v568 = vrot.slane %v508, 1
      %v569 = vsel %vm554, %v566, %v568
      %v570 = vrot.slane %v509, 1
      %v571 = vrot.slane %v510, 1
      %v572 = vsel %vm554, %v570, %v571
      %v573 = vrot.slane %v511, 1
      %v574 = vsel %vm554, %v571, %v573
      %v575 = vrot.slane %v512, 1
      %v576 = vrot.slane %v513, 1
      %v577 = vsel %vm554, %v575, %v576
      %v578 = vrot.slane %v514, 1
      %v579 = vsel %vm554, %v576, %v578
      %v580 = vrot.slane %v515, 1
      %v581 = vrot.slane %v516, 1
      %v582 = vsel %vm554, %v580, %v581
      %v583 = vrot.slane %v517, 1
      %v584 = vsel %vm554, %v581, %v583
      %v585 = vrot.slane %v518, 1
      %v586 = vrot.slane %v519, 1
      %v587 = vsel %vm554, %v585, %v586
      %v588 = vrot.slane %v520, 1
      %v589 = vsel %vm554, %v586, %v588
      %v590 = vrot.slane %v521, 1
      %v591 = vrot.slane %v522, 1
      %v592 = vsel %vm554, %v590, %v591
      %v593 = vrot.slane %v523, 1
      %v594 = vsel %vm554, %v591, %v593
      %v595 = vrot.slane %v524, 1
      %v596 = vrot.slane %v525, 1
      %v597 = vsel %vm554, %v595, %v596
      %v598 = vrot.slane %v526, 1
      %v599 = vsel %vm554, %v596, %v598
      %v627 = vadd.f32 %v473, %v557
      %v628 = vadd.f32 %v474, %v559
      %v629 = vadd.f32 %v475, %v558
      %v630 = vadd.f32 %v476, %v562
      %v631 = vadd.f32 %v477, %v564
      %v632 = vadd.f32 %v478, %v563
      %v633 = vadd.f32 %v479, %v567
      %v634 = vadd.f32 %v480, %v569
      %v635 = vadd.f32 %v481, %v568
      %v636 = vadd.f32 %v482, %v572
      %v637 = vadd.f32 %v483, %v574
      %v638 = vadd.f32 %v484, %v573
      %v639 = vadd.f32 %v485, %v577
      %v640 = vadd.f32 %v486, %v579
      %v641 = vadd.f32 %v487, %v578
      %v642 = vadd.f32 %v488, %v582
      %v643 = vadd.f32 %v489, %v584
      %v644 = vadd.f32 %v490, %v583
      %v645 = vadd.f32 %v491, %v587
      %v646 = vadd.f32 %v492, %v589
      %v647 = vadd.f32 %v493, %v588
      %v648 = vadd.f32 %v494, %v592
      %v649 = vadd.f32 %v495, %v594
      %v650 = vadd.f32 %v496, %v593
      %v651 = vadd.f32 %v497, %v597
      %v652 = vadd.f32 %v498, %v599
      %v653 = vadd.f32 %v499, %v598
      %v681 = vrot.slane %v473, 1
      %v682 = vrot.slane %v474, 1
      %v683 = vsel %vm554, %v681, %v682
      %v684 = vrot.slane %v475, 1
      %v685 = vsel %vm554, %v682, %v684
      %v686 = vrot.slane %v476, 1
      %v687 = vrot.slane %v477, 1
      %v688 = vsel %vm554, %v686, %v687
      %v689 = vrot.slane %v478, 1
      %v690 = vsel %vm554, %v687, %v689
      %v691 = vrot.slane %v479, 1
      %v692 = vrot.slane %v480, 1
      %v693 = vsel %vm554, %v691, %v692
      %v694 = vrot.slane %v481, 1
      %v695 = vsel %vm554, %v692, %v694
      %v696 = vrot.slane %v482, 1
      %v697 = vrot.slane %v483, 1
      %v698 = vsel %vm554, %v696, %v697
      %v699 = vrot.slane %v484, 1
      %v700 = vsel %vm554, %v697, %v699
      %v701 = vrot.slane %v485, 1
      %v702 = vrot.slane %v486, 1
      %v703 = vsel %vm554, %v701, %v702
      %v704 = vrot.slane %v487, 1
      %v705 = vsel %vm554, %v702, %v704
      %v706 = vrot.slane %v488, 1
      %v707 = vrot.slane %v489, 1
      %v708 = vsel %vm554, %v706, %v707
      %v709 = vrot.slane %v490, 1
      %v710 = vsel %vm554, %v707, %v709
      %v711 = vrot.slane %v491, 1
      %v712 = vrot.slane %v492, 1
      %v713 = vsel %vm554, %v711, %v712
      %v714 = vrot.slane %v493, 1
      %v715 = vsel %vm554, %v712, %v714
      %v716 = vrot.slane %v494, 1
      %v717 = vrot.slane %v495, 1
      %v718 = vsel %vm554, %v716, %v717
      %v719 = vrot.slane %v496, 1
      %v720 = vsel %vm554, %v717, %v719
      %v721 = vrot.slane %v497, 1
      %v722 = vrot.slane %v498, 1
      %v723 = vsel %vm554, %v721, %v722
      %v724 = vrot.slane %v499, 1
      %v725 = vsel %vm554, %v722, %v724
      %v753 = vadd.f32 %v500, %v683
      %v754 = vadd.f32 %v501, %v685
      %v755 = vadd.f32 %v502, %v684
      %v756 = vadd.f32 %v503, %v688
      %v757 = vadd.f32 %v504, %v690
      %v758 = vadd.f32 %v505, %v689
      %v759 = vadd.f32 %v506, %v693
      %v760 = vadd.f32 %v507, %v695
      %v761 = vadd.f32 %v508, %v694
      %v762 = vadd.f32 %v509, %v698
      %v763 = vadd.f32 %v510, %v700
      %v764 = vadd.f32 %v511, %v699
      %v765 = vadd.f32 %v512, %v703
      %v766 = vadd.f32 %v513, %v705
      %v767 = vadd.f32 %v514, %v704
      %v768 = vadd.f32 %v515, %v708
      %v769 = vadd.f32 %v516, %v710
      %v770 = vadd.f32 %v517, %v709
      %v771 = vadd.f32 %v518, %v713
      %v772 = vadd.f32 %v519, %v715
      %v773 = vadd.f32 %v520, %v714
      %v774 = vadd.f32 %v521, %v718
      %v775 = vadd.f32 %v522, %v720
      %v776 = vadd.f32 %v523, %v719
      %v777 = vadd.f32 %v524, %v723
      %v778 = vadd.f32 %v525, %v725
      %v779 = vadd.f32 %v526, %v724
      %vm780 = vcmp.eq.s32.totalorder %v470, 0
      %vm781 = vcmp.eq.s32.totalorder %v471, 0
      %vm782 = vcmp.eq.s32.totalorder %v472, 0
      %v783 = vsel %vm780, 1, 0
      %v784 = vsel %vm781, 1, 0
      %v785 = vsel %vm782, 1, 0
      %vm786 = vcmp.eq.s32.totalorder %v783, 1
      %vm787 = vcmp.eq.s32.totalorder %v784, 1
      %vm788 = vcmp.eq.s32.totalorder %v785, 1
      %v789 = vsel %vm786, 0.0, %v627
      %v790 = vsel %vm787, 0.0, %v628
      %v791 = vsel %vm788, 0.0, %v629
      %v792 = vsel %vm786, 0.0, %v630
      %v793 = vsel %vm787, 0.0, %v631
      %v794 = vsel %vm788, 0.0, %v632
      %v795 = vsel %vm786, 0.0, %v633
      %v796 = vsel %vm787, 0.0, %v634
      %v797 = vsel %vm788, 0.0, %v635
      %v798 = vsel %vm786, 0.0, %v636
      %v799 = vsel %vm787, 0.0, %v637
      %v800 = vsel %vm788, 0.0, %v638
      %v801 = vsel %vm786, 0.0, %v639
      %v802 = vsel %vm787, 0.0, %v640
      %v803 = vsel %vm788, 0.0, %v641
      %v804 = vsel %vm786, 0.0, %v642
      %v805 = vsel %vm787, 0.0, %v643
      %v806 = vsel %vm788, 0.0, %v644
      %v807 = vsel %vm786, 0.0, %v645
      %v808 = vsel %vm787, 0.0, %v646
      %v809 = vsel %vm788, 0.0, %v647
      %v810 = vsel %vm786, 0.0, %v648
      %v811 = vsel %vm787, 0.0, %v649
      %v812 = vsel %vm788, 0.0, %v650
      %v813 = vsel %vm786, 0.0, %v651
      %v814 = vsel %vm787, 0.0, %v652
      %v815 = vsel %vm788, 0.0, %v653
      %vm816 = vcmp.eq.s32.totalorder %v470, 16
      %vm817 = vcmp.eq.s32.totalorder %v471, 16
      %vm818 = vcmp.eq.s32.totalorder %v472, 16
      %v819 = vsel %vm816, 1, 0
      %v820 = vsel %vm817, 1, 0
      %v821 = vsel %vm818, 1, 0
      %vm822 = vcmp.eq.s32.totalorder %v819, 1
      %vm823 = vcmp.eq.s32.totalorder %v820, 1
      %vm824 = vcmp.eq.s32.totalorder %v821, 1
      %v825 = vsel %vm822, 0.0, %v753
      %v826 = vsel %vm823, 0.0, %v754
      %v827 = vsel %vm824, 0.0, %v755
      %v828 = vsel %vm822, 0.0, %v756
      %v829 = vsel %vm823, 0.0, %v757
      %v830 = vsel %vm824, 0.0, %v758
      %v831 = vsel %vm822, 0.0, %v759
      %v832 = vsel %vm823, 0.0, %v760
      %v833 = vsel %vm824, 0.0, %v761
      %v834 = vsel %vm822, 0.0, %v762
      %v835 = vsel %vm823, 0.0, %v763
      %v836 = vsel %vm824, 0.0, %v764
      %v837 = vsel %vm822, 0.0, %v765
      %v838 = vsel %vm823, 0.0, %v766
      %v839 = vsel %vm824, 0.0, %v767
      %v840 = vsel %vm822, 0.0, %v768
      %v841 = vsel %vm823, 0.0, %v769
      %v842 = vsel %vm824, 0.0, %v770
      %v843 = vsel %vm822, 0.0, %v771
      %v844 = vsel %vm823, 0.0, %v772
      %v845 = vsel %vm824, 0.0, %v773
      %v846 = vsel %vm822, 0.0, %v774
      %v847 = vsel %vm823, 0.0, %v775
      %v848 = vsel %vm824, 0.0, %v776
      %v849 = vsel %vm822, 0.0, %v777
      %v850 = vsel %vm823, 0.0, %v778
      %v851 = vsel %vm824, 0.0, %v779
      %v852 = vpack.c.bf16 %v790, %v789
      %v853 = vpack.c.bf16 %v791, %v791
      %v854 = vpack.c.bf16 %v793, %v792
      %v855 = vpack.c.bf16 %v794, %v794
      %v856 = vpack.c.bf16 %v796, %v795
      %v857 = vpack.c.bf16 %v797, %v797
      %v858 = vpack.c.bf16 %v799, %v798
      %v859 = vpack.c.bf16 %v800, %v800
      %v860 = vpack.c.bf16 %v802, %v801
      %v861 = vpack.c.bf16 %v803, %v803
      %v862 = vpack.c.bf16 %v805, %v804
      %v863 = vpack.c.bf16 %v806, %v806
      %v864 = vpack.c.bf16 %v808, %v807
      %v865 = vpack.c.bf16 %v809, %v809
      %v866 = vpack.c.bf16 %v811, %v810
      %v867 = vpack.c.bf16 %v812, %v812
      %v868 = vpack.c.bf16 %v814, %v813
      %v869 = vpack.c.bf16 %v815, %v815
      %v870 = vpack.c.bf16 %v826, %v825
      %v871 = vpack.c.bf16 %v827, %v827
      %v872 = vpack.c.bf16 %v829, %v828
      %v873 = vpack.c.bf16 %v830, %v830
      %v874 = vpack.c.bf16 %v832, %v831
      %v875 = vpack.c.bf16 %v833, %v833
      %v876 = vpack.c.bf16 %v835, %v834
      %v877 = vpack.c.bf16 %v836, %v836
      %v878 = vpack.c.bf16 %v838, %v837
      %v879 = vpack.c.bf16 %v839, %v839
      %v880 = vpack.c.bf16 %v841, %v840
      %v881 = vpack.c.bf16 %v842, %v842
      %v882 = vpack.c.bf16 %v844, %v843
      %v883 = vpack.c.bf16 %v845, %v845
      %v884 = vpack.c.bf16 %v847, %v846
      %v885 = vpack.c.bf16 %v848, %v848
      %v886 = vpack.c.bf16 %v850, %v849
      %v887 = vpack.c.bf16 %v851, %v851
      %v888 = vmul.f32 %v442, 0.75
      %v889 = vmul.f32 %v443, 0.75
      %v890 = vmul.f32 %v444, 0.75
      %v891 = vmul.f32 %v445, 0.75
      %v892 = vmul.f32 %v446, 0.75
      %v893 = vmul.f32 %v447, 0.75
      %v894 = vmul.f32 %v448, 0.75
      %v895 = vmul.f32 %v449, 0.75
      %v896 = vmul.f32 %v450, 0.75
      %v897 = vmul.f32 %v451, 0.75
      %v898 = vmul.f32 %v452, 0.75
      %v899 = vmul.f32 %v453, 0.75
      %v900 = vmul.f32 %v454, 0.75
      %v901 = vmul.f32 %v455, 0.75
      %v902 = vmul.f32 %v456, 0.75
      %v903 = vmul.f32 %v457, 0.75
      %v904 = vmul.f32 %v458, 0.75
      %v905 = vmul.f32 %v459, 0.75
      %v906 = vmul.f32 %v460, 0.75
      %v907 = vmul.f32 %v461, 0.75
      %v908 = vmul.f32 %v462, 0.75
      %v909 = vmul.f32 %v463, 0.75
      %v910 = vmul.f32 %v464, 0.75
      %v911 = vmul.f32 %v465, 0.75
      %v912 = vmul.f32 %v466, 0.75
      %v913 = vmul.f32 %v467, 0.75
      %v914 = vmul.f32 %v468, 0.75
      %v915 = vmul.f32 %v442, 0.25
      %v916 = vmul.f32 %v443, 0.25
      %v917 = vmul.f32 %v444, 0.25
      %v918 = vmul.f32 %v445, 0.25
      %v919 = vmul.f32 %v446, 0.25
      %v920 = vmul.f32 %v447, 0.25
      %v921 = vmul.f32 %v448, 0.25
      %v922 = vmul.f32 %v449, 0.25
      %v923 = vmul.f32 %v450, 0.25
      %v924 = vmul.f32 %v451, 0.25
      %v925 = vmul.f32 %v452, 0.25
      %v926 = vmul.f32 %v453, 0.25
      %v927 = vmul.f32 %v454, 0.25
      %v928 = vmul.f32 %v455, 0.25
      %v929 = vmul.f32 %v456, 0.25
      %v930 = vmul.f32 %v457, 0.25
      %v931 = vmul.f32 %v458, 0.25
      %v932 = vmul.f32 %v459, 0.25
      %v933 = vmul.f32 %v460, 0.25
      %v934 = vmul.f32 %v461, 0.25
      %v935 = vmul.f32 %v462, 0.25
      %v936 = vmul.f32 %v463, 0.25
      %v937 = vmul.f32 %v464, 0.25
      %v938 = vmul.f32 %v465, 0.25
      %v939 = vmul.f32 %v466, 0.25
      %v940 = vmul.f32 %v467, 0.25
      %v941 = vmul.f32 %v468, 0.25
      %v969 = vrot.slane %v915, 1
      %v970 = vrot.slane %v916, 1
      %v971 = vsel %vm554, %v969, %v970
      %v972 = vrot.slane %v917, 1
      %v973 = vsel %vm554, %v970, %v972
      %v974 = vrot.slane %v918, 1
      %v975 = vrot.slane %v919, 1
      %v976 = vsel %vm554, %v974, %v975
      %v977 = vrot.slane %v920, 1
      %v978 = vsel %vm554, %v975, %v977
      %v979 = vrot.slane %v921, 1
      %v980 = vrot.slane %v922, 1
      %v981 = vsel %vm554, %v979, %v980
      %v982 = vrot.slane %v923, 1
      %v983 = vsel %vm554, %v980, %v982
      %v984 = vrot.slane %v924, 1
      %v985 = vrot.slane %v925, 1
      %v986 = vsel %vm554, %v984, %v985
      %v987 = vrot.slane %v926, 1
      %v988 = vsel %vm554, %v985, %v987
      %v989 = vrot.slane %v927, 1
      %v990 = vrot.slane %v928, 1
      %v991 = vsel %vm554, %v989, %v990
      %v992 = vrot.slane %v929, 1
      %v993 = vsel %vm554, %v990, %v992
      %v994 = vrot.slane %v930, 1
      %v995 = vrot.slane %v931, 1
      %v996 = vsel %vm554, %v994, %v995
      %v997 = vrot.slane %v932, 1
      %v998 = vsel %vm554, %v995, %v997
      %v999 = vrot.slane %v933, 1
      %v1000 = vrot.slane %v934, 1
      %v1001 = vsel %vm554, %v999, %v1000
      %v1002 = vrot.slane %v935, 1
      %v1003 = vsel %vm554, %v1000, %v1002
      %v1004 = vrot.slane %v936, 1
      %v1005 = vrot.slane %v937, 1
      %v1006 = vsel %vm554, %v1004, %v1005
      %v1007 = vrot.slane %v938, 1
      %v1008 = vsel %vm554, %v1005, %v1007
      %v1009 = vrot.slane %v939, 1
      %v1010 = vrot.slane %v940, 1
      %v1011 = vsel %vm554, %v1009, %v1010
      %v1012 = vrot.slane %v941, 1
      %v1013 = vsel %vm554, %v1010, %v1012
      %v1041 = vadd.f32 %v888, %v971
      %v1042 = vadd.f32 %v889, %v973
      %v1043 = vadd.f32 %v890, %v972
      %v1044 = vadd.f32 %v891, %v976
      %v1045 = vadd.f32 %v892, %v978
      %v1046 = vadd.f32 %v893, %v977
      %v1047 = vadd.f32 %v894, %v981
      %v1048 = vadd.f32 %v895, %v983
      %v1049 = vadd.f32 %v896, %v982
      %v1050 = vadd.f32 %v897, %v986
      %v1051 = vadd.f32 %v898, %v988
      %v1052 = vadd.f32 %v899, %v987
      %v1053 = vadd.f32 %v900, %v991
      %v1054 = vadd.f32 %v901, %v993
      %v1055 = vadd.f32 %v902, %v992
      %v1056 = vadd.f32 %v903, %v996
      %v1057 = vadd.f32 %v904, %v998
      %v1058 = vadd.f32 %v905, %v997
      %v1059 = vadd.f32 %v906, %v1001
      %v1060 = vadd.f32 %v907, %v1003
      %v1061 = vadd.f32 %v908, %v1002
      %v1062 = vadd.f32 %v909, %v1006
      %v1063 = vadd.f32 %v910, %v1008
      %v1064 = vadd.f32 %v911, %v1007
      %v1065 = vadd.f32 %v912, %v1011
      %v1066 = vadd.f32 %v913, %v1013
      %v1067 = vadd.f32 %v914, %v1012
      %v1095 = vrot.slane %v888, 1
      %v1096 = vrot.slane %v889, 1
      %v1097 = vsel %vm554, %v1095, %v1096
      %v1098 = vrot.slane %v890, 1
      %v1099 = vsel %vm554, %v1096, %v1098
      %v1100 = vrot.slane %v891, 1
      %v1101 = vrot.slane %v892, 1
      %v1102 = vsel %vm554, %v1100, %v1101
      %v1103 = vrot.slane %v893, 1
      %v1104 = vsel %vm554, %v1101, %v1103
      %v1105 = vrot.slane %v894, 1
      %v1106 = vrot.slane %v895, 1
      %v1107 = vsel %vm554, %v1105, %v1106
      %v1108 = vrot.slane %v896, 1
      %v1109 = vsel %vm554, %v1106, %v1108
      %v1110 = vrot.slane %v897, 1
      %v1111 = vrot.slane %v898, 1
      %v1112 = vsel %vm554, %v1110, %v1111
      %v1113 = vrot.slane %v899, 1
      %v1114 = vsel %vm554, %v1111, %v1113
      %v1115 = vrot.slane %v900, 1
      %v1116 = vrot.slane %v901, 1
      %v1117 = vsel %vm554, %v1115, %v1116
      %v1118 = vrot.slane %v902, 1
      %v1119 = vsel %vm554, %v1116, %v1118
      %v1120 = vrot.slane %v903, 1
      %v1121 = vrot.slane %v904, 1
      %v1122 = vsel %vm554, %v1120, %v1121
      %v1123 = vrot.slane %v905, 1
      %v1124 = vsel %vm554, %v1121, %v1123
      %v1125 = vrot.slane %v906, 1
      %v1126 = vrot.slane %v907, 1
      %v1127 = vsel %vm554, %v1125, %v1126
      %v1128 = vrot.slane %v908, 1
      %v1129 = vsel %vm554, %v1126, %v1128
      %v1130 = vrot.slane %v909, 1
      %v1131 = vrot.slane %v910, 1
      %v1132 = vsel %vm554, %v1130, %v1131
      %v1133 = vrot.slane %v911, 1
      %v1134 = vsel %vm554, %v1131, %v1133
      %v1135 = vrot.slane %v912, 1
      %v1136 = vrot.slane %v913, 1
      %v1137 = vsel %vm554, %v1135, %v1136
      %v1138 = vrot.slane %v914, 1
      %v1139 = vsel %vm554, %v1136, %v1138
      %v1167 = vadd.f32 %v915, %v1097
      %v1168 = vadd.f32 %v916, %v1099
      %v1169 = vadd.f32 %v917, %v1098
      %v1170 = vadd.f32 %v918, %v1102
      %v1171 = vadd.f32 %v919, %v1104
      %v1172 = vadd.f32 %v920, %v1103
      %v1173 = vadd.f32 %v921, %v1107
      %v1174 = vadd.f32 %v922, %v1109
      %v1175 = vadd.f32 %v923, %v1108
      %v1176 = vadd.f32 %v924, %v1112
      %v1177 = vadd.f32 %v925, %v1114
      %v1178 = vadd.f32 %v926, %v1113
      %v1179 = vadd.f32 %v927, %v1117
      %v1180 = vadd.f32 %v928, %v1119
      %v1181 = vadd.f32 %v929, %v1118
      %v1182 = vadd.f32 %v930, %v1122
      %v1183 = vadd.f32 %v931, %v1124
      %v1184 = vadd.f32 %v932, %v1123
      %v1185 = vadd.f32 %v933, %v1127
      %v1186 = vadd.f32 %v934, %v1129
      %v1187 = vadd.f32 %v935, %v1128
      %v1188 = vadd.f32 %v936, %v1132
      %v1189 = vadd.f32 %v937, %v1134
      %v1190 = vadd.f32 %v938, %v1133
      %v1191 = vadd.f32 %v939, %v1137
      %v1192 = vadd.f32 %v940, %v1139
      %v1193 = vadd.f32 %v941, %v1138
      %v1194 = vsel %vm786, 0.0, %v1041
      %v1195 = vsel %vm787, 0.0, %v1042
      %v1196 = vsel %vm788, 0.0, %v1043
      %v1197 = vsel %vm786, 0.0, %v1044
      %v1198 = vsel %vm787, 0.0, %v1045
      %v1199 = vsel %vm788, 0.0, %v1046
      %v1200 = vsel %vm786, 0.0, %v1047
      %v1201 = vsel %vm787, 0.0, %v1048
      %v1202 = vsel %vm788, 0.0, %v1049
      %v1203 = vsel %vm786, 0.0, %v1050
      %v1204 = vsel %vm787, 0.0, %v1051
      %v1205 = vsel %vm788, 0.0, %v1052
      %v1206 = vsel %vm786, 0.0, %v1053
      %v1207 = vsel %vm787, 0.0, %v1054
      %v1208 = vsel %vm788, 0.0, %v1055
      %v1209 = vsel %vm786, 0.0, %v1056
      %v1210 = vsel %vm787, 0.0, %v1057
      %v1211 = vsel %vm788, 0.0, %v1058
      %v1212 = vsel %vm786, 0.0, %v1059
      %v1213 = vsel %vm787, 0.0, %v1060
      %v1214 = vsel %vm788, 0.0, %v1061
      %v1215 = vsel %vm786, 0.0, %v1062
      %v1216 = vsel %vm787, 0.0, %v1063
      %v1217 = vsel %vm788, 0.0, %v1064
      %v1218 = vsel %vm786, 0.0, %v1065
      %v1219 = vsel %vm787, 0.0, %v1066
      %v1220 = vsel %vm788, 0.0, %v1067
      %v1221 = vsel %vm822, 0.0, %v1167
      %v1222 = vsel %vm823, 0.0, %v1168
      %v1223 = vsel %vm824, 0.0, %v1169
      %v1224 = vsel %vm822, 0.0, %v1170
      %v1225 = vsel %vm823, 0.0, %v1171
      %v1226 = vsel %vm824, 0.0, %v1172
      %v1227 = vsel %vm822, 0.0, %v1173
      %v1228 = vsel %vm823, 0.0, %v1174
      %v1229 = vsel %vm824, 0.0, %v1175
      %v1230 = vsel %vm822, 0.0, %v1176
      %v1231 = vsel %vm823, 0.0, %v1177
      %v1232 = vsel %vm824, 0.0, %v1178
      %v1233 = vsel %vm822, 0.0, %v1179
      %v1234 = vsel %vm823, 0.0, %v1180
      %v1235 = vsel %vm824, 0.0, %v1181
      %v1236 = vsel %vm822, 0.0, %v1182
      %v1237 = vsel %vm823, 0.0, %v1183
      %v1238 = vsel %vm824, 0.0, %v1184
      %v1239 = vsel %vm822, 0.0, %v1185
      %v1240 = vsel %vm823, 0.0, %v1186
      %v1241 = vsel %vm824, 0.0, %v1187
      %v1242 = vsel %vm822, 0.0, %v1188
      %v1243 = vsel %vm823, 0.0, %v1189
      %v1244 = vsel %vm824, 0.0, %v1190
      %v1245 = vsel %vm822, 0.0, %v1191
      %v1246 = vsel %vm823, 0.0, %v1192
      %v1247 = vsel %vm824, 0.0, %v1193
      %v1248 = vpack.c.bf16 %v1195, %v1194
      %v1249 = vpack.c.bf16 %v1196, %v1196
      %v1250 = vpack.c.bf16 %v1198, %v1197
      %v1251 = vpack.c.bf16 %v1199, %v1199
      %v1252 = vpack.c.bf16 %v1201, %v1200
      %v1253 = vpack.c.bf16 %v1202, %v1202
      %v1254 = vpack.c.bf16 %v1204, %v1203
      %v1255 = vpack.c.bf16 %v1205, %v1205
      %v1256 = vpack.c.bf16 %v1207, %v1206
      %v1257 = vpack.c.bf16 %v1208, %v1208
      %v1258 = vpack.c.bf16 %v1210, %v1209
      %v1259 = vpack.c.bf16 %v1211, %v1211
      %v1260 = vpack.c.bf16 %v1213, %v1212
      %v1261 = vpack.c.bf16 %v1214, %v1214
      %v1262 = vpack.c.bf16 %v1216, %v1215
      %v1263 = vpack.c.bf16 %v1217, %v1217
      %v1264 = vpack.c.bf16 %v1219, %v1218
      %v1265 = vpack.c.bf16 %v1220, %v1220
      %v1266 = vpack.c.bf16 %v1222, %v1221
      %v1267 = vpack.c.bf16 %v1223, %v1223
      %v1268 = vpack.c.bf16 %v1225, %v1224
      %v1269 = vpack.c.bf16 %v1226, %v1226
      %v1270 = vpack.c.bf16 %v1228, %v1227
      %v1271 = vpack.c.bf16 %v1229, %v1229
      %v1272 = vpack.c.bf16 %v1231, %v1230
      %v1273 = vpack.c.bf16 %v1232, %v1232
      %v1274 = vpack.c.bf16 %v1234, %v1233
      %v1275 = vpack.c.bf16 %v1235, %v1235
      %v1276 = vpack.c.bf16 %v1237, %v1236
      %v1277 = vpack.c.bf16 %v1238, %v1238
      %v1278 = vpack.c.bf16 %v1240, %v1239
      %v1279 = vpack.c.bf16 %v1241, %v1241
      %v1280 = vpack.c.bf16 %v1243, %v1242
      %v1281 = vpack.c.bf16 %v1244, %v1244
      %v1282 = vpack.c.bf16 %v1246, %v1245
      %v1283 = vpack.c.bf16 %v1247, %v1247
      %1292 = vrot.lane.b32.xlu0 %v870, 4
      %v1293 = vpop.permute.xlu0 %1292
      %1294 = vrot.lane.b32.xlu0 %v872, 4
      %v1295 = vpop.permute.xlu0 %1294
      %1296 = vrot.lane.b32.xlu0 %v874, 4
      %v1297 = vpop.permute.xlu0 %1296
      %1298 = vrot.lane.b32.xlu0 %v876, 4
      %v1299 = vpop.permute.xlu0 %1298
      %1300 = vrot.lane.b32.xlu0 %v878, 4
      %v1301 = vpop.permute.xlu0 %1300
      %1302 = vrot.lane.b32.xlu0 %v880, 4
      %v1303 = vpop.permute.xlu0 %1302
      %1304 = vrot.lane.b32.xlu0 %v882, 4
      %v1305 = vpop.permute.xlu0 %1304
      %1306 = vrot.lane.b32.xlu0 %v884, 4
      %v1307 = vpop.permute.xlu0 %1306
      %vm1308 = vsmask.f32 7424
      %v1310 = vshrl.u32 %v852, 16
      %v1312 = vshll.u32 %v852, 16
      %v1314 = vrot.slane %v1312, 1
      %v1315 = vor.u32 %v1310, %v1314
      %v1317 = vshll.u32 %v853, 16
      %v1319 = vrot.slane %v1317, 1
      %v1320 = vsel %vm1308, %v1315, %v1319
      %v1322 = vshrl.u32 %v854, 16
      %v1324 = vshll.u32 %v854, 16
      %v1326 = vrot.slane %v1324, 1
      %v1327 = vor.u32 %v1322, %v1326
      %v1329 = vshll.u32 %v855, 16
      %v1331 = vrot.slane %v1329, 1
      %v1332 = vsel %vm1308, %v1327, %v1331
      %v1334 = vshrl.u32 %v856, 16
      %v1336 = vshll.u32 %v856, 16
      %v1338 = vrot.slane %v1336, 1
      %v1339 = vor.u32 %v1334, %v1338
      %v1341 = vshll.u32 %v857, 16
      %v1343 = vrot.slane %v1341, 1
      %v1344 = vsel %vm1308, %v1339, %v1343
      %v1346 = vshrl.u32 %v858, 16
      %v1348 = vshll.u32 %v858, 16
      %v1350 = vrot.slane %v1348, 1
      %v1351 = vor.u32 %v1346, %v1350
      %v1353 = vshll.u32 %v859, 16
      %v1355 = vrot.slane %v1353, 1
      %v1356 = vsel %vm1308, %v1351, %v1355
      %v1358 = vshrl.u32 %v860, 16
      %v1360 = vshll.u32 %v860, 16
      %v1362 = vrot.slane %v1360, 1
      %v1363 = vor.u32 %v1358, %v1362
      %v1365 = vshll.u32 %v861, 16
      %v1367 = vrot.slane %v1365, 1
      %v1368 = vsel %vm1308, %v1363, %v1367
      %v1370 = vshrl.u32 %v862, 16
      %v1372 = vshll.u32 %v862, 16
      %v1374 = vrot.slane %v1372, 1
      %v1375 = vor.u32 %v1370, %v1374
      %v1377 = vshll.u32 %v863, 16
      %v1379 = vrot.slane %v1377, 1
      %v1380 = vsel %vm1308, %v1375, %v1379
      %v1382 = vshrl.u32 %v864, 16
      %v1384 = vshll.u32 %v864, 16
      %v1386 = vrot.slane %v1384, 1
      %v1387 = vor.u32 %v1382, %v1386
      %v1389 = vshll.u32 %v865, 16
      %v1391 = vrot.slane %v1389, 1
      %v1392 = vsel %vm1308, %v1387, %v1391
      %v1394 = vshrl.u32 %v866, 16
      %v1396 = vshll.u32 %v866, 16
      %v1398 = vrot.slane %v1396, 1
      %v1399 = vor.u32 %v1394, %v1398
      %v1401 = vshll.u32 %v867, 16
      %v1403 = vrot.slane %v1401, 1
      %v1404 = vsel %vm1308, %v1399, %v1403
      %1405 = vrot.lane.b32.xlu0 %v1320, 8
      %v1406 = vpop.permute.xlu0 %1405
      %1407 = vrot.lane.b32.xlu0 %v1332, 8
      %v1408 = vpop.permute.xlu0 %1407
      %1409 = vrot.lane.b32.xlu0 %v1344, 8
      %v1410 = vpop.permute.xlu0 %1409
      %1411 = vrot.lane.b32.xlu0 %v1356, 8
      %v1412 = vpop.permute.xlu0 %1411
      %1413 = vrot.lane.b32.xlu0 %v1368, 8
      %v1414 = vpop.permute.xlu0 %1413
      %1415 = vrot.lane.b32.xlu0 %v1380, 8
      %v1416 = vpop.permute.xlu0 %1415
      %1417 = vrot.lane.b32.xlu0 %v1392, 8
      %v1418 = vpop.permute.xlu0 %1417
      %1419 = vrot.lane.b32.xlu0 %v1404, 8
      %v1420 = vpop.permute.xlu0 %1419
      %v1422 = vshrl.u32 %v870, 16
      %v1424 = vshll.u32 %v870, 16
      %v1426 = vrot.slane %v1424, 1
      %v1427 = vor.u32 %v1422, %v1426
      %v1429 = vshll.u32 %v871, 16
      %v1431 = vrot.slane %v1429, 1
      %v1432 = vsel %vm1308, %v1427, %v1431
      %v1434 = vshrl.u32 %v872, 16
      %v1436 = vshll.u32 %v872, 16
      %v1438 = vrot.slane %v1436, 1
      %v1439 = vor.u32 %v1434, %v1438
      %v1441 = vshll.u32 %v873, 16
      %v1443 = vrot.slane %v1441, 1
      %v1444 = vsel %vm1308, %v1439, %v1443
      %v1446 = vshrl.u32 %v874, 16
      %v1448 = vshll.u32 %v874, 16
      %v1450 = vrot.slane %v1448, 1
      %v1451 = vor.u32 %v1446, %v1450
      %v1453 = vshll.u32 %v875, 16
      %v1455 = vrot.slane %v1453, 1
      %v1456 = vsel %vm1308, %v1451, %v1455
      %v1458 = vshrl.u32 %v876, 16
      %v1460 = vshll.u32 %v876, 16
      %v1462 = vrot.slane %v1460, 1
      %v1463 = vor.u32 %v1458, %v1462
      %v1465 = vshll.u32 %v877, 16
      %v1467 = vrot.slane %v1465, 1
      %v1468 = vsel %vm1308, %v1463, %v1467
      %v1470 = vshrl.u32 %v878, 16
      %v1472 = vshll.u32 %v878, 16
      %v1474 = vrot.slane %v1472, 1
      %v1475 = vor.u32 %v1470, %v1474
      %v1477 = vshll.u32 %v879, 16
      %v1479 = vrot.slane %v1477, 1
      %v1480 = vsel %vm1308, %v1475, %v1479
      %v1482 = vshrl.u32 %v880, 16
      %v1484 = vshll.u32 %v880, 16
      %v1486 = vrot.slane %v1484, 1
      %v1487 = vor.u32 %v1482, %v1486
      %v1489 = vshll.u32 %v881, 16
      %v1491 = vrot.slane %v1489, 1
      %v1492 = vsel %vm1308, %v1487, %v1491
      %v1494 = vshrl.u32 %v882, 16
      %v1496 = vshll.u32 %v882, 16
      %v1498 = vrot.slane %v1496, 1
      %v1499 = vor.u32 %v1494, %v1498
      %v1501 = vshll.u32 %v883, 16
      %v1503 = vrot.slane %v1501, 1
      %v1504 = vsel %vm1308, %v1499, %v1503
      %v1506 = vshrl.u32 %v884, 16
      %v1508 = vshll.u32 %v884, 16
      %v1510 = vrot.slane %v1508, 1
      %v1511 = vor.u32 %v1506, %v1510
      %v1513 = vshll.u32 %v885, 16
      %v1515 = vrot.slane %v1513, 1
      %v1516 = vsel %vm1308, %v1511, %v1515
      %1517 = vrot.lane.b32.xlu0 %v1432, 12
      %v1518 = vpop.permute.xlu0 %1517
      %1519 = vrot.lane.b32.xlu0 %v1444, 12
      %v1520 = vpop.permute.xlu0 %1519
      %1521 = vrot.lane.b32.xlu0 %v1456, 12
      %v1522 = vpop.permute.xlu0 %1521
      %1523 = vrot.lane.b32.xlu0 %v1468, 12
      %v1524 = vpop.permute.xlu0 %1523
      %1525 = vrot.lane.b32.xlu0 %v1480, 12
      %v1526 = vpop.permute.xlu0 %1525
      %1527 = vrot.lane.b32.xlu0 %v1492, 12
      %v1528 = vpop.permute.xlu0 %1527
      %1529 = vrot.lane.b32.xlu0 %v1504, 12
      %v1530 = vpop.permute.xlu0 %1529
      %1531 = vrot.lane.b32.xlu0 %v1516, 12
      %v1532 = vpop.permute.xlu0 %1531
      %vm1533 = vcmask 31744
      %v1535 = vsel %vm1533, %v852, %v1293
      %v1537 = vsel %vm1533, %v854, %v1295
      %v1539 = vsel %vm1533, %v856, %v1297
      %v1541 = vsel %vm1533, %v858, %v1299
      %v1543 = vsel %vm1533, %v860, %v1301
      %v1545 = vsel %vm1533, %v862, %v1303
      %v1547 = vsel %vm1533, %v864, %v1305
      %v1549 = vsel %vm1533, %v866, %v1307
      %vm1550 = vcmask 64512
      %v1552 = vsel %vm1550, %v1535, %v1406
      %v1554 = vsel %vm1550, %v1537, %v1408
      %v1556 = vsel %vm1550, %v1539, %v1410
      %v1558 = vsel %vm1550, %v1541, %v1412
      %v1560 = vsel %vm1550, %v1543, %v1414
      %v1562 = vsel %vm1550, %v1545, %v1416
      %v1564 = vsel %vm1550, %v1547, %v1418
      %v1566 = vsel %vm1550, %v1549, %v1420
      %vm1567 = vcmask 97280
      %v1569 = vsel %vm1567, %v1552, %v1518
      %v1571 = vsel %vm1567, %v1554, %v1520
      %v1573 = vsel %vm1567, %v1556, %v1522
      %v1575 = vsel %vm1567, %v1558, %v1524
      %v1577 = vsel %vm1567, %v1560, %v1526
      %v1579 = vsel %vm1567, %v1562, %v1528
      %v1581 = vsel %vm1567, %v1564, %v1530
      %v1583 = vsel %vm1567, %v1566, %v1532
      %v1584 = vld [vmem:[%s1] sm:$0xf]
      %v1585 = vld [vmem:[%s1 + $0x4] sm:$0xf]
      %1594 = vrot.lane.b32.xlu0 %v1266, 4
      %v1595 = vpop.permute.xlu0 %1594
      %1596 = vrot.lane.b32.xlu0 %v1268, 4
      %v1597 = vpop.permute.xlu0 %1596
      %1598 = vrot.lane.b32.xlu0 %v1270, 4
      %v1599 = vpop.permute.xlu0 %1598
      %1600 = vrot.lane.b32.xlu0 %v1272, 4
      %v1601 = vpop.permute.xlu0 %1600
      %1602 = vrot.lane.b32.xlu0 %v1274, 4
      %v1603 = vpop.permute.xlu0 %1602
      %1604 = vrot.lane.b32.xlu0 %v1276, 4
      %v1605 = vpop.permute.xlu0 %1604
      %1606 = vrot.lane.b32.xlu0 %v1278, 4
      %v1607 = vpop.permute.xlu0 %1606
      %1608 = vrot.lane.b32.xlu0 %v1280, 4
      %v1609 = vpop.permute.xlu0 %1608
      %v1611 = vshrl.u32 %v1248, 16
      %v1613 = vshll.u32 %v1248, 16
      %v1615 = vrot.slane %v1613, 1
      %v1616 = vor.u32 %v1611, %v1615
      %v1618 = vshll.u32 %v1249, 16
      %v1620 = vrot.slane %v1618, 1
      %v1621 = vsel %vm1308, %v1616, %v1620
      %v1623 = vshrl.u32 %v1250, 16
      %v1625 = vshll.u32 %v1250, 16
      %v1627 = vrot.slane %v1625, 1
      %v1628 = vor.u32 %v1623, %v1627
      %v1630 = vshll.u32 %v1251, 16
      %v1632 = vrot.slane %v1630, 1
      %v1633 = vsel %vm1308, %v1628, %v1632
      %v1635 = vshrl.u32 %v1252, 16
      %v1637 = vshll.u32 %v1252, 16
      %v1639 = vrot.slane %v1637, 1
      %v1640 = vor.u32 %v1635, %v1639
      %v1642 = vshll.u32 %v1253, 16
      %v1644 = vrot.slane %v1642, 1
      %v1645 = vsel %vm1308, %v1640, %v1644
      %v1647 = vshrl.u32 %v1254, 16
      %v1649 = vshll.u32 %v1254, 16
      %v1651 = vrot.slane %v1649, 1
      %v1652 = vor.u32 %v1647, %v1651
      %v1654 = vshll.u32 %v1255, 16
      %v1656 = vrot.slane %v1654, 1
      %v1657 = vsel %vm1308, %v1652, %v1656
      %v1659 = vshrl.u32 %v1256, 16
      %v1661 = vshll.u32 %v1256, 16
      %v1663 = vrot.slane %v1661, 1
      %v1664 = vor.u32 %v1659, %v1663
      %v1666 = vshll.u32 %v1257, 16
      %v1668 = vrot.slane %v1666, 1
      %v1669 = vsel %vm1308, %v1664, %v1668
      %v1671 = vshrl.u32 %v1258, 16
      %v1673 = vshll.u32 %v1258, 16
      %v1675 = vrot.slane %v1673, 1
      %v1676 = vor.u32 %v1671, %v1675
      %v1678 = vshll.u32 %v1259, 16
      %v1680 = vrot.slane %v1678, 1
      %v1681 = vsel %vm1308, %v1676, %v1680
      %v1683 = vshrl.u32 %v1260, 16
      %v1685 = vshll.u32 %v1260, 16
      %v1687 = vrot.slane %v1685, 1
      %v1688 = vor.u32 %v1683, %v1687
      %v1690 = vshll.u32 %v1261, 16
      %v1692 = vrot.slane %v1690, 1
      %v1693 = vsel %vm1308, %v1688, %v1692
      %v1695 = vshrl.u32 %v1262, 16
      %v1697 = vshll.u32 %v1262, 16
      %v1699 = vrot.slane %v1697, 1
      %v1700 = vor.u32 %v1695, %v1699
      %v1702 = vshll.u32 %v1263, 16
      %v1704 = vrot.slane %v1702, 1
      %v1705 = vsel %vm1308, %v1700, %v1704
      %1706 = vrot.lane.b32.xlu0 %v1621, 8
      %v1707 = vpop.permute.xlu0 %1706
      %1708 = vrot.lane.b32.xlu0 %v1633, 8
      %v1709 = vpop.permute.xlu0 %1708
      %1710 = vrot.lane.b32.xlu0 %v1645, 8
      %v1711 = vpop.permute.xlu0 %1710
      %1712 = vrot.lane.b32.xlu0 %v1657, 8
      %v1713 = vpop.permute.xlu0 %1712
      %1714 = vrot.lane.b32.xlu0 %v1669, 8
      %v1715 = vpop.permute.xlu0 %1714
      %1716 = vrot.lane.b32.xlu0 %v1681, 8
      %v1717 = vpop.permute.xlu0 %1716
      %1718 = vrot.lane.b32.xlu0 %v1693, 8
      %v1719 = vpop.permute.xlu0 %1718
      %1720 = vrot.lane.b32.xlu0 %v1705, 8
      %v1721 = vpop.permute.xlu0 %1720
      %v1723 = vshrl.u32 %v1266, 16
      %v1725 = vshll.u32 %v1266, 16
      %v1727 = vrot.slane %v1725, 1
      %v1728 = vor.u32 %v1723, %v1727
      %v1730 = vshll.u32 %v1267, 16
      %v1732 = vrot.slane %v1730, 1
      %v1733 = vsel %vm1308, %v1728, %v1732
      %v1735 = vshrl.u32 %v1268, 16
      %v1737 = vshll.u32 %v1268, 16
      %v1739 = vrot.slane %v1737, 1
      %v1740 = vor.u32 %v1735, %v1739
      %v1742 = vshll.u32 %v1269, 16
      %v1744 = vrot.slane %v1742, 1
      %v1745 = vsel %vm1308, %v1740, %v1744
      %v1747 = vshrl.u32 %v1270, 16
      %v1749 = vshll.u32 %v1270, 16
      %v1751 = vrot.slane %v1749, 1
      %v1752 = vor.u32 %v1747, %v1751
      %v1754 = vshll.u32 %v1271, 16
      %v1756 = vrot.slane %v1754, 1
      %v1757 = vsel %vm1308, %v1752, %v1756
      %v1759 = vshrl.u32 %v1272, 16
      %v1761 = vshll.u32 %v1272, 16
      %v1763 = vrot.slane %v1761, 1
      %v1764 = vor.u32 %v1759, %v1763
      %v1766 = vshll.u32 %v1273, 16
      %v1768 = vrot.slane %v1766, 1
      %v1769 = vsel %vm1308, %v1764, %v1768
      %v1771 = vshrl.u32 %v1274, 16
      %v1773 = vshll.u32 %v1274, 16
      %v1775 = vrot.slane %v1773, 1
      %v1776 = vor.u32 %v1771, %v1775
      %v1778 = vshll.u32 %v1275, 16
      %v1780 = vrot.slane %v1778, 1
      %v1781 = vsel %vm1308, %v1776, %v1780
      %v1783 = vshrl.u32 %v1276, 16
      %v1785 = vshll.u32 %v1276, 16
      %v1787 = vrot.slane %v1785, 1
      %v1788 = vor.u32 %v1783, %v1787
      %v1790 = vshll.u32 %v1277, 16
      %v1792 = vrot.slane %v1790, 1
      %v1793 = vsel %vm1308, %v1788, %v1792
      %v1795 = vshrl.u32 %v1278, 16
      %v1797 = vshll.u32 %v1278, 16
      %v1799 = vrot.slane %v1797, 1
      %v1800 = vor.u32 %v1795, %v1799
      %v1802 = vshll.u32 %v1279, 16
      %v1804 = vrot.slane %v1802, 1
      %v1805 = vsel %vm1308, %v1800, %v1804
      %v1807 = vshrl.u32 %v1280, 16
      %v1809 = vshll.u32 %v1280, 16
      %v1811 = vrot.slane %v1809, 1
      %v1812 = vor.u32 %v1807, %v1811
      %v1814 = vshll.u32 %v1281, 16
      %v1816 = vrot.slane %v1814, 1
      %v1817 = vsel %vm1308, %v1812, %v1816
      %1818 = vrot.lane.b32.xlu0 %v1733, 12
      %v1819 = vpop.permute.xlu0 %1818
      %1820 = vrot.lane.b32.xlu0 %v1745, 12
      %v1821 = vpop.permute.xlu0 %1820
      %1822 = vrot.lane.b32.xlu0 %v1757, 12
      %v1823 = vpop.permute.xlu0 %1822
      %1824 = vrot.lane.b32.xlu0 %v1769, 12
      %v1825 = vpop.permute.xlu0 %1824
      %1826 = vrot.lane.b32.xlu0 %v1781, 12
      %v1827 = vpop.permute.xlu0 %1826
      %1828 = vrot.lane.b32.xlu0 %v1793, 12
      %v1829 = vpop.permute.xlu0 %1828
      %1830 = vrot.lane.b32.xlu0 %v1805, 12
      %v1831 = vpop.permute.xlu0 %1830
      %1832 = vrot.lane.b32.xlu0 %v1817, 12
      %v1833 = vpop.permute.xlu0 %1832
      %v1835 = vsel %vm1533, %v1248, %v1595
      %v1837 = vsel %vm1533, %v1250, %v1597
      %v1839 = vsel %vm1533, %v1252, %v1599
      %v1841 = vsel %vm1533, %v1254, %v1601
      %v1843 = vsel %vm1533, %v1256, %v1603
      %v1845 = vsel %vm1533, %v1258, %v1605
      %v1847 = vsel %vm1533, %v1260, %v1607
      %v1849 = vsel %vm1533, %v1262, %v1609
      %v1851 = vsel %vm1550, %v1835, %v1707
      %v1853 = vsel %vm1550, %v1837, %v1709
      %v1855 = vsel %vm1550, %v1839, %v1711
      %v1857 = vsel %vm1550, %v1841, %v1713
      %v1859 = vsel %vm1550, %v1843, %v1715
      %v1861 = vsel %vm1550, %v1845, %v1717
      %v1863 = vsel %vm1550, %v1847, %v1719
      %v1865 = vsel %vm1550, %v1849, %v1721
      %v1867 = vsel %vm1567, %v1851, %v1819
      %v1869 = vsel %vm1567, %v1853, %v1821
      %v1871 = vsel %vm1567, %v1855, %v1823
      %v1873 = vsel %vm1567, %v1857, %v1825
      %v1875 = vsel %vm1567, %v1859, %v1827
      %v1877 = vsel %vm1567, %v1861, %v1829
      %v1879 = vsel %vm1567, %v1863, %v1831
      %v1881 = vsel %vm1567, %v1865, %v1833
      %v1882 = vld [vmem:[%s1 + $0x8] sm:$0xf]
      %v1883 = vld [vmem:[%s1 + $0xc] sm:$0xf]
      %v1886 = vunpack.c.l.b16 %v1882
      %v1887 = vunpack.c.l.b16 %v1883
      %v1888 = vpack.c.b16 %v1887, %v1886
      %vm1890 = vcmask 130048
      %v1891 = vsel %vm1890, %v1867, 0
      %v1893 = vsel %vm1890, %v1869, 0
      %v1895 = vsel %vm1890, %v1871, 0
      %v1897 = vsel %vm1890, %v1873, 0
      %v1899 = vsel %vm1890, %v1875, 0
      %v1901 = vsel %vm1890, %v1877, 0
      %v1903 = vsel %vm1890, %v1879, 0
      %v1905 = vsel %vm1890, %v1881, 0
      %1907 = vmatprep.subr.bf16.mxu0 0
      %1908 = vmatpush1.bf16.msra.mxu0 %v1888
      %1909 = vmatprep.subr.bf16.mxu0 0
      %1910 = vmatpush1.bf16.msra.mxu0 0
      %1911 = vmatprep.subr.bf16.mxu0 0
      %1912 = vmatpush1.bf16.msra.mxu0 0
      %1913 = vmatprep.subr.bf16.mxu0 0
      %1914 = vmatpush1.bf16.msra.mxu0 0
      %1915 = vmatprep.subr.bf16.mxu0 0
      %1916 = vmatpush1.bf16.msra.mxu0 0
      %1917 = vmatprep.subr.bf16.mxu0 0
      %1918 = vmatpush1.bf16.msra.mxu0 0
      %1919 = vmatprep.subr.bf16.mxu0 0
      %1920 = vmatpush1.bf16.msra.mxu0 0
      %1921 = vmatprep.subr.bf16.mxu0 0
      %1922 = vmatpush1.bf16.msra.mxu0 0
      %1923 = vmatprep.subr.bf16.mxu0 0
      %1924 = vmatpush1.bf16.msra.mxu0 0
      %1925 = vmatprep.subr.bf16.mxu0 0
      %1926 = vmatpush1.bf16.msra.mxu0 0
      %1927 = vmatprep.subr.bf16.mxu0 0
      %1928 = vmatpush1.bf16.msra.mxu0 0
      %1929 = vmatprep.subr.bf16.mxu0 0
      %1930 = vmatpush1.bf16.msra.mxu0 0
      %1931 = vmatprep.subr.bf16.mxu0 0
      %1932 = vmatpush1.bf16.msra.mxu0 0
      %1933 = vmatprep.subr.bf16.mxu0 0
      %1934 = vmatpush1.bf16.msra.mxu0 0
      %1935 = vmatprep.subr.bf16.mxu0 0
      %1936 = vmatpush1.bf16.msra.mxu0 0
      %1937 = vmatprep.subr.bf16.mxu0 0
      %1938 = vmatpush1.bf16.msra.mxu0 0
      %1939 = vmatprep.mubr.bf16.mxu0 0
      %1940 = vmatmul.mubr.bf16.gmra.mrb[0].mxu0 %v1891
      %v1941 = vpop.f32.mrb[0].mxu0
      %v1942 = vadd.f32 0.0, %v1941
      %v1943 = vpop.f32.mrb[0].mxu0
      %v1944 = vpop.f32.mrb[0].mxu0
      %v1945 = vadd.f32 0.0, %v1944
      %v1946 = vpop.f32.mrb[0].mxu0
      %1947 = vmatprep.mubr.bf16.mxu0 0
      %1948 = vmatmul.mubr.bf16.gmra.mrb[0].mxu0 %v1893
      %v1949 = vpop.f32.mrb[0].mxu0
      %v1950 = vadd.f32 0.0, %v1949
      %v1951 = vpop.f32.mrb[0].mxu0
      %v1952 = vpop.f32.mrb[0].mxu0
      %v1953 = vadd.f32 0.0, %v1952
      %v1954 = vpop.f32.mrb[0].mxu0
      %1955 = vmatprep.mubr.bf16.mxu0 0
      %1956 = vmatmul.mubr.bf16.gmra.mrb[0].mxu0 %v1895
      %v1957 = vpop.f32.mrb[0].mxu0
      %v1958 = vadd.f32 0.0, %v1957
      %v1959 = vpop.f32.mrb[0].mxu0
      %v1960 = vpop.f32.mrb[0].mxu0
      %v1961 = vadd.f32 0.0, %v1960
      %v1962 = vpop.f32.mrb[0].mxu0
      %1963 = vmatprep.mubr.bf16.mxu0 0
      %1964 = vmatmul.mubr.bf16.gmra.mrb[0].mxu0 %v1897
      %v1965 = vpop.f32.mrb[0].mxu0
      %v1966 = vadd.f32 0.0, %v1965
      %v1967 = vpop.f32.mrb[0].mxu0
      %v1968 = vpop.f32.mrb[0].mxu0
      %v1969 = vadd.f32 0.0, %v1968
      %v1970 = vpop.f32.mrb[0].mxu0
      %1971 = vmatprep.mubr.bf16.mxu0 0
      %1972 = vmatmul.mubr.bf16.gmra.mrb[0].mxu0 %v1899
      %v1973 = vpop.f32.mrb[0].mxu0
      %v1974 = vadd.f32 0.0, %v1973
      %v1975 = vpop.f32.mrb[0].mxu0
      %v1976 = vpop.f32.mrb[0].mxu0
      %v1977 = vadd.f32 0.0, %v1976
      %v1978 = vpop.f32.mrb[0].mxu0
      %1979 = vmatprep.mubr.bf16.mxu0 0
      %1980 = vmatmul.mubr.bf16.gmra.mrb[0].mxu0 %v1901
      %v1981 = vpop.f32.mrb[0].mxu0
      %v1982 = vadd.f32 0.0, %v1981
      %v1983 = vpop.f32.mrb[0].mxu0
      %v1984 = vpop.f32.mrb[0].mxu0
      %v1985 = vadd.f32 0.0, %v1984
      %v1986 = vpop.f32.mrb[0].mxu0
      %1987 = vmatprep.mubr.bf16.mxu0 0
      %1988 = vmatmul.mubr.bf16.gmra.mrb[0].mxu0 %v1903
      %v1989 = vpop.f32.mrb[0].mxu0
      %v1990 = vadd.f32 0.0, %v1989
      %v1991 = vpop.f32.mrb[0].mxu0
      %v1992 = vpop.f32.mrb[0].mxu0
      %v1993 = vadd.f32 0.0, %v1992
      %v1994 = vpop.f32.mrb[0].mxu0
      %1995 = vmatprep.mubr.bf16.mxu0 0
      %1996 = vmatmul.mubr.bf16.gmra.mrb[0].mxu0 %v1905
      %v1997 = vpop.f32.mrb[0].mxu0
      %v1998 = vadd.f32 0.0, %v1997
      %v1999 = vpop.f32.mrb[0].mxu0
      %v2000 = vpop.f32.mrb[0].mxu0
      %v2001 = vadd.f32 0.0, %v2000
      %v2002 = vpop.f32.mrb[0].mxu0
      %2003 = vdwg.mxu0
      %v2006 = vunpack.c.l.b16 %v1584
      %v2007 = vunpack.c.l.b16 %v1585
      %v2008 = vpack.c.b16 %v2007, %v2006
      %v2010 = vsel %vm1890, %v1569, 0
      %v2012 = vsel %vm1890, %v1571, 0
      %v2014 = vsel %vm1890, %v1573, 0
      %v2016 = vsel %vm1890, %v1575, 0
      %v2018 = vsel %vm1890, %v1577, 0
      %v2020 = vsel %vm1890, %v1579, 0
      %v2022 = vsel %vm1890, %v1581, 0
      %v2024 = vsel %vm1890, %v1583, 0
      %2026 = vmatprep.subr.bf16.mxu0 0
      %2027 = vmatpush1.bf16.msra.mxu0 %v2008
      %2028 = vmatprep.subr.bf16.mxu0 0
      %2029 = vmatpush1.bf16.msra.mxu0 0
      %2030 = vmatprep.subr.bf16.mxu0 0
      %2031 = vmatpush1.bf16.msra.mxu0 0
      %2032 = vmatprep.subr.bf16.mxu0 0
      %2033 = vmatpush1.bf16.msra.mxu0 0
      %2034 = vmatprep.subr.bf16.mxu0 0
      %2035 = vmatpush1.bf16.msra.mxu0 0
      %2036 = vmatprep.subr.bf16.mxu0 0
      %2037 = vmatpush1.bf16.msra.mxu0 0
      %2038 = vmatprep.subr.bf16.mxu0 0
      %2039 = vmatpush1.bf16.msra.mxu0 0
      %2040 = vmatprep.subr.bf16.mxu0 0
      %2041 = vmatpush1.bf16.msra.mxu0 0
      %2042 = vmatprep.subr.bf16.mxu0 0
      %2043 = vmatpush1.bf16.msra.mxu0 0
      %2044 = vmatprep.subr.bf16.mxu0 0
      %2045 = vmatpush1.bf16.msra.mxu0 0
      %2046 = vmatprep.subr.bf16.mxu0 0
      %2047 = vmatpush1.bf16.msra.mxu0 0
      %2048 = vmatprep.subr.bf16.mxu0 0
      %2049 = vmatpush1.bf16.msra.mxu0 0
      %2050 = vmatprep.subr.bf16.mxu0 0
      %2051 = vmatpush1.bf16.msra.mxu0 0
      %2052 = vmatprep.subr.bf16.mxu0 0
      %2053 = vmatpush1.bf16.msra.mxu0 0
      %2054 = vmatprep.subr.bf16.mxu0 0
      %2055 = vmatpush1.bf16.msra.mxu0 0
      %2056 = vmatprep.subr.bf16.mxu0 0
      %2057 = vmatpush1.bf16.msra.mxu0 0
      %2058 = vmatprep.mubr.bf16.mxu0 0
      %2059 = vmatmul.mubr.bf16.gmra.mrb[0].mxu0 %v2010
      %v2060 = vpop.f32.mrb[0].mxu0
      %v2061 = vadd.f32 %v1942, %v2060
      %v2062 = vpop.f32.mrb[0].mxu0
      %v2063 = vpop.f32.mrb[0].mxu0
      %v2064 = vadd.f32 %v1945, %v2063
      %v2065 = vpop.f32.mrb[0].mxu0
      %2066 = vmatprep.mubr.bf16.mxu0 0
      %2067 = vmatmul.mubr.bf16.gmra.mrb[0].mxu0 %v2012
      %v2068 = vpop.f32.mrb[0].mxu0
      %v2069 = vadd.f32 %v1950, %v2068
      %v2070 = vpop.f32.mrb[0].mxu0
      %v2071 = vpop.f32.mrb[0].mxu0
      %v2072 = vadd.f32 %v1953, %v2071
      %v2073 = vpop.f32.mrb[0].mxu0
      %2074 = vmatprep.mubr.bf16.mxu0 0
      %2075 = vmatmul.mubr.bf16.gmra.mrb[0].mxu0 %v2014
      %v2076 = vpop.f32.mrb[0].mxu0
      %v2077 = vadd.f32 %v1958, %v2076
      %v2078 = vpop.f32.mrb[0].mxu0
      %v2079 = vpop.f32.mrb[0].mxu0
      %v2080 = vadd.f32 %v1961, %v2079
      %v2081 = vpop.f32.mrb[0].mxu0
      %2082 = vmatprep.mubr.bf16.mxu0 0
      %2083 = vmatmul.mubr.bf16.gmra.mrb[0].mxu0 %v2016
      %v2084 = vpop.f32.mrb[0].mxu0
      %v2085 = vadd.f32 %v1966, %v2084
      %v2086 = vpop.f32.mrb[0].mxu0
      %v2087 = vpop.f32.mrb[0].mxu0
      %v2088 = vadd.f32 %v1969, %v2087
      %v2089 = vpop.f32.mrb[0].mxu0
      %2090 = vmatprep.mubr.bf16.mxu0 0
      %2091 = vmatmul.mubr.bf16.gmra.mrb[0].mxu0 %v2018
      %v2092 = vpop.f32.mrb[0].mxu0
      %v2093 = vadd.f32 %v1974, %v2092
      %v2094 = vpop.f32.mrb[0].mxu0
      %v2095 = vpop.f32.mrb[0].mxu0
      %v2096 = vadd.f32 %v1977, %v2095
      %v2097 = vpop.f32.mrb[0].mxu0
      %2098 = vmatprep.mubr.bf16.mxu0 0
      %2099 = vmatmul.mubr.bf16.gmra.mrb[0].mxu0 %v2020
      %v2100 = vpop.f32.mrb[0].mxu0
      %v2101 = vadd.f32 %v1982, %v2100
      %v2102 = vpop.f32.mrb[0].mxu0
      %v2103 = vpop.f32.mrb[0].mxu0
      %v2104 = vadd.f32 %v1985, %v2103
      %v2105 = vpop.f32.mrb[0].mxu0
      %2106 = vmatprep.mubr.bf16.mxu0 0
      %2107 = vmatmul.mubr.bf16.gmra.mrb[0].mxu0 %v2022
      %v2108 = vpop.f32.mrb[0].mxu0
      %v2109 = vadd.f32 %v1990, %v2108
      %v2110 = vpop.f32.mrb[0].mxu0
      %v2111 = vpop.f32.mrb[0].mxu0
      %v2112 = vadd.f32 %v1993, %v2111
      %v2113 = vpop.f32.mrb[0].mxu0
      %2114 = vmatprep.mubr.bf16.mxu0 0
      %2115 = vmatmul.mubr.bf16.gmra.mrb[0].mxu0 %v2024
      %v2116 = vpop.f32.mrb[0].mxu0
      %v2117 = vadd.f32 %v1998, %v2116
      %v2118 = vpop.f32.mrb[0].mxu0
      %v2119 = vpop.f32.mrb[0].mxu0
      %v2120 = vadd.f32 %v2001, %v2119
      %v2121 = vpop.f32.mrb[0].mxu0
      %2122 = vdwg.mxu0
      %2124 = vrot.lane.b32.xlu0 %v886, 4
      %v2125 = vpop.permute.xlu0 %2124
      %v2127 = vshrl.u32 %v868, 16
      %v2129 = vshll.u32 %v868, 16
      %v2131 = vrot.slane %v2129, 1
      %v2132 = vor.u32 %v2127, %v2131
      %v2134 = vshll.u32 %v869, 16
      %v2136 = vrot.slane %v2134, 1
      %v2137 = vsel %vm1308, %v2132, %v2136
      %2138 = vrot.lane.b32.xlu0 %v2137, 8
      %v2139 = vpop.permute.xlu0 %2138
      %v2141 = vshrl.u32 %v886, 16
      %v2143 = vshll.u32 %v886, 16
      %v2145 = vrot.slane %v2143, 1
      %v2146 = vor.u32 %v2141, %v2145
      %v2148 = vshll.u32 %v887, 16
      %v2150 = vrot.slane %v2148, 1
      %v2151 = vsel %vm1308, %v2146, %v2150
      %2152 = vrot.lane.b32.xlu0 %v2151, 12
      %v2153 = vpop.permute.xlu0 %2152
      %v2155 = vsel %vm1533, %v868, %v2125
      %v2157 = vsel %vm1550, %v2155, %v2139
      %v2159 = vsel %vm1567, %v2157, %v2153
      %v2160 = vld [vmem:[%s1 + $0x10] sm:$0xf]
      %v2161 = vld [vmem:[%s1 + $0x14] sm:$0xf]
      %v2164 = vunpack.c.l.b16 %v2160
      %v2165 = vunpack.c.l.b16 %v2161
      %v2166 = vpack.c.b16 %v2165, %v2164
      %v2168 = vsel %vm1890, %v2159, 0
      %2170 = vmatprep.subr.bf16.mxu0 0
      %2171 = vmatpush1.bf16.msra.mxu0 %v2166
      %2172 = vmatprep.subr.bf16.mxu0 0
      %2173 = vmatpush1.bf16.msra.mxu0 0
      %2174 = vmatprep.subr.bf16.mxu0 0
      %2175 = vmatpush1.bf16.msra.mxu0 0
      %2176 = vmatprep.subr.bf16.mxu0 0
      %2177 = vmatpush1.bf16.msra.mxu0 0
      %2178 = vmatprep.subr.bf16.mxu0 0
      %2179 = vmatpush1.bf16.msra.mxu0 0
      %2180 = vmatprep.subr.bf16.mxu0 0
      %2181 = vmatpush1.bf16.msra.mxu0 0
      %2182 = vmatprep.subr.bf16.mxu0 0
      %2183 = vmatpush1.bf16.msra.mxu0 0
      %2184 = vmatprep.subr.bf16.mxu0 0
      %2185 = vmatpush1.bf16.msra.mxu0 0
      %2186 = vmatprep.subr.bf16.mxu0 0
      %2187 = vmatpush1.bf16.msra.mxu0 0
      %2188 = vmatprep.subr.bf16.mxu0 0
      %2189 = vmatpush1.bf16.msra.mxu0 0
      %2190 = vmatprep.subr.bf16.mxu0 0
      %2191 = vmatpush1.bf16.msra.mxu0 0
      %2192 = vmatprep.subr.bf16.mxu0 0
      %2193 = vmatpush1.bf16.msra.mxu0 0
      %2194 = vmatprep.subr.bf16.mxu0 0
      %2195 = vmatpush1.bf16.msra.mxu0 0
      %2196 = vmatprep.subr.bf16.mxu0 0
      %2197 = vmatpush1.bf16.msra.mxu0 0
      %2198 = vmatprep.subr.bf16.mxu0 0
      %2199 = vmatpush1.bf16.msra.mxu0 0
      %2200 = vmatprep.subr.bf16.mxu0 0
      %2201 = vmatpush1.bf16.msra.mxu0 0
      %2202 = vmatprep.mubr.bf16.mxu0 0
      %2203 = vmatmul.mubr.bf16.gmra.mrb[0].mxu0 %v2012
      %v2204 = vpop.f32.mrb[0].mxu0
      %v2205 = vadd.f32 0.0, %v2204
      %v2206 = vpop.f32.mrb[0].mxu0
      %v2207 = vpop.f32.mrb[0].mxu0
      %v2208 = vadd.f32 0.0, %v2207
      %v2209 = vpop.f32.mrb[0].mxu0
      %2210 = vmatprep.mubr.bf16.mxu0 0
      %2211 = vmatmul.mubr.bf16.gmra.mrb[0].mxu0 %v2014
      %v2212 = vpop.f32.mrb[0].mxu0
      %v2213 = vadd.f32 0.0, %v2212
      %v2214 = vpop.f32.mrb[0].mxu0
      %v2215 = vpop.f32.mrb[0].mxu0
      %v2216 = vadd.f32 0.0, %v2215
      %v2217 = vpop.f32.mrb[0].mxu0
      %2218 = vmatprep.mubr.bf16.mxu0 0
      %2219 = vmatmul.mubr.bf16.gmra.mrb[0].mxu0 %v2016
      %v2220 = vpop.f32.mrb[0].mxu0
      %v2221 = vadd.f32 0.0, %v2220
      %v2222 = vpop.f32.mrb[0].mxu0
      %v2223 = vpop.f32.mrb[0].mxu0
      %v2224 = vadd.f32 0.0, %v2223
      %v2225 = vpop.f32.mrb[0].mxu0
      %2226 = vmatprep.mubr.bf16.mxu0 0
      %2227 = vmatmul.mubr.bf16.gmra.mrb[0].mxu0 %v2018
      %v2228 = vpop.f32.mrb[0].mxu0
      %v2229 = vadd.f32 0.0, %v2228
      %v2230 = vpop.f32.mrb[0].mxu0
      %v2231 = vpop.f32.mrb[0].mxu0
      %v2232 = vadd.f32 0.0, %v2231
      %v2233 = vpop.f32.mrb[0].mxu0
      %2234 = vmatprep.mubr.bf16.mxu0 0
      %2235 = vmatmul.mubr.bf16.gmra.mrb[0].mxu0 %v2020
      %v2236 = vpop.f32.mrb[0].mxu0
      %v2237 = vadd.f32 0.0, %v2236
      %v2238 = vpop.f32.mrb[0].mxu0
      %v2239 = vpop.f32.mrb[0].mxu0
      %v2240 = vadd.f32 0.0, %v2239
      %v2241 = vpop.f32.mrb[0].mxu0
      %2242 = vmatprep.mubr.bf16.mxu0 0
      %2243 = vmatmul.mubr.bf16.gmra.mrb[0].mxu0 %v2022
      %v2244 = vpop.f32.mrb[0].mxu0
      %v2245 = vadd.f32 0.0, %v2244
      %v2246 = vpop.f32.mrb[0].mxu0
      %v2247 = vpop.f32.mrb[0].mxu0
      %v2248 = vadd.f32 0.0, %v2247
      %v2249 = vpop.f32.mrb[0].mxu0
      %2250 = vmatprep.mubr.bf16.mxu0 0
      %2251 = vmatmul.mubr.bf16.gmra.mrb[0].mxu0 %v2024
      %v2252 = vpop.f32.mrb[0].mxu0
      %v2253 = vadd.f32 0.0, %v2252
      %v2254 = vpop.f32.mrb[0].mxu0
      %v2255 = vpop.f32.mrb[0].mxu0
      %v2256 = vadd.f32 0.0, %v2255
      %v2257 = vpop.f32.mrb[0].mxu0
      %2258 = vmatprep.mubr.bf16.mxu0 0
      %2259 = vmatmul.mubr.bf16.gmra.mrb[0].mxu0 %v2168
      %v2260 = vpop.f32.mrb[0].mxu0
      %v2261 = vadd.f32 0.0, %v2260
      %v2262 = vpop.f32.mrb[0].mxu0
      %v2263 = vpop.f32.mrb[0].mxu0
      %v2264 = vadd.f32 0.0, %v2263
      %v2265 = vpop.f32.mrb[0].mxu0
      %2266 = vdwg.mxu0
      %v2267 = vadd.f32 %v2061, %v2205
      %v2268 = vadd.f32 %v2064, %v2208
      %v2269 = vadd.f32 %v2069, %v2213
      %v2270 = vadd.f32 %v2072, %v2216
      %v2271 = vadd.f32 %v2077, %v2221
      %v2272 = vadd.f32 %v2080, %v2224
      %v2273 = vadd.f32 %v2085, %v2229
      %v2274 = vadd.f32 %v2088, %v2232
      %v2275 = vadd.f32 %v2093, %v2237
      %v2276 = vadd.f32 %v2096, %v2240
      %v2277 = vadd.f32 %v2101, %v2245
      %v2278 = vadd.f32 %v2104, %v2248
      %v2279 = vadd.f32 %v2109, %v2253
      %v2280 = vadd.f32 %v2112, %v2256
      %v2281 = vadd.f32 %v2117, %v2261
      %v2282 = vadd.f32 %v2120, %v2264
      %2284 = vrot.lane.b32.xlu0 %v1282, 4
      %v2285 = vpop.permute.xlu0 %2284
      %v2287 = vshrl.u32 %v1264, 16
      %v2289 = vshll.u32 %v1264, 16
      %v2291 = vrot.slane %v2289, 1
      %v2292 = vor.u32 %v2287, %v2291
      %v2294 = vshll.u32 %v1265, 16
      %v2296 = vrot.slane %v2294, 1
      %v2297 = vsel %vm1308, %v2292, %v2296
      %2298 = vrot.lane.b32.xlu0 %v2297, 8
      %v2299 = vpop.permute.xlu0 %2298
      %v2301 = vshrl.u32 %v1282, 16
      %v2303 = vshll.u32 %v1282, 16
      %v2305 = vrot.slane %v2303, 1
      %v2306 = vor.u32 %v2301, %v2305
      %v2308 = vshll.u32 %v1283, 16
      %v2310 = vrot.slane %v2308, 1
      %v2311 = vsel %vm1308, %v2306, %v2310
      %2312 = vrot.lane.b32.xlu0 %v2311, 12
      %v2313 = vpop.permute.xlu0 %2312
      %v2315 = vsel %vm1533, %v1264, %v2285
      %v2317 = vsel %vm1550, %v2315, %v2299
      %v2319 = vsel %vm1567, %v2317, %v2313
      %v2320 = vld [vmem:[%s1 + $0x18] sm:$0xf]
      %v2321 = vld [vmem:[%s1 + $0x1c] sm:$0xf]
      %v2324 = vunpack.c.l.b16 %v2320
      %v2325 = vunpack.c.l.b16 %v2321
      %v2326 = vpack.c.b16 %v2325, %v2324
      %v2328 = vsel %vm1890, %v2319, 0
      %2330 = vmatprep.subr.bf16.mxu0 0
      %2331 = vmatpush1.bf16.msra.mxu0 %v2326
      %2332 = vmatprep.subr.bf16.mxu0 0
      %2333 = vmatpush1.bf16.msra.mxu0 0
      %2334 = vmatprep.subr.bf16.mxu0 0
      %2335 = vmatpush1.bf16.msra.mxu0 0
      %2336 = vmatprep.subr.bf16.mxu0 0
      %2337 = vmatpush1.bf16.msra.mxu0 0
      %2338 = vmatprep.subr.bf16.mxu0 0
      %2339 = vmatpush1.bf16.msra.mxu0 0
      %2340 = vmatprep.subr.bf16.mxu0 0
      %2341 = vmatpush1.bf16.msra.mxu0 0
      %2342 = vmatprep.subr.bf16.mxu0 0
      %2343 = vmatpush1.bf16.msra.mxu0 0
      %2344 = vmatprep.subr.bf16.mxu0 0
      %2345 = vmatpush1.bf16.msra.mxu0 0
      %2346 = vmatprep.subr.bf16.mxu0 0
      %2347 = vmatpush1.bf16.msra.mxu0 0
      %2348 = vmatprep.subr.bf16.mxu0 0
      %2349 = vmatpush1.bf16.msra.mxu0 0
      %2350 = vmatprep.subr.bf16.mxu0 0
      %2351 = vmatpush1.bf16.msra.mxu0 0
      %2352 = vmatprep.subr.bf16.mxu0 0
      %2353 = vmatpush1.bf16.msra.mxu0 0
      %2354 = vmatprep.subr.bf16.mxu0 0
      %2355 = vmatpush1.bf16.msra.mxu0 0
      %2356 = vmatprep.subr.bf16.mxu0 0
      %2357 = vmatpush1.bf16.msra.mxu0 0
      %2358 = vmatprep.subr.bf16.mxu0 0
      %2359 = vmatpush1.bf16.msra.mxu0 0
      %2360 = vmatprep.subr.bf16.mxu0 0
      %2361 = vmatpush1.bf16.msra.mxu0 0
      %2362 = vmatprep.mubr.bf16.mxu0 0
      %2363 = vmatmul.mubr.bf16.gmra.mrb[0].mxu0 %v1893
      %v2364 = vpop.f32.mrb[0].mxu0
      %v2365 = vadd.f32 0.0, %v2364
      %v2366 = vpop.f32.mrb[0].mxu0
      %v2367 = vpop.f32.mrb[0].mxu0
      %v2368 = vadd.f32 0.0, %v2367
      %v2369 = vpop.f32.mrb[0].mxu0
      %2370 = vmatprep.mubr.bf16.mxu0 0
      %2371 = vmatmul.mubr.bf16.gmra.mrb[0].mxu0 %v1895
      %v2372 = vpop.f32.mrb[0].mxu0
      %v2373 = vadd.f32 0.0, %v2372
      %v2374 = vpop.f32.mrb[0].mxu0
      %v2375 = vpop.f32.mrb[0].mxu0
      %v2376 = vadd.f32 0.0, %v2375
      %v2377 = vpop.f32.mrb[0].mxu0
      %2378 = vmatprep.mubr.bf16.mxu0 0
      %2379 = vmatmul.mubr.bf16.gmra.mrb[0].mxu0 %v1897
      %v2380 = vpop.f32.mrb[0].mxu0
      %v2381 = vadd.f32 0.0, %v2380
      %v2382 = vpop.f32.mrb[0].mxu0
      %v2383 = vpop.f32.mrb[0].mxu0
      %v2384 = vadd.f32 0.0, %v2383
      %v2385 = vpop.f32.mrb[0].mxu0
      %2386 = vmatprep.mubr.bf16.mxu0 0
      %2387 = vmatmul.mubr.bf16.gmra.mrb[0].mxu0 %v1899
      %v2388 = vpop.f32.mrb[0].mxu0
      %v2389 = vadd.f32 0.0, %v2388
      %v2390 = vpop.f32.mrb[0].mxu0
      %v2391 = vpop.f32.mrb[0].mxu0
      %v2392 = vadd.f32 0.0, %v2391
      %v2393 = vpop.f32.mrb[0].mxu0
      %2394 = vmatprep.mubr.bf16.mxu0 0
      %2395 = vmatmul.mubr.bf16.gmra.mrb[0].mxu0 %v1901
      %v2396 = vpop.f32.mrb[0].mxu0
      %v2397 = vadd.f32 0.0, %v2396
      %v2398 = vpop.f32.mrb[0].mxu0
      %v2399 = vpop.f32.mrb[0].mxu0
      %v2400 = vadd.f32 0.0, %v2399
      %v2401 = vpop.f32.mrb[0].mxu0
      %2402 = vmatprep.mubr.bf16.mxu0 0
      %2403 = vmatmul.mubr.bf16.gmra.mrb[0].mxu0 %v1903
      %v2404 = vpop.f32.mrb[0].mxu0
      %v2405 = vadd.f32 0.0, %v2404
      %v2406 = vpop.f32.mrb[0].mxu0
      %v2407 = vpop.f32.mrb[0].mxu0
      %v2408 = vadd.f32 0.0, %v2407
      %v2409 = vpop.f32.mrb[0].mxu0
      %2410 = vmatprep.mubr.bf16.mxu0 0
      %2411 = vmatmul.mubr.bf16.gmra.mrb[0].mxu0 %v1905
      %v2412 = vpop.f32.mrb[0].mxu0
      %v2413 = vadd.f32 0.0, %v2412
      %v2414 = vpop.f32.mrb[0].mxu0
      %v2415 = vpop.f32.mrb[0].mxu0
      %v2416 = vadd.f32 0.0, %v2415
      %v2417 = vpop.f32.mrb[0].mxu0
      %2418 = vmatprep.mubr.bf16.mxu0 0
      %2419 = vmatmul.mubr.bf16.gmra.mrb[0].mxu0 %v2328
      %v2420 = vpop.f32.mrb[0].mxu0
      %v2421 = vadd.f32 0.0, %v2420
      %v2422 = vpop.f32.mrb[0].mxu0
      %v2423 = vpop.f32.mrb[0].mxu0
      %v2424 = vadd.f32 0.0, %v2423
      %v2425 = vpop.f32.mrb[0].mxu0
      %2426 = vdwg.mxu0
      %v2427 = vadd.f32 %v2267, %v2365
      %v2428 = vadd.f32 %v2268, %v2368
      %v2429 = vadd.f32 %v2269, %v2373
      %v2430 = vadd.f32 %v2270, %v2376
      %v2431 = vadd.f32 %v2271, %v2381
      %v2432 = vadd.f32 %v2272, %v2384
      %v2433 = vadd.f32 %v2273, %v2389
      %v2434 = vadd.f32 %v2274, %v2392
      %v2435 = vadd.f32 %v2275, %v2397
      %v2436 = vadd.f32 %v2276, %v2400
      %v2437 = vadd.f32 %v2277, %v2405
      %v2438 = vadd.f32 %v2278, %v2408
      %v2439 = vadd.f32 %v2279, %v2413
      %v2440 = vadd.f32 %v2280, %v2416
      %v2441 = vadd.f32 %v2281, %v2421
      %v2442 = vadd.f32 %v2282, %v2424
      %v2443 = vld [vmem:[%s2] sm:$0x1]
      %v2445 = vlaneseq
      %v2446 = vshrl.u32 %v2445, 7
      %v2447 = vsub.s32 0, %v2446
      %v2448 = vrot.slane %v2443, %v2447
      %v2450 = vadd.f32 %v2427, %v2448
      %v2451 = vadd.f32 %v2428, %v2448
      %v2452 = vadd.f32 %v2429, %v2448
      %v2453 = vadd.f32 %v2430, %v2448
      %v2454 = vadd.f32 %v2431, %v2448
      %v2455 = vadd.f32 %v2432, %v2448
      %v2456 = vadd.f32 %v2433, %v2448
      %v2457 = vadd.f32 %v2434, %v2448
      %v2458 = vadd.f32 %v2435, %v2448
      %v2459 = vadd.f32 %v2436, %v2448
      %v2460 = vadd.f32 %v2437, %v2448
      %v2461 = vadd.f32 %v2438, %v2448
      %v2462 = vadd.f32 %v2439, %v2448
      %v2463 = vadd.f32 %v2440, %v2448
      %v2464 = vadd.f32 %v2441, %v2448
      %v2465 = vadd.f32 %v2442, %v2448
      %v2466 = vpack.c.bf16 %v2451, %v2450
      %v2467 = vpack.c.bf16 %v2453, %v2452
      %v2468 = vpack.c.bf16 %v2455, %v2454
      %v2469 = vpack.c.bf16 %v2457, %v2456
      %v2470 = vpack.c.bf16 %v2459, %v2458
      %v2471 = vpack.c.bf16 %v2461, %v2460
      %v2472 = vpack.c.bf16 %v2463, %v2462
      %v2473 = vpack.c.bf16 %v2465, %v2464
      %v2482 = vunpack.c.l.b16 %v2466
      %v2483 = vunpack.c.h.b16 %v2466
      %v2484 = vunpack.c.l.b16 %v2467
      %v2485 = vunpack.c.h.b16 %v2467
      %v2486 = vunpack.c.l.b16 %v2468
      %v2487 = vunpack.c.h.b16 %v2468
      %v2488 = vunpack.c.l.b16 %v2469
      %v2489 = vunpack.c.h.b16 %v2469
      %v2490 = vunpack.c.l.b16 %v2470
      %v2491 = vunpack.c.h.b16 %v2470
      %v2492 = vunpack.c.l.b16 %v2471
      %v2493 = vunpack.c.h.b16 %v2471
      %v2494 = vunpack.c.l.b16 %v2472
      %v2495 = vunpack.c.h.b16 %v2472
      %v2496 = vunpack.c.l.b16 %v2473
      %v2497 = vunpack.c.h.b16 %v2473
      %v2498 = vpack.c.b16 %v2482, %v2482
      %v2499 = vpack.c.b16 %v2483, %v2483
      %v2500 = vpack.c.b16 %v2484, %v2484
      %v2501 = vpack.c.b16 %v2485, %v2485
      %v2502 = vpack.c.b16 %v2486, %v2486
      %v2503 = vpack.c.b16 %v2487, %v2487
      %v2504 = vpack.c.b16 %v2488, %v2488
      %v2505 = vpack.c.b16 %v2489, %v2489
      %v2506 = vpack.c.b16 %v2490, %v2490
      %v2507 = vpack.c.b16 %v2491, %v2491
      %v2508 = vpack.c.b16 %v2492, %v2492
      %v2509 = vpack.c.b16 %v2493, %v2493
      %v2510 = vpack.c.b16 %v2494, %v2494
      %v2511 = vpack.c.b16 %v2495, %v2495
      %v2512 = vpack.c.b16 %v2496, %v2496
      %v2513 = vpack.c.b16 %v2497, %v2497
      %vm2530 = vcmask 257024
      %2531 = vst.msk [vmem:[%s248] sm:$0xf] %vm2530, %v2498
      %2532 = vst.msk [vmem:[%s248 + $0x4] sm:$0xf] %vm2530, %v2499
      %2533 = vst.msk [vmem:[%s248 + $0x8] sm:$0xf] %vm2530, %v2500
      %2534 = vst.msk [vmem:[%s248 + $0xc] sm:$0xf] %vm2530, %v2501
      %2535 = vst.msk [vmem:[%s248 + $0x10] sm:$0xf] %vm2530, %v2502
      %2536 = vst.msk [vmem:[%s248 + $0x14] sm:$0xf] %vm2530, %v2503
      %2537 = vst.msk [vmem:[%s248 + $0x18] sm:$0xf] %vm2530, %v2504
      %2538 = vst.msk [vmem:[%s248 + $0x1c] sm:$0xf] %vm2530, %v2505
      %2539 = vst.msk [vmem:[%s248 + $0x20] sm:$0xf] %vm2530, %v2506
      %2540 = vst.msk [vmem:[%s248 + $0x24] sm:$0xf] %vm2530, %v2507
      %2541 = vst.msk [vmem:[%s248 + $0x28] sm:$0xf] %vm2530, %v2508
      %2542 = vst.msk [vmem:[%s248 + $0x2c] sm:$0xf] %vm2530, %v2509
      %2543 = vst.msk [vmem:[%s248 + $0x30] sm:$0xf] %vm2530, %v2510
      %2544 = vst.msk [vmem:[%s248 + $0x34] sm:$0xf] %vm2530, %v2511
      %2545 = vst.msk [vmem:[%s248 + $0x38] sm:$0xf] %vm2530, %v2512
      %2546 = vst.msk [vmem:[%s248 + $0x3c] sm:$0xf] %vm2530, %v2513
      %vm2547 = vcmask 261120
      %v2548 = vsel %vm2547, %v2450, 0.0
      %v2549 = vsel %vm2547, %v2451, 0.0
      %v2550 = vadd.f32 %v2548, %v2549
      %v2551 = vsel %vm2547, %v2452, 0.0
      %v2552 = vadd.f32 %v2550, %v2551
      %v2553 = vsel %vm2547, %v2453, 0.0
      %v2554 = vadd.f32 %v2552, %v2553
      %v2555 = vsel %vm2547, %v2454, 0.0
      %v2556 = vadd.f32 %v2554, %v2555
      %v2557 = vsel %vm2547, %v2455, 0.0
      %v2558 = vadd.f32 %v2556, %v2557
      %v2559 = vsel %vm2547, %v2456, 0.0
      %v2560 = vadd.f32 %v2558, %v2559
      %v2561 = vsel %vm2547, %v2457, 0.0
      %v2562 = vadd.f32 %v2560, %v2561
      %v2563 = vsel %vm2547, %v2458, 0.0
      %v2564 = vadd.f32 %v2562, %v2563
      %v2565 = vsel %vm2547, %v2459, 0.0
      %v2566 = vadd.f32 %v2564, %v2565
      %v2567 = vsel %vm2547, %v2460, 0.0
      %v2568 = vadd.f32 %v2566, %v2567
      %v2569 = vsel %vm2547, %v2461, 0.0
      %v2570 = vadd.f32 %v2568, %v2569
      %v2571 = vsel %vm2547, %v2462, 0.0
      %v2572 = vadd.f32 %v2570, %v2571
      %v2573 = vsel %vm2547, %v2463, 0.0
      %v2574 = vadd.f32 %v2572, %v2573
      %v2575 = vsel %vm2547, %v2464, 0.0
      %v2576 = vadd.f32 %v2574, %v2575
      %v2577 = vsel %vm2547, %v2465, 0.0
      %v2578 = vadd.f32 %v2576, %v2577
      %v2579 = vrot.slane %v2578, 4
      %v2580 = vadd.f32 %v2578, %v2579
      %v2581 = vrot.slane %v2580, 2
      %v2582 = vadd.f32 %v2580, %v2581
      %v2583 = vrot.slane %v2582, 1
      %v2584 = vadd.f32 %v2582, %v2583
      %vm2585 = vcmask 253952
      %2586 = vst.msk [vmem:[%s257] sm:$0x1] %vm2585, %v2584
      %v2587 = vmul.f32 %v2450, %v2450
      %v2588 = vmul.f32 %v2451, %v2451
      %v2589 = vmul.f32 %v2452, %v2452
      %v2590 = vmul.f32 %v2453, %v2453
      %v2591 = vmul.f32 %v2454, %v2454
      %v2592 = vmul.f32 %v2455, %v2455
      %v2593 = vmul.f32 %v2456, %v2456
      %v2594 = vmul.f32 %v2457, %v2457
      %v2595 = vmul.f32 %v2458, %v2458
      %v2596 = vmul.f32 %v2459, %v2459
      %v2597 = vmul.f32 %v2460, %v2460
      %v2598 = vmul.f32 %v2461, %v2461
      %v2599 = vmul.f32 %v2462, %v2462
      %v2600 = vmul.f32 %v2463, %v2463
      %v2601 = vmul.f32 %v2464, %v2464
      %v2602 = vmul.f32 %v2465, %v2465
      %v2603 = vsel %vm2547, %v2587, 0.0
      %v2604 = vsel %vm2547, %v2588, 0.0
      %v2605 = vadd.f32 %v2603, %v2604
      %v2606 = vsel %vm2547, %v2589, 0.0
      %v2607 = vadd.f32 %v2605, %v2606
      %v2608 = vsel %vm2547, %v2590, 0.0
      %v2609 = vadd.f32 %v2607, %v2608
      %v2610 = vsel %vm2547, %v2591, 0.0
      %v2611 = vadd.f32 %v2609, %v2610
      %v2612 = vsel %vm2547, %v2592, 0.0
      %v2613 = vadd.f32 %v2611, %v2612
      %v2614 = vsel %vm2547, %v2593, 0.0
      %v2615 = vadd.f32 %v2613, %v2614
      %v2616 = vsel %vm2547, %v2594, 0.0
      %v2617 = vadd.f32 %v2615, %v2616
      %v2618 = vsel %vm2547, %v2595, 0.0
      %v2619 = vadd.f32 %v2617, %v2618
      %v2620 = vsel %vm2547, %v2596, 0.0
      %v2621 = vadd.f32 %v2619, %v2620
      %v2622 = vsel %vm2547, %v2597, 0.0
      %v2623 = vadd.f32 %v2621, %v2622
      %v2624 = vsel %vm2547, %v2598, 0.0
      %v2625 = vadd.f32 %v2623, %v2624
      %v2626 = vsel %vm2547, %v2599, 0.0
      %v2627 = vadd.f32 %v2625, %v2626
      %v2628 = vsel %vm2547, %v2600, 0.0
      %v2629 = vadd.f32 %v2627, %v2628
      %v2630 = vsel %vm2547, %v2601, 0.0
      %v2631 = vadd.f32 %v2629, %v2630
      %v2632 = vsel %vm2547, %v2602, 0.0
      %v2633 = vadd.f32 %v2631, %v2632
      %v2634 = vrot.slane %v2633, 4
      %v2635 = vadd.f32 %v2633, %v2634
      %v2636 = vrot.slane %v2635, 2
      %v2637 = vadd.f32 %v2635, %v2636
      %v2638 = vrot.slane %v2637, 1
      %v2639 = vadd.f32 %v2637, %v2638
      %2640 = vst.msk [vmem:[%s257 + $0x1] sm:$0x1] %vm2585, %v2639
      %s2641 = smul.u32 8, %s21
      %p2642 = scmp.lt.s32.totalorder %s20, 1
      %s2643 = scalar_select %p2642, %s20, 1
      %p2644 = scmp.lt.s32.totalorder %s2641, 15
      %s2645 = scalar_select %p2644, %s2641, 15
      %s2646 = smul.addr %s2645, 2
      %s2647 = smul.addr %s2643, 32
      %s2648 = sadd.s32 %s2646, %s2647
      %s2649 = smul.addr %s2648, 4
      %s2650 = scalar_lea.vmem %s3, %s2649
      %p2651 = scmp.lt.s32.totalorder %s20, 1
      %s2652 = scalar_select %p2651, %s20, 1
      %p2653 = scmp.lt.s32.totalorder %s21, 1
      %s2654 = scalar_select %p2653, %s21, 1
      %s2655 = smul.addr %s2652, 2
      %s2656 = sadd.s32 %s2654, %s2655
      %s2657 = smul.addr %s2656, 2
      %s2658 = scalar_lea.vmem %s4, %s2657
      // Predicated region
      $region33: #{psp_upsample.2} parent=31 // pred_check
        %p2659 = pneg %p118
      $region34: #{psp_upsample.2} parent=31 // pred_check_branch
        %2661 = sbr.rel (%p2659) target = $region36
      $region35: #{psp_upsample.2} parent=31 // pred_region
        %s2662 = smul.u32 8, %s21
      $region36: #{psp_upsample.2} parent=31 // pred_fallthru
        _
      // Predicated region
      $region37: #{psp_upsample.2} parent=31 // pred_check
        %p2663 = pneg %p146
      $region38: #{psp_upsample.2} parent=31 // pred_check_branch
        %2665 = sbr.rel (%p2663) target = $region40
      $region39: #{psp_upsample.2} parent=31 // pred_region
        _
      $region40: #{psp_upsample.2} parent=31 // pred_fallthru
        _
    $region32: #{psp_upsample.2} parent=5 // pred_fallthru
      _
    %p2666 = scmp.le.s32.totalorder 2, %s11
    // Predicated region
    $region41: #{psp_upsample.2} parent=5 // pred_check
      %p2667 = pneg %p2666
    $region42: #{psp_upsample.2} parent=5 // pred_check_branch
      %2669 = sbr.rel (%p2667) target = $region44
    $region43: #{psp_upsample.2} parent=5 // pred_region
      %s2670 = ssub.s32 %s11, 2
      // Predicated region
      $region45: #{psp_upsample.2} parent=43 // pred_check
        %p2671 = pneg %p124
      $region46: #{psp_upsample.2} parent=43 // pred_check_branch
        %2673 = sbr.rel (%p2671) target = $region48
      $region47: #{psp_upsample.2} parent=43 // pred_region
        %s2674 = smul.u32 8, %s23
        %p2675 = scmp.lt.s32.totalorder %s22, 1
        %s2676 = scalar_select %p2675, %s22, 1
        %p2677 = scmp.lt.s32.totalorder %s2674, 15
        %s2678 = scalar_select %p2677, %s2674, 15
        %s2679 = smul.addr %s2678, 2
        %s2680 = smul.addr %s2676, 32
        %s2681 = sadd.s32 %s2679, %s2680
        %s2682 = smul.addr %s2681, 4
        %s2683 = scalar_lea.vmem %s3, %s2682
      $region48: #{psp_upsample.2} parent=43 // pred_fallthru
        _
      // Predicated region
      $region49: #{psp_upsample.2} parent=43 // pred_check
        %p2684 = pneg %p152
      $region50: #{psp_upsample.2} parent=43 // pred_check_branch
        %2686 = sbr.rel (%p2684) target = $region52
      $region51: #{psp_upsample.2} parent=43 // pred_region
        %p2687 = scmp.lt.s32.totalorder %s22, 1
        %s2688 = scalar_select %p2687, %s22, 1
        %p2689 = scmp.lt.s32.totalorder %s23, 1
        %s2690 = scalar_select %p2689, %s23, 1
        %s2691 = smul.addr %s2688, 2
        %s2692 = sadd.s32 %s2690, %s2691
        %s2693 = smul.addr %s2692, 2
        %s2694 = scalar_lea.vmem %s4, %s2693
      $region52: #{psp_upsample.2} parent=43 // pred_fallthru
        _
    $region44: #{psp_upsample.2} parent=5 // pred_fallthru
      _
  $region6: #{psp_upsample.2} parent=0 // loop_footer
    %s15 = sadd.s32 1, %s11
  $region7: #{psp_upsample.2} parent=0 // loop_footer_branch
    %10 = sbr.rel target = $region3
  $region8: #{psp_upsample.2} parent=0 // loop_exit
    _

</llo_original>
